<compile_context>
chip_gen: v6e
topology: v6e:2x2x1
jax: 0.10.0
libtpu: 0.0.40
codegen_flags: <defaults>
</compile_context>

<pallas_src>
import numpy as np
import jax
import jax.numpy as jnp
from jax.experimental import pallas as pl
from jax.experimental.pallas import tpu as pltpu

# ------------------------- config (small shapes) -------------------------
B = 2
IMG = 32
C_IN = 3
C1, C2, C3 = 16, 32, 64          # backbone channels for features '1','2','3'
OUT_H, OUT_W = 8, 8              # cfg.bilinear_interpolation.output_size
VOX = 8                          # VOXEL_SIZE
NUM_VERTS = 40                   # vertices of the initial sphere mesh
MESH_HID = 64                    # hidden width of mesh refinement MLP
VPAD = 128                       # lane-padded width for vertex activations


# ------------------------- constant matrices (trace-time numpy) -------------------------

def _interp_matrix(n_in, n_out):
    """Row-interpolation matrix matching nn.UpsamplingBilinear2d(align_corners=True)."""
    R = np.zeros((n_out, n_in), np.float32)
    if n_in == 1:
        R[:, 0] = 1.0
        return R
    for i in range(n_out):
        src = i * (n_in - 1) / (n_out - 1) if n_out > 1 else 0.0
        i0 = min(int(np.floor(src)), n_in - 2)
        frac = src - i0
        R[i, i0] = 1.0 - frac
        R[i, i0 + 1] = frac
    return R


def _bilinear_coeff_matrix(out_h, out_w):
    """A of shape (out_h*out_w, 4): interp_flat = A @ f3_flat for a 2x2 input,
    matching separable align_corners bilinear upsampling exactly."""
    Rh = _interp_matrix(2, out_h)
    Rw = _interp_matrix(2, out_w)
    A = np.zeros((out_h * out_w, 4), np.float32)
    for i in range(out_h):
        for j in range(out_w):
            for p in range(2):
                for q in range(2):
                    A[i * out_w + j, p * 2 + q] = Rh[i, p] * Rw[j, q]
    return A


# ------------------------- fused Pallas kernel -------------------------

def _make_fused_kernel(G):
    """G = images processed per grid step (stacked along the sublane axis)."""

    def kernel(patches_ref, c1w_ref, c1b_ref, c2w_ref, c2b_ref, c3w_ref, c3b_ref,
               pick_ref, gmat_ref, wfold_ref, voxb_ref, v0_ref,
               mw1a_ref, mw1b_ref, mb1_ref, mw2_ref, mb2_ref,
               vox_ref, verts_ref):
        f32, bf16 = jnp.float32, jnp.bfloat16

        def tap_matmul(act, w_ref, rows):
            # act rows are ordered (tap, ...): tap t is the contiguous,
            # 8-aligned block act[t*rows:(t+1)*rows].  Contract each block with
            # its weight block on the MXU and accumulate in f32.
            acc = None
            for t in range(4):
                blk = act[t * rows:(t + 1) * rows, :].astype(bf16)
                part = jnp.dot(blk, w_ref[t], preferred_element_type=f32)
                acc = part if acc is None else acc + part
            return acc

        # --- conv1: 4x4 stride-4 patchify conv (im2col rows built by the wrapper
        #     in hierarchical (conv2-tap, conv3-tap, position, image) order) ---
        x = patches_ref[0].astype(bf16)                                      # (64G, 48)
        f1 = jnp.maximum(
            jnp.dot(x, c1w_ref[...], preferred_element_type=f32) + c1b_ref[...], 0.0)

        # --- conv2 / conv3: 2x2 stride-2 patchify convs; no selection matmuls ---
        f2 = jnp.maximum(tap_matmul(f1, c2w_ref, 16 * G) + c2b_ref[...], 0.0)  # (16G, C2)
        f3 = jnp.maximum(tap_matmul(f2, c3w_ref, 4 * G) + c3b_ref[...], 0.0)   # (4G, C3)

        # --- voxel head: bilinear interpolation folded into wfold at prep time.
        #     pick[p] is a tiny (G, 4G) one-hot gather (single K=4G MXU pass)
        #     that keeps every sublane access tile-aligned. ---
        vacc = None
        for p in range(4):
            f3_p = jnp.dot(pick_ref[p], f3, preferred_element_type=f32)      # (G, C3)
            part = jnp.dot(f3_p.astype(bf16), wfold_ref[p],
                           preferred_element_type=f32)                       # (G, 512)
            vacc = part if vacc is None else vacc + part
        vox_ref[0] = vacc + voxb_ref[...]                                    # lane-dense 512

        # --- 3-stage mesh refinement, one image at a time (G is tiny).
        #     Vertex activations stay lane-padded to 128; padded lanes are
        #     exactly zero and never drift (mw2/mb2 padded cols are zero). ---
        for gi in range(G):
            # pooled image feature = bilinear-weighted spatial mean of f3 rows
            # belonging to image gi (coefficients folded into gmat).
            g_i = jnp.dot(gmat_ref[gi], f3, preferred_element_type=f32)      # (1, C3)
            g_b = g_i.astype(bf16)
            verts = v0_ref[...]                                              # (40, 128)
            for s in range(3):
                gh = jnp.dot(g_b, mw1b_ref[s], preferred_element_type=f32)   # (1, HID)
                h = jnp.dot(verts.astype(bf16), mw1a_ref[s],
                            preferred_element_type=f32)                      # (40, HID)
                h = jnp.maximum(h + gh + mb1_ref[s], 0.0)
                off = jnp.tanh(jnp.dot(h.astype(bf16), mw2_ref[s],
                                       preferred_element_type=f32) + mb2_ref[s])
                verts = verts + off
                verts_ref[0, s, gi * NUM_VERTS:(gi + 1) * NUM_VERTS, :] = verts

    return kernel


# ------------------------- parameters -------------------------

def init_params(key):
    ks = jax.random.split(key, 12)

    def w(k, shape, scale=0.05):
        return jax.random.normal(k, shape, jnp.float32) * scale

    p = {}
    # backbone (patchify convs, weight layout (k*k*Cin, Cout), row = (di*k+dj)*Cin + c)
    p["conv1_w"] = w(ks[0], (4 * 4 * C_IN, C1)); p["conv1_b"] = jnp.zeros((C1,), jnp.float32)
    p["conv2_w"] = w(ks[1], (2 * 2 * C1, C2));   p["conv2_b"] = jnp.zeros((C2,), jnp.float32)
    p["conv3_w"] = w(ks[2], (2 * 2 * C2, C3));   p["conv3_b"] = jnp.zeros((C3,), jnp.float32)
    # voxel head (reference f32 weight on (interp_spatial*C3) -> 512 voxels)
    p["voxel_w"] = w(ks[3], (OUT_H * OUT_W * C3, VOX ** 3), scale=0.02)
    p["voxel_b"] = jnp.zeros((VOX ** 3,), jnp.float32)
    # mesh refinement stages
    for s in range(3):
        p[f"mesh{s}_w1"] = w(ks[4 + 2 * s], (3 + C3, MESH_HID))
        p[f"mesh{s}_b1"] = jnp.zeros((MESH_HID,), jnp.float32)
        p[f"mesh{s}_w2"] = w(ks[5 + 2 * s], (MESH_HID, 3))
        p[f"mesh{s}_b2"] = jnp.zeros((3,), jnp.float32)
    # initial sphere mesh vertices
    v = jax.random.normal(ks[10], (NUM_VERTS, 3), jnp.float32)
    p["init_verts"] = v / jnp.linalg.norm(v, axis=1, keepdims=True)
    return p


def _pad_rows(a, rows):
    return jnp.zeros((rows, a.shape[1]), a.dtype).at[:a.shape[0], :].set(a)


def _pad_cols(a, cols):
    return jnp.zeros((a.shape[0], cols), a.dtype).at[:, :a.shape[1]].set(a)


def prepare_weights(params):
    """One-time kernel-weight preparation (runs OUTSIDE the per-call path):
    fold the bilinear matrix into the voxel head, cast matmul weights to bf16,
    split/pad mesh weights to lane-dense shapes."""
    bf16 = jnp.bfloat16
    prep = {}
    prep["c1w"] = params["conv1_w"].astype(bf16)
    prep["c1b"] = params["conv1_b"].reshape(1, C1)
    prep["c2w"] = params["conv2_w"].reshape(4, C1, C2).astype(bf16)
    prep["c2b"] = params["conv2_b"].reshape(1, C2)
    prep["c3w"] = params["conv3_w"].reshape(4, C2, C3).astype(bf16)
    prep["c3b"] = params["conv3_b"].reshape(1, C3)

    # Fold UpsamplingBilinear2d(align_corners) into the voxel-head weight
    # (exact f32 linear algebra, then a single bf16 cast): 4 MiB -> 256 KiB.
    A = jnp.asarray(_bilinear_coeff_matrix(OUT_H, OUT_W))                    # (64, 4)
    vw = params["voxel_w"].reshape(OUT_H * OUT_W, C3, VOX ** 3)
    prep["wfold"] = jnp.einsum("sp,scn->pcn", A, vw).astype(bf16)            # (4, C3, 512)
    prep["voxb"] = params["voxel_b"].reshape(1, VOX ** 3)

    # mesh refinement: split the concat matmul into (verts-part, feature-part),
    # pad to lane-dense shapes; padded rows/cols are exactly zero so padded
    # vertex lanes never drift.
    prep["mw1a"] = jnp.stack(
        [_pad_rows(params[f"mesh{s}_w1"][:3, :], VPAD) for s in range(3)]).astype(bf16)
    prep["mw1b"] = jnp.stack(
        [params[f"mesh{s}_w1"][3:, :] for s in range(3)]).astype(bf16)
    prep["mb1"] = jnp.stack([params[f"mesh{s}_b1"].reshape(1, MESH_HID) for s in range(3)])
    prep["mw2"] = jnp.stack(
        [_pad_cols(params[f"mesh{s}_w2"], VPAD) for s in range(3)]).astype(bf16)
    prep["mb2"] = jnp.stack(
        [_pad_cols(params[f"mesh{s}_b2"].reshape(1, 3), VPAD) for s in range(3)])
    prep["v0"] = _pad_cols(params["init_verts"], VPAD)                       # (40, 128)
    return prep


# ------------------------- MeshRCNN forward -------------------------

def _num_batch_groups(bsz):
    """v7x has two TensorCores: split the batch over a 2-step 'parallel' grid
    when it is big enough to keep all tap slices 8-row aligned (bsz % 4 == 0).
    Single-TC chips (v5e/v6e) always run the whole batch in one grid step."""
    try:
        kind = jax.devices()[0].device_kind.lower()
    except Exception:
        kind = ""
    if ("v7" in kind or "7x" in kind) and bsz % 4 == 0:
        return 2
    return 1


def mesh_rcnn_forward(prep, images_nchw):
    """images: (B, C, H, W) NCHW -> (pred_voxel (B,V,V,V), [verts stage1..3])."""
    x = jnp.transpose(images_nchw, (0, 2, 3, 1)).astype(jnp.float32)         # NCHW -> NHWC
    bsz = x.shape[0]
    ng = _num_batch_groups(bsz)
    G = bsz // ng

    # --- im2col for conv1 (4x4 stride 4), rows permuted into hierarchical
    #     (conv2-tap, conv3-tap, final-position) order, then images of a group
    #     interleaved innermost on the sublane axis. ---
    ho = IMG // 4                                                            # 8
    p_base = (x.reshape(bsz, ho, 4, ho, 4, C_IN)
                .transpose(0, 1, 3, 2, 4, 5)
                .reshape(bsz, ho * ho, 4 * 4 * C_IN))                        # (B, 64, 48)
    perm = np.empty((ho * ho,), np.int32)
    for i1 in range(ho):
        for j1 in range(ho):
            tap2 = (i1 % 2) * 2 + (j1 % 2)
            i2, j2 = i1 // 2, j1 // 2
            tap3 = (i2 % 2) * 2 + (j2 % 2)
            pos3 = (i2 // 2) * 2 + (j2 // 2)
            perm[tap2 * 16 + tap3 * 4 + pos3] = i1 * ho + j1
    p_base = p_base[:, jnp.asarray(perm), :]                                 # reorder rows
    patches = (p_base.reshape(ng, G, ho * ho, 4 * 4 * C_IN)
                     .transpose(0, 2, 1, 3)
                     .reshape(ng, ho * ho * G, 4 * 4 * C_IN))                # (ng, 64G, 48)

    # --- tiny trace-time constants for the f3-level gathers / pooling ---
    abar = _bilinear_coeff_matrix(OUT_H, OUT_W).mean(axis=0)                 # (4,) ~0.25 each
    pick_np = np.zeros((4, G, 4 * G), np.float32)
    gmat_np = np.zeros((G, 1, 4 * G), np.float32)
    for p in range(4):
        for gi in range(G):
            pick_np[p, gi, p * G + gi] = 1.0
            gmat_np[gi, 0, p * G + gi] = float(abar[p])
    pick = jnp.asarray(pick_np)
    gmat = jnp.asarray(gmat_np)

    # --- single fused kernel: backbone + (folded) interpolation + voxel head
    #     + pooled feature + 3-stage mesh refinement ---
    vox, verts_all = pl.pallas_call(
        _make_fused_kernel(G),
        out_shape=(jax.ShapeDtypeStruct((ng, G, VOX ** 3), jnp.float32),
                   jax.ShapeDtypeStruct((ng, 3, G * NUM_VERTS, VPAD), jnp.float32)),
        grid=(ng,),
        in_specs=[
            pl.BlockSpec((1, ho * ho * G, 4 * 4 * C_IN), lambda n: (n, 0, 0)),  # patches
            pl.BlockSpec((4 * 4 * C_IN, C1), lambda n: (0, 0)),                 # conv1_w
            pl.BlockSpec((1, C1), lambda n: (0, 0)),                            # conv1_b
            pl.BlockSpec((4, C1, C2), lambda n: (0, 0, 0)),                     # conv2_w
            pl.BlockSpec((1, C2), lambda n: (0, 0)),                            # conv2_b
            pl.BlockSpec((4, C2, C3), lambda n: (0, 0, 0)),                     # conv3_w
            pl.BlockSpec((1, C3), lambda n: (0, 0)),                            # conv3_b
            pl.BlockSpec((4, G, 4 * G), lambda n: (0, 0, 0)),                   # pick
            pl.BlockSpec((G, 1, 4 * G), lambda n: (0, 0, 0)),                   # gmat
            pl.BlockSpec((4, C3, VOX ** 3), lambda n: (0, 0, 0)),               # wfold
            pl.BlockSpec((1, VOX ** 3), lambda n: (0, 0)),                      # voxel_b
            pl.BlockSpec((NUM_VERTS, VPAD), lambda n: (0, 0)),                  # init verts
            pl.BlockSpec((3, VPAD, MESH_HID), lambda n: (0, 0, 0)),             # mw1a
            pl.BlockSpec((3, C3, MESH_HID), lambda n: (0, 0, 0)),               # mw1b
            pl.BlockSpec((3, 1, MESH_HID), lambda n: (0, 0, 0)),                # mb1
            pl.BlockSpec((3, MESH_HID, VPAD), lambda n: (0, 0, 0)),             # mw2
            pl.BlockSpec((3, 1, VPAD), lambda n: (0, 0, 0)),                    # mb2
        ],
        out_specs=(pl.BlockSpec((1, G, VOX ** 3), lambda n: (n, 0, 0)),
                   pl.BlockSpec((1, 3, G * NUM_VERTS, VPAD), lambda n: (n, 0, 0, 0))),
        compiler_params=pltpu.CompilerParams(dimension_semantics=("parallel",)),
    )(patches, prep["c1w"], prep["c1b"], prep["c2w"], prep["c2b"],
      prep["c3w"], prep["c3b"], pick, gmat, prep["wfold"], prep["voxb"],
      prep["v0"], prep["mw1a"], prep["mw1b"], prep["mb1"], prep["mw2"], prep["mb2"])

    pred_voxel = vox.reshape(bsz, VOX, VOX, VOX)                             # voxel logits
    verts_all = verts_all.reshape(ng, 3, G, NUM_VERTS, VPAD)
    verts_all = jnp.transpose(verts_all, (1, 0, 2, 3, 4)).reshape(3, bsz, NUM_VERTS, VPAD)
    refined_mesh = [verts_all[s, :, :, :3] for s in range(3)]                # (B, 40, 3) each
    return pred_voxel, refined_mesh


# ------------------------- main -------------------------

if __name__ == "__main__":
    key = jax.random.PRNGKey(0)
    pkey, xkey = jax.random.split(key)
    params = init_params(pkey)
    prep = prepare_weights(params)          # one-time fold / cast / pad (outside the hot path)
    images = jax.random.normal(xkey, (B, C_IN, IMG, IMG), jnp.float32)       # NCHW like PyTorch

    fwd = jax.jit(mesh_rcnn_forward)
    pred_voxel, refined_mesh = fwd(prep, images)
    jax.block_until_ready(pred_voxel)
    for m in refined_mesh:
        jax.block_until_ready(m)

    assert pred_voxel.shape == (B, VOX, VOX, VOX)
    assert len(refined_mesh) == 3
    assert all(m.shape == (B, NUM_VERTS, 3) for m in refined_mesh)
    assert bool(jnp.all(jnp.isfinite(pred_voxel)))
    assert all(bool(jnp.all(jnp.isfinite(m))) for m in refined_mesh)
    print("KERNEL_OK")
</pallas_src>

<mosaic_0001>
module attributes {stable_mosaic.version = 11 : i64} {
  func.func @kernel(%arg0: i32, %arg1: memref<1x128x48xf32, #tpu.memory_space<vmem>>, %arg2: memref<48x16xbf16, #tpu.memory_space<vmem>>, %arg3: memref<1x16xf32, #tpu.memory_space<vmem>>, %arg4: memref<4x16x32xbf16, #tpu.memory_space<vmem>>, %arg5: memref<1x32xf32, #tpu.memory_space<vmem>>, %arg6: memref<4x32x64xbf16, #tpu.memory_space<vmem>>, %arg7: memref<1x64xf32, #tpu.memory_space<vmem>>, %arg8: memref<4x2x8xf32, #tpu.memory_space<vmem>>, %arg9: memref<2x1x8xf32, #tpu.memory_space<vmem>>, %arg10: memref<4x64x512xbf16, #tpu.memory_space<vmem>>, %arg11: memref<1x512xf32, #tpu.memory_space<vmem>>, %arg12: memref<40x128xf32, #tpu.memory_space<vmem>>, %arg13: memref<3x128x64xbf16, #tpu.memory_space<vmem>>, %arg14: memref<3x64x64xbf16, #tpu.memory_space<vmem>>, %arg15: memref<3x1x64xf32, #tpu.memory_space<vmem>>, %arg16: memref<3x64x128xbf16, #tpu.memory_space<vmem>>, %arg17: memref<3x1x128xf32, #tpu.memory_space<vmem>>, %arg18: memref<1x2x512xf32, #tpu.memory_space<vmem>>, %arg19: memref<1x3x80x128xf32, #tpu.memory_space<vmem>>) attributes {dimension_semantics = [#tpu.dimension_semantics<parallel>], iteration_bounds = array<i64: 1>, scalar_prefetch = 0 : i64, scratch_operands = 0 : i64, tpu.core_type = #tpu.core_type<tc>, window_params = [{transform_indices = @transform_0, window_bounds = array<i64: 1, 128, 48>}, {pipeline_mode = #tpu.pipeline_mode<synchronous>, transform_indices = @transform_1, window_bounds = array<i64: 48, 16>}, {pipeline_mode = #tpu.pipeline_mode<synchronous>, transform_indices = @transform_2, window_bounds = array<i64: 1, 16>}, {pipeline_mode = #tpu.pipeline_mode<synchronous>, transform_indices = @transform_3, window_bounds = array<i64: 4, 16, 32>}, {pipeline_mode = #tpu.pipeline_mode<synchronous>, transform_indices = @transform_4, window_bounds = array<i64: 1, 32>}, {pipeline_mode = #tpu.pipeline_mode<synchronous>, transform_indices = @transform_5, window_bounds = array<i64: 4, 32, 64>}, {pipeline_mode = #tpu.pipeline_mode<synchronous>, transform_indices = @transform_6, window_bounds = array<i64: 1, 64>}, {pipeline_mode = #tpu.pipeline_mode<synchronous>, transform_indices = @transform_7, window_bounds = array<i64: 4, 2, 8>}, {pipeline_mode = #tpu.pipeline_mode<synchronous>, transform_indices = @transform_8, window_bounds = array<i64: 2, 1, 8>}, {pipeline_mode = #tpu.pipeline_mode<synchronous>, transform_indices = @transform_9, window_bounds = array<i64: 4, 64, 512>}, {pipeline_mode = #tpu.pipeline_mode<synchronous>, transform_indices = @transform_10, window_bounds = array<i64: 1, 512>}, {pipeline_mode = #tpu.pipeline_mode<synchronous>, transform_indices = @transform_11, window_bounds = array<i64: 40, 128>}, {pipeline_mode = #tpu.pipeline_mode<synchronous>, transform_indices = @transform_12, window_bounds = array<i64: 3, 128, 64>}, {pipeline_mode = #tpu.pipeline_mode<synchronous>, transform_indices = @transform_13, window_bounds = array<i64: 3, 64, 64>}, {pipeline_mode = #tpu.pipeline_mode<synchronous>, transform_indices = @transform_14, window_bounds = array<i64: 3, 1, 64>}, {pipeline_mode = #tpu.pipeline_mode<synchronous>, transform_indices = @transform_15, window_bounds = array<i64: 3, 64, 128>}, {pipeline_mode = #tpu.pipeline_mode<synchronous>, transform_indices = @transform_16, window_bounds = array<i64: 3, 1, 128>}, {transform_indices = @transform_17, window_bounds = array<i64: 1, 2, 512>}, {transform_indices = @transform_18, window_bounds = array<i64: 1, 3, 80, 128>}]} {
    %c0 = arith.constant 0 : index
    %c0_0 = arith.constant 0 : index
    %c0_1 = arith.constant 0 : index
    %0 = vector.load %arg1[%c0, %c0_0, %c0_1] : memref<1x128x48xf32, #tpu.memory_space<vmem>>, vector<1x128x48xf32>
    %1 = vector.shape_cast %0 : vector<1x128x48xf32> to vector<128x48xf32>
    %2 = arith.truncf %1 : vector<128x48xf32> to vector<128x48xbf16>
    %c0_2 = arith.constant 0 : index
    %c0_3 = arith.constant 0 : index
    %3 = vector.load %arg2[%c0_2, %c0_3] : memref<48x16xbf16, #tpu.memory_space<vmem>>, vector<48x16xbf16>
    %cst = arith.constant dense<0.000000e+00> : vector<128x16xf32>
    %4 = tpu.matmul %2, %3, %cst {dimension_numbers = #tpu.dot_dimension_numbers<[1], [0], [0], [1], [0, 0, 1, 1], [], []>} : vector<128x48xbf16>, vector<48x16xbf16>, vector<128x16xf32> -> vector<128x16xf32>
    %c0_4 = arith.constant 0 : index
    %c0_5 = arith.constant 0 : index
    %5 = vector.load %arg3[%c0_4, %c0_5] : memref<1x16xf32, #tpu.memory_space<vmem>>, vector<1x16xf32>
    %6 = vector.broadcast %5 : vector<1x16xf32> to vector<128x16xf32>
    %7 = arith.addf %4, %6 : vector<128x16xf32>
    %cst_6 = arith.constant 0.000000e+00 : f32
    %8 = vector.broadcast %cst_6 : f32 to vector<128x16xf32>
    %9 = arith.maximumf %7, %8 : vector<128x16xf32>
    %10 = vector.extract_strided_slice %9 {offsets = [0, 0], sizes = [32, 16], strides = [1, 1]} : vector<128x16xf32> to vector<32x16xf32>
    %11 = arith.truncf %10 : vector<32x16xf32> to vector<32x16xbf16>
    %c0_7 = arith.constant 0 : index
    %c0_8 = arith.constant 0 : index
    %c0_9 = arith.constant 0 : index
    %12 = vector.load %arg4[%c0_7, %c0_8, %c0_9] : memref<4x16x32xbf16, #tpu.memory_space<vmem>>, vector<1x16x32xbf16>
    %13 = vector.shape_cast %12 : vector<1x16x32xbf16> to vector<16x32xbf16>
    %cst_10 = arith.constant dense<0.000000e+00> : vector<32x32xf32>
    %14 = tpu.matmul %11, %13, %cst_10 {dimension_numbers = #tpu.dot_dimension_numbers<[1], [0], [0], [1], [0, 0, 1, 1], [], []>} : vector<32x16xbf16>, vector<16x32xbf16>, vector<32x32xf32> -> vector<32x32xf32>
    %15 = vector.extract_strided_slice %9 {offsets = [32, 0], sizes = [32, 16], strides = [1, 1]} : vector<128x16xf32> to vector<32x16xf32>
    %16 = arith.truncf %15 : vector<32x16xf32> to vector<32x16xbf16>
    %c1 = arith.constant 1 : index
    %c0_11 = arith.constant 0 : index
    %c0_12 = arith.constant 0 : index
    %17 = vector.load %arg4[%c1, %c0_11, %c0_12] : memref<4x16x32xbf16, #tpu.memory_space<vmem>>, vector<1x16x32xbf16>
    %18 = vector.shape_cast %17 : vector<1x16x32xbf16> to vector<16x32xbf16>
    %cst_13 = arith.constant dense<0.000000e+00> : vector<32x32xf32>
    %19 = tpu.matmul %16, %18, %cst_13 {dimension_numbers = #tpu.dot_dimension_numbers<[1], [0], [0], [1], [0, 0, 1, 1], [], []>} : vector<32x16xbf16>, vector<16x32xbf16>, vector<32x32xf32> -> vector<32x32xf32>
    %20 = arith.addf %14, %19 : vector<32x32xf32>
    %21 = vector.extract_strided_slice %9 {offsets = [64, 0], sizes = [32, 16], strides = [1, 1]} : vector<128x16xf32> to vector<32x16xf32>
    %22 = arith.truncf %21 : vector<32x16xf32> to vector<32x16xbf16>
    %c2 = arith.constant 2 : index
    %c0_14 = arith.constant 0 : index
    %c0_15 = arith.constant 0 : index
    %23 = vector.load %arg4[%c2, %c0_14, %c0_15] : memref<4x16x32xbf16, #tpu.memory_space<vmem>>, vector<1x16x32xbf16>
    %24 = vector.shape_cast %23 : vector<1x16x32xbf16> to vector<16x32xbf16>
    %cst_16 = arith.constant dense<0.000000e+00> : vector<32x32xf32>
    %25 = tpu.matmul %22, %24, %cst_16 {dimension_numbers = #tpu.dot_dimension_numbers<[1], [0], [0], [1], [0, 0, 1, 1], [], []>} : vector<32x16xbf16>, vector<16x32xbf16>, vector<32x32xf32> -> vector<32x32xf32>
    %26 = arith.addf %20, %25 : vector<32x32xf32>
    %27 = vector.extract_strided_slice %9 {offsets = [96, 0], sizes = [32, 16], strides = [1, 1]} : vector<128x16xf32> to vector<32x16xf32>
    %28 = arith.truncf %27 : vector<32x16xf32> to vector<32x16xbf16>
    %c3 = arith.constant 3 : index
    %c0_17 = arith.constant 0 : index
    %c0_18 = arith.constant 0 : index
    %29 = vector.load %arg4[%c3, %c0_17, %c0_18] : memref<4x16x32xbf16, #tpu.memory_space<vmem>>, vector<1x16x32xbf16>
    %30 = vector.shape_cast %29 : vector<1x16x32xbf16> to vector<16x32xbf16>
    %cst_19 = arith.constant dense<0.000000e+00> : vector<32x32xf32>
    %31 = tpu.matmul %28, %30, %cst_19 {dimension_numbers = #tpu.dot_dimension_numbers<[1], [0], [0], [1], [0, 0, 1, 1], [], []>} : vector<32x16xbf16>, vector<16x32xbf16>, vector<32x32xf32> -> vector<32x32xf32>
    %32 = arith.addf %26, %31 : vector<32x32xf32>
    %c0_20 = arith.constant 0 : index
    %c0_21 = arith.constant 0 : index
    %33 = vector.load %arg5[%c0_20, %c0_21] : memref<1x32xf32, #tpu.memory_space<vmem>>, vector<1x32xf32>
    %34 = vector.broadcast %33 : vector<1x32xf32> to vector<32x32xf32>
    %35 = arith.addf %32, %34 : vector<32x32xf32>
    %cst_22 = arith.constant 0.000000e+00 : f32
    %36 = vector.broadcast %cst_22 : f32 to vector<32x32xf32>
    %37 = arith.maximumf %35, %36 : vector<32x32xf32>
    %38 = vector.extract_strided_slice %37 {offsets = [0, 0], sizes = [8, 32], strides = [1, 1]} : vector<32x32xf32> to vector<8x32xf32>
    %39 = arith.truncf %38 : vector<8x32xf32> to vector<8x32xbf16>
    %c0_23 = arith.constant 0 : index
    %c0_24 = arith.constant 0 : index
    %c0_25 = arith.constant 0 : index
    %40 = vector.load %arg6[%c0_23, %c0_24, %c0_25] : memref<4x32x64xbf16, #tpu.memory_space<vmem>>, vector<1x32x64xbf16>
    %41 = vector.shape_cast %40 : vector<1x32x64xbf16> to vector<32x64xbf16>
    %cst_26 = arith.constant dense<0.000000e+00> : vector<8x64xf32>
    %42 = tpu.matmul %39, %41, %cst_26 {dimension_numbers = #tpu.dot_dimension_numbers<[1], [0], [0], [1], [0, 0, 1, 1], [], []>} : vector<8x32xbf16>, vector<32x64xbf16>, vector<8x64xf32> -> vector<8x64xf32>
    %43 = vector.extract_strided_slice %37 {offsets = [8, 0], sizes = [8, 32], strides = [1, 1]} : vector<32x32xf32> to vector<8x32xf32>
    %44 = arith.truncf %43 : vector<8x32xf32> to vector<8x32xbf16>
    %c1_27 = arith.constant 1 : index
    %c0_28 = arith.constant 0 : index
    %c0_29 = arith.constant 0 : index
    %45 = vector.load %arg6[%c1_27, %c0_28, %c0_29] : memref<4x32x64xbf16, #tpu.memory_space<vmem>>, vector<1x32x64xbf16>
    %46 = vector.shape_cast %45 : vector<1x32x64xbf16> to vector<32x64xbf16>
    %cst_30 = arith.constant dense<0.000000e+00> : vector<8x64xf32>
    %47 = tpu.matmul %44, %46, %cst_30 {dimension_numbers = #tpu.dot_dimension_numbers<[1], [0], [0], [1], [0, 0, 1, 1], [], []>} : vector<8x32xbf16>, vector<32x64xbf16>, vector<8x64xf32> -> vector<8x64xf32>
    %48 = arith.addf %42, %47 : vector<8x64xf32>
    %49 = vector.extract_strided_slice %37 {offsets = [16, 0], sizes = [8, 32], strides = [1, 1]} : vector<32x32xf32> to vector<8x32xf32>
    %50 = arith.truncf %49 : vector<8x32xf32> to vector<8x32xbf16>
    %c2_31 = arith.constant 2 : index
    %c0_32 = arith.constant 0 : index
    %c0_33 = arith.constant 0 : index
    %51 = vector.load %arg6[%c2_31, %c0_32, %c0_33] : memref<4x32x64xbf16, #tpu.memory_space<vmem>>, vector<1x32x64xbf16>
    %52 = vector.shape_cast %51 : vector<1x32x64xbf16> to vector<32x64xbf16>
    %cst_34 = arith.constant dense<0.000000e+00> : vector<8x64xf32>
    %53 = tpu.matmul %50, %52, %cst_34 {dimension_numbers = #tpu.dot_dimension_numbers<[1], [0], [0], [1], [0, 0, 1, 1], [], []>} : vector<8x32xbf16>, vector<32x64xbf16>, vector<8x64xf32> -> vector<8x64xf32>
    %54 = arith.addf %48, %53 : vector<8x64xf32>
    %55 = vector.extract_strided_slice %37 {offsets = [24, 0], sizes = [8, 32], strides = [1, 1]} : vector<32x32xf32> to vector<8x32xf32>
    %56 = arith.truncf %55 : vector<8x32xf32> to vector<8x32xbf16>
    %c3_35 = arith.constant 3 : index
    %c0_36 = arith.constant 0 : index
    %c0_37 = arith.constant 0 : index
    %57 = vector.load %arg6[%c3_35, %c0_36, %c0_37] : memref<4x32x64xbf16, #tpu.memory_space<vmem>>, vector<1x32x64xbf16>
    %58 = vector.shape_cast %57 : vector<1x32x64xbf16> to vector<32x64xbf16>
    %cst_38 = arith.constant dense<0.000000e+00> : vector<8x64xf32>
    %59 = tpu.matmul %56, %58, %cst_38 {dimension_numbers = #tpu.dot_dimension_numbers<[1], [0], [0], [1], [0, 0, 1, 1], [], []>} : vector<8x32xbf16>, vector<32x64xbf16>, vector<8x64xf32> -> vector<8x64xf32>
    %60 = arith.addf %54, %59 : vector<8x64xf32>
    %c0_39 = arith.constant 0 : index
    %c0_40 = arith.constant 0 : index
    %61 = vector.load %arg7[%c0_39, %c0_40] : memref<1x64xf32, #tpu.memory_space<vmem>>, vector<1x64xf32>
    %62 = vector.broadcast %61 : vector<1x64xf32> to vector<8x64xf32>
    %63 = arith.addf %60, %62 : vector<8x64xf32>
    %cst_41 = arith.constant 0.000000e+00 : f32
    %64 = vector.broadcast %cst_41 : f32 to vector<8x64xf32>
    %65 = arith.maximumf %63, %64 : vector<8x64xf32>
    %c0_42 = arith.constant 0 : index
    %c0_43 = arith.constant 0 : index
    %c0_44 = arith.constant 0 : index
    %66 = vector.load %arg8[%c0_42, %c0_43, %c0_44] : memref<4x2x8xf32, #tpu.memory_space<vmem>>, vector<1x2x8xf32>
    %67 = vector.shape_cast %66 : vector<1x2x8xf32> to vector<2x8xf32>
    %cst_45 = arith.constant dense<0.000000e+00> : vector<2x64xf32>
    %68 = tpu.matmul %67, %65, %cst_45 {dimension_numbers = #tpu.dot_dimension_numbers<[1], [0], [0], [1], [0, 0, 1, 1], [], []>} : vector<2x8xf32>, vector<8x64xf32>, vector<2x64xf32> -> vector<2x64xf32>
    %69 = arith.truncf %68 : vector<2x64xf32> to vector<2x64xbf16>
    %c0_46 = arith.constant 0 : index
    %c0_47 = arith.constant 0 : index
    %c0_48 = arith.constant 0 : index
    %70 = vector.load %arg10[%c0_46, %c0_47, %c0_48] : memref<4x64x512xbf16, #tpu.memory_space<vmem>>, vector<1x64x512xbf16>
    %71 = vector.shape_cast %70 : vector<1x64x512xbf16> to vector<64x512xbf16>
    %cst_49 = arith.constant dense<0.000000e+00> : vector<2x512xf32>
    %72 = tpu.matmul %69, %71, %cst_49 {dimension_numbers = #tpu.dot_dimension_numbers<[1], [0], [0], [1], [0, 0, 1, 1], [], []>} : vector<2x64xbf16>, vector<64x512xbf16>, vector<2x512xf32> -> vector<2x512xf32>
    %c1_50 = arith.constant 1 : index
    %c0_51 = arith.constant 0 : index
    %c0_52 = arith.constant 0 : index
    %73 = vector.load %arg8[%c1_50, %c0_51, %c0_52] : memref<4x2x8xf32, #tpu.memory_space<vmem>>, vector<1x2x8xf32>
    %74 = vector.shape_cast %73 : vector<1x2x8xf32> to vector<2x8xf32>
    %cst_53 = arith.constant dense<0.000000e+00> : vector<2x64xf32>
    %75 = tpu.matmul %74, %65, %cst_53 {dimension_numbers = #tpu.dot_dimension_numbers<[1], [0], [0], [1], [0, 0, 1, 1], [], []>} : vector<2x8xf32>, vector<8x64xf32>, vector<2x64xf32> -> vector<2x64xf32>
    %76 = arith.truncf %75 : vector<2x64xf32> to vector<2x64xbf16>
    %c1_54 = arith.constant 1 : index
    %c0_55 = arith.constant 0 : index
    %c0_56 = arith.constant 0 : index
    %77 = vector.load %arg10[%c1_54, %c0_55, %c0_56] : memref<4x64x512xbf16, #tpu.memory_space<vmem>>, vector<1x64x512xbf16>
    %78 = vector.shape_cast %77 : vector<1x64x512xbf16> to vector<64x512xbf16>
    %cst_57 = arith.constant dense<0.000000e+00> : vector<2x512xf32>
    %79 = tpu.matmul %76, %78, %cst_57 {dimension_numbers = #tpu.dot_dimension_numbers<[1], [0], [0], [1], [0, 0, 1, 1], [], []>} : vector<2x64xbf16>, vector<64x512xbf16>, vector<2x512xf32> -> vector<2x512xf32>
    %80 = arith.addf %72, %79 : vector<2x512xf32>
    %c2_58 = arith.constant 2 : index
    %c0_59 = arith.constant 0 : index
    %c0_60 = arith.constant 0 : index
    %81 = vector.load %arg8[%c2_58, %c0_59, %c0_60] : memref<4x2x8xf32, #tpu.memory_space<vmem>>, vector<1x2x8xf32>
    %82 = vector.shape_cast %81 : vector<1x2x8xf32> to vector<2x8xf32>
    %cst_61 = arith.constant dense<0.000000e+00> : vector<2x64xf32>
    %83 = tpu.matmul %82, %65, %cst_61 {dimension_numbers = #tpu.dot_dimension_numbers<[1], [0], [0], [1], [0, 0, 1, 1], [], []>} : vector<2x8xf32>, vector<8x64xf32>, vector<2x64xf32> -> vector<2x64xf32>
    %84 = arith.truncf %83 : vector<2x64xf32> to vector<2x64xbf16>
    %c2_62 = arith.constant 2 : index
    %c0_63 = arith.constant 0 : index
    %c0_64 = arith.constant 0 : index
    %85 = vector.load %arg10[%c2_62, %c0_63, %c0_64] : memref<4x64x512xbf16, #tpu.memory_space<vmem>>, vector<1x64x512xbf16>
    %86 = vector.shape_cast %85 : vector<1x64x512xbf16> to vector<64x512xbf16>
    %cst_65 = arith.constant dense<0.000000e+00> : vector<2x512xf32>
    %87 = tpu.matmul %84, %86, %cst_65 {dimension_numbers = #tpu.dot_dimension_numbers<[1], [0], [0], [1], [0, 0, 1, 1], [], []>} : vector<2x64xbf16>, vector<64x512xbf16>, vector<2x512xf32> -> vector<2x512xf32>
    %88 = arith.addf %80, %87 : vector<2x512xf32>
    %c3_66 = arith.constant 3 : index
    %c0_67 = arith.constant 0 : index
    %c0_68 = arith.constant 0 : index
    %89 = vector.load %arg8[%c3_66, %c0_67, %c0_68] : memref<4x2x8xf32, #tpu.memory_space<vmem>>, vector<1x2x8xf32>
    %90 = vector.shape_cast %89 : vector<1x2x8xf32> to vector<2x8xf32>
    %cst_69 = arith.constant dense<0.000000e+00> : vector<2x64xf32>
    %91 = tpu.matmul %90, %65, %cst_69 {dimension_numbers = #tpu.dot_dimension_numbers<[1], [0], [0], [1], [0, 0, 1, 1], [], []>} : vector<2x8xf32>, vector<8x64xf32>, vector<2x64xf32> -> vector<2x64xf32>
    %92 = arith.truncf %91 : vector<2x64xf32> to vector<2x64xbf16>
    %c3_70 = arith.constant 3 : index
    %c0_71 = arith.constant 0 : index
    %c0_72 = arith.constant 0 : index
    %93 = vector.load %arg10[%c3_70, %c0_71, %c0_72] : memref<4x64x512xbf16, #tpu.memory_space<vmem>>, vector<1x64x512xbf16>
    %94 = vector.shape_cast %93 : vector<1x64x512xbf16> to vector<64x512xbf16>
    %cst_73 = arith.constant dense<0.000000e+00> : vector<2x512xf32>
    %95 = tpu.matmul %92, %94, %cst_73 {dimension_numbers = #tpu.dot_dimension_numbers<[1], [0], [0], [1], [0, 0, 1, 1], [], []>} : vector<2x64xbf16>, vector<64x512xbf16>, vector<2x512xf32> -> vector<2x512xf32>
    %96 = arith.addf %88, %95 : vector<2x512xf32>
    %c0_74 = arith.constant 0 : index
    %c0_75 = arith.constant 0 : index
    %97 = vector.load %arg11[%c0_74, %c0_75] : memref<1x512xf32, #tpu.memory_space<vmem>>, vector<1x512xf32>
    %98 = vector.broadcast %97 : vector<1x512xf32> to vector<2x512xf32>
    %99 = arith.addf %96, %98 : vector<2x512xf32>
    %c0_76 = arith.constant 0 : index
    %c0_77 = arith.constant 0 : index
    %c0_78 = arith.constant 0 : index
    %100 = vector.load %arg18[%c0_76, %c0_77, %c0_78] : memref<1x2x512xf32, #tpu.memory_space<vmem>>, vector<1x2x512xf32>
    %101 = vector.shape_cast %100 : vector<1x2x512xf32> to vector<2x512xf32>
    %102 = vector.shape_cast %99 : vector<2x512xf32> to vector<1x2x512xf32>
    tpu.vector_store %arg18[%c0_76, %c0_77, %c0_78], %102 {strides = array<i32>} : memref<1x2x512xf32, #tpu.memory_space<vmem>>, vector<1x2x512xf32>,
    %c0_79 = arith.constant 0 : index
    %c0_80 = arith.constant 0 : index
    %c0_81 = arith.constant 0 : index
    %103 = vector.load %arg9[%c0_79, %c0_80, %c0_81] : memref<2x1x8xf32, #tpu.memory_space<vmem>>, vector<1x1x8xf32>
    %104 = vector.shape_cast %103 : vector<1x1x8xf32> to vector<1x8xf32>
    %cst_82 = arith.constant dense<0.000000e+00> : vector<1x64xf32>
    %105 = tpu.matmul %104, %65, %cst_82 {dimension_numbers = #tpu.dot_dimension_numbers<[1], [0], [0], [1], [0, 0, 1, 1], [], []>} : vector<1x8xf32>, vector<8x64xf32>, vector<1x64xf32> -> vector<1x64xf32>
    %106 = arith.truncf %105 : vector<1x64xf32> to vector<1x64xbf16>
    %c0_83 = arith.constant 0 : index
    %c0_84 = arith.constant 0 : index
    %107 = vector.load %arg12[%c0_83, %c0_84] : memref<40x128xf32, #tpu.memory_space<vmem>>, vector<40x128xf32>
    %c0_85 = arith.constant 0 : index
    %c0_86 = arith.constant 0 : index
    %c0_87 = arith.constant 0 : index
    %108 = vector.load %arg14[%c0_85, %c0_86, %c0_87] : memref<3x64x64xbf16, #tpu.memory_space<vmem>>, vector<1x64x64xbf16>
    %109 = vector.shape_cast %108 : vector<1x64x64xbf16> to vector<64x64xbf16>
    %cst_88 = arith.constant dense<0.000000e+00> : vector<1x64xf32>
    %110 = tpu.matmul %106, %109, %cst_88 {dimension_numbers = #tpu.dot_dimension_numbers<[1], [0], [0], [1], [0, 0, 1, 1], [], []>} : vector<1x64xbf16>, vector<64x64xbf16>, vector<1x64xf32> -> vector<1x64xf32>
    %111 = arith.truncf %107 : vector<40x128xf32> to vector<40x128xbf16>
    %c0_89 = arith.constant 0 : index
    %c0_90 = arith.constant 0 : index
    %c0_91 = arith.constant 0 : index
    %112 = vector.load %arg13[%c0_89, %c0_90, %c0_91] : memref<3x128x64xbf16, #tpu.memory_space<vmem>>, vector<1x128x64xbf16>
    %113 = vector.shape_cast %112 : vector<1x128x64xbf16> to vector<128x64xbf16>
    %cst_92 = arith.constant dense<0.000000e+00> : vector<40x64xf32>
    %114 = tpu.matmul %111, %113, %cst_92 {dimension_numbers = #tpu.dot_dimension_numbers<[1], [0], [0], [1], [0, 0, 1, 1], [], []>} : vector<40x128xbf16>, vector<128x64xbf16>, vector<40x64xf32> -> vector<40x64xf32>
    %115 = vector.broadcast %110 : vector<1x64xf32> to vector<40x64xf32>
    %116 = arith.addf %114, %115 : vector<40x64xf32>
    %c0_93 = arith.constant 0 : index
    %c0_94 = arith.constant 0 : index
    %c0_95 = arith.constant 0 : index
    %117 = vector.load %arg15[%c0_93, %c0_94, %c0_95] : memref<3x1x64xf32, #tpu.memory_space<vmem>>, vector<1x1x64xf32>
    %118 = vector.shape_cast %117 : vector<1x1x64xf32> to vector<1x64xf32>
    %119 = vector.broadcast %118 : vector<1x64xf32> to vector<40x64xf32>
    %120 = arith.addf %116, %119 : vector<40x64xf32>
    %cst_96 = arith.constant 0.000000e+00 : f32
    %121 = vector.broadcast %cst_96 : f32 to vector<40x64xf32>
    %122 = arith.maximumf %120, %121 : vector<40x64xf32>
    %123 = arith.truncf %122 : vector<40x64xf32> to vector<40x64xbf16>
    %c0_97 = arith.constant 0 : index
    %c0_98 = arith.constant 0 : index
    %c0_99 = arith.constant 0 : index
    %124 = vector.load %arg16[%c0_97, %c0_98, %c0_99] : memref<3x64x128xbf16, #tpu.memory_space<vmem>>, vector<1x64x128xbf16>
    %125 = vector.shape_cast %124 : vector<1x64x128xbf16> to vector<64x128xbf16>
    %cst_100 = arith.constant dense<0.000000e+00> : vector<40x128xf32>
    %126 = tpu.matmul %123, %125, %cst_100 {dimension_numbers = #tpu.dot_dimension_numbers<[1], [0], [0], [1], [0, 0, 1, 1], [], []>} : vector<40x64xbf16>, vector<64x128xbf16>, vector<40x128xf32> -> vector<40x128xf32>
    %c0_101 = arith.constant 0 : index
    %c0_102 = arith.constant 0 : index
    %c0_103 = arith.constant 0 : index
    %127 = vector.load %arg17[%c0_101, %c0_102, %c0_103] : memref<3x1x128xf32, #tpu.memory_space<vmem>>, vector<1x1x128xf32>
    %128 = vector.shape_cast %127 : vector<1x1x128xf32> to vector<1x128xf32>
    %129 = vector.broadcast %128 : vector<1x128xf32> to vector<40x128xf32>
    %130 = arith.addf %126, %129 : vector<40x128xf32>
    %131 = math.tanh %130 : vector<40x128xf32>
    %132 = arith.addf %107, %131 : vector<40x128xf32>
    %c0_104 = arith.constant 0 : index
    %c0_105 = arith.constant 0 : index
    %c0_106 = arith.constant 0 : index
    %c0_107 = arith.constant 0 : index
    %133 = vector.load %arg19[%c0_104, %c0_105, %c0_106, %c0_107] : memref<1x3x80x128xf32, #tpu.memory_space<vmem>>, vector<1x1x40x128xf32>
    %134 = vector.shape_cast %133 : vector<1x1x40x128xf32> to vector<40x128xf32>
    %135 = vector.shape_cast %132 : vector<40x128xf32> to vector<1x1x40x128xf32>
    tpu.vector_store %arg19[%c0_104, %c0_105, %c0_106, %c0_107], %135 {strides = array<i32>} : memref<1x3x80x128xf32, #tpu.memory_space<vmem>>, vector<1x1x40x128xf32>,
    %c1_108 = arith.constant 1 : index
    %c0_109 = arith.constant 0 : index
    %c0_110 = arith.constant 0 : index
    %136 = vector.load %arg14[%c1_108, %c0_109, %c0_110] : memref<3x64x64xbf16, #tpu.memory_space<vmem>>, vector<1x64x64xbf16>
    %137 = vector.shape_cast %136 : vector<1x64x64xbf16> to vector<64x64xbf16>
    %cst_111 = arith.constant dense<0.000000e+00> : vector<1x64xf32>
    %138 = tpu.matmul %106, %137, %cst_111 {dimension_numbers = #tpu.dot_dimension_numbers<[1], [0], [0], [1], [0, 0, 1, 1], [], []>} : vector<1x64xbf16>, vector<64x64xbf16>, vector<1x64xf32> -> vector<1x64xf32>
    %139 = arith.truncf %132 : vector<40x128xf32> to vector<40x128xbf16>
    %c1_112 = arith.constant 1 : index
    %c0_113 = arith.constant 0 : index
    %c0_114 = arith.constant 0 : index
    %140 = vector.load %arg13[%c1_112, %c0_113, %c0_114] : memref<3x128x64xbf16, #tpu.memory_space<vmem>>, vector<1x128x64xbf16>
    %141 = vector.shape_cast %140 : vector<1x128x64xbf16> to vector<128x64xbf16>
    %cst_115 = arith.constant dense<0.000000e+00> : vector<40x64xf32>
    %142 = tpu.matmul %139, %141, %cst_115 {dimension_numbers = #tpu.dot_dimension_numbers<[1], [0], [0], [1], [0, 0, 1, 1], [], []>} : vector<40x128xbf16>, vector<128x64xbf16>, vector<40x64xf32> -> vector<40x64xf32>
    %143 = vector.broadcast %138 : vector<1x64xf32> to vector<40x64xf32>
    %144 = arith.addf %142, %143 : vector<40x64xf32>
    %c1_116 = arith.constant 1 : index
    %c0_117 = arith.constant 0 : index
    %c0_118 = arith.constant 0 : index
    %145 = vector.load %arg15[%c1_116, %c0_117, %c0_118] : memref<3x1x64xf32, #tpu.memory_space<vmem>>, vector<1x1x64xf32>
    %146 = vector.shape_cast %145 : vector<1x1x64xf32> to vector<1x64xf32>
    %147 = vector.broadcast %146 : vector<1x64xf32> to vector<40x64xf32>
    %148 = arith.addf %144, %147 : vector<40x64xf32>
    %cst_119 = arith.constant 0.000000e+00 : f32
    %149 = vector.broadcast %cst_119 : f32 to vector<40x64xf32>
    %150 = arith.maximumf %148, %149 : vector<40x64xf32>
    %151 = arith.truncf %150 : vector<40x64xf32> to vector<40x64xbf16>
    %c1_120 = arith.constant 1 : index
    %c0_121 = arith.constant 0 : index
    %c0_122 = arith.constant 0 : index
    %152 = vector.load %arg16[%c1_120, %c0_121, %c0_122] : memref<3x64x128xbf16, #tpu.memory_space<vmem>>, vector<1x64x128xbf16>
    %153 = vector.shape_cast %152 : vector<1x64x128xbf16> to vector<64x128xbf16>
    %cst_123 = arith.constant dense<0.000000e+00> : vector<40x128xf32>
    %154 = tpu.matmul %151, %153, %cst_123 {dimension_numbers = #tpu.dot_dimension_numbers<[1], [0], [0], [1], [0, 0, 1, 1], [], []>} : vector<40x64xbf16>, vector<64x128xbf16>, vector<40x128xf32> -> vector<40x128xf32>
    %c1_124 = arith.constant 1 : index
    %c0_125 = arith.constant 0 : index
    %c0_126 = arith.constant 0 : index
    %155 = vector.load %arg17[%c1_124, %c0_125, %c0_126] : memref<3x1x128xf32, #tpu.memory_space<vmem>>, vector<1x1x128xf32>
    %156 = vector.shape_cast %155 : vector<1x1x128xf32> to vector<1x128xf32>
    %157 = vector.broadcast %156 : vector<1x128xf32> to vector<40x128xf32>
    %158 = arith.addf %154, %157 : vector<40x128xf32>
    %159 = math.tanh %158 : vector<40x128xf32>
    %160 = arith.addf %132, %159 : vector<40x128xf32>
    %c0_127 = arith.constant 0 : index
    %c1_128 = arith.constant 1 : index
    %c0_129 = arith.constant 0 : index
    %c0_130 = arith.constant 0 : index
    %161 = vector.load %arg19[%c0_127, %c1_128, %c0_129, %c0_130] : memref<1x3x80x128xf32, #tpu.memory_space<vmem>>, vector<1x1x40x128xf32>
    %162 = vector.shape_cast %161 : vector<1x1x40x128xf32> to vector<40x128xf32>
    %163 = vector.shape_cast %160 : vector<40x128xf32> to vector<1x1x40x128xf32>
    tpu.vector_store %arg19[%c0_127, %c1_128, %c0_129, %c0_130], %163 {strides = array<i32>} : memref<1x3x80x128xf32, #tpu.memory_space<vmem>>, vector<1x1x40x128xf32>,
    %c2_131 = arith.constant 2 : index
    %c0_132 = arith.constant 0 : index
    %c0_133 = arith.constant 0 : index
    %164 = vector.load %arg14[%c2_131, %c0_132, %c0_133] : memref<3x64x64xbf16, #tpu.memory_space<vmem>>, vector<1x64x64xbf16>
    %165 = vector.shape_cast %164 : vector<1x64x64xbf16> to vector<64x64xbf16>
    %cst_134 = arith.constant dense<0.000000e+00> : vector<1x64xf32>
    %166 = tpu.matmul %106, %165, %cst_134 {dimension_numbers = #tpu.dot_dimension_numbers<[1], [0], [0], [1], [0, 0, 1, 1], [], []>} : vector<1x64xbf16>, vector<64x64xbf16>, vector<1x64xf32> -> vector<1x64xf32>
    %167 = arith.truncf %160 : vector<40x128xf32> to vector<40x128xbf16>
    %c2_135 = arith.constant 2 : index
    %c0_136 = arith.constant 0 : index
    %c0_137 = arith.constant 0 : index
    %168 = vector.load %arg13[%c2_135, %c0_136, %c0_137] : memref<3x128x64xbf16, #tpu.memory_space<vmem>>, vector<1x128x64xbf16>
    %169 = vector.shape_cast %168 : vector<1x128x64xbf16> to vector<128x64xbf16>
    %cst_138 = arith.constant dense<0.000000e+00> : vector<40x64xf32>
    %170 = tpu.matmul %167, %169, %cst_138 {dimension_numbers = #tpu.dot_dimension_numbers<[1], [0], [0], [1], [0, 0, 1, 1], [], []>} : vector<40x128xbf16>, vector<128x64xbf16>, vector<40x64xf32> -> vector<40x64xf32>
    %171 = vector.broadcast %166 : vector<1x64xf32> to vector<40x64xf32>
    %172 = arith.addf %170, %171 : vector<40x64xf32>
    %c2_139 = arith.constant 2 : index
    %c0_140 = arith.constant 0 : index
    %c0_141 = arith.constant 0 : index
    %173 = vector.load %arg15[%c2_139, %c0_140, %c0_141] : memref<3x1x64xf32, #tpu.memory_space<vmem>>, vector<1x1x64xf32>
    %174 = vector.shape_cast %173 : vector<1x1x64xf32> to vector<1x64xf32>
    %175 = vector.broadcast %174 : vector<1x64xf32> to vector<40x64xf32>
    %176 = arith.addf %172, %175 : vector<40x64xf32>
    %cst_142 = arith.constant 0.000000e+00 : f32
    %177 = vector.broadcast %cst_142 : f32 to vector<40x64xf32>
    %178 = arith.maximumf %176, %177 : vector<40x64xf32>
    %179 = arith.truncf %178 : vector<40x64xf32> to vector<40x64xbf16>
    %c2_143 = arith.constant 2 : index
    %c0_144 = arith.constant 0 : index
    %c0_145 = arith.constant 0 : index
    %180 = vector.load %arg16[%c2_143, %c0_144, %c0_145] : memref<3x64x128xbf16, #tpu.memory_space<vmem>>, vector<1x64x128xbf16>
    %181 = vector.shape_cast %180 : vector<1x64x128xbf16> to vector<64x128xbf16>
    %cst_146 = arith.constant dense<0.000000e+00> : vector<40x128xf32>
    %182 = tpu.matmul %179, %181, %cst_146 {dimension_numbers = #tpu.dot_dimension_numbers<[1], [0], [0], [1], [0, 0, 1, 1], [], []>} : vector<40x64xbf16>, vector<64x128xbf16>, vector<40x128xf32> -> vector<40x128xf32>
    %c2_147 = arith.constant 2 : index
    %c0_148 = arith.constant 0 : index
    %c0_149 = arith.constant 0 : index
    %183 = vector.load %arg17[%c2_147, %c0_148, %c0_149] : memref<3x1x128xf32, #tpu.memory_space<vmem>>, vector<1x1x128xf32>
    %184 = vector.shape_cast %183 : vector<1x1x128xf32> to vector<1x128xf32>
    %185 = vector.broadcast %184 : vector<1x128xf32> to vector<40x128xf32>
    %186 = arith.addf %182, %185 : vector<40x128xf32>
    %187 = math.tanh %186 : vector<40x128xf32>
    %188 = arith.addf %160, %187 : vector<40x128xf32>
    %c0_150 = arith.constant 0 : index
    %c2_151 = arith.constant 2 : index
    %c0_152 = arith.constant 0 : index
    %c0_153 = arith.constant 0 : index
    %189 = vector.load %arg19[%c0_150, %c2_151, %c0_152, %c0_153] : memref<1x3x80x128xf32, #tpu.memory_space<vmem>>, vector<1x1x40x128xf32>
    %190 = vector.shape_cast %189 : vector<1x1x40x128xf32> to vector<40x128xf32>
    %191 = vector.shape_cast %188 : vector<40x128xf32> to vector<1x1x40x128xf32>
    tpu.vector_store %arg19[%c0_150, %c2_151, %c0_152, %c0_153], %191 {strides = array<i32>} : memref<1x3x80x128xf32, #tpu.memory_space<vmem>>, vector<1x1x40x128xf32>,
    %c1_154 = arith.constant 1 : index
    %c0_155 = arith.constant 0 : index
    %c0_156 = arith.constant 0 : index
    %192 = vector.load %arg9[%c1_154, %c0_155, %c0_156] : memref<2x1x8xf32, #tpu.memory_space<vmem>>, vector<1x1x8xf32>
    %193 = vector.shape_cast %192 : vector<1x1x8xf32> to vector<1x8xf32>
    %cst_157 = arith.constant dense<0.000000e+00> : vector<1x64xf32>
    %194 = tpu.matmul %193, %65, %cst_157 {dimension_numbers = #tpu.dot_dimension_numbers<[1], [0], [0], [1], [0, 0, 1, 1], [], []>} : vector<1x8xf32>, vector<8x64xf32>, vector<1x64xf32> -> vector<1x64xf32>
    %195 = arith.truncf %194 : vector<1x64xf32> to vector<1x64xbf16>
    %c0_158 = arith.constant 0 : index
    %c0_159 = arith.constant 0 : index
    %196 = vector.load %arg12[%c0_158, %c0_159] : memref<40x128xf32, #tpu.memory_space<vmem>>, vector<40x128xf32>
    %c0_160 = arith.constant 0 : index
    %c0_161 = arith.constant 0 : index
    %c0_162 = arith.constant 0 : index
    %197 = vector.load %arg14[%c0_160, %c0_161, %c0_162] : memref<3x64x64xbf16, #tpu.memory_space<vmem>>, vector<1x64x64xbf16>
    %198 = vector.shape_cast %197 : vector<1x64x64xbf16> to vector<64x64xbf16>
    %cst_163 = arith.constant dense<0.000000e+00> : vector<1x64xf32>
    %199 = tpu.matmul %195, %198, %cst_163 {dimension_numbers = #tpu.dot_dimension_numbers<[1], [0], [0], [1], [0, 0, 1, 1], [], []>} : vector<1x64xbf16>, vector<64x64xbf16>, vector<1x64xf32> -> vector<1x64xf32>
    %200 = arith.truncf %196 : vector<40x128xf32> to vector<40x128xbf16>
    %c0_164 = arith.constant 0 : index
    %c0_165 = arith.constant 0 : index
    %c0_166 = arith.constant 0 : index
    %201 = vector.load %arg13[%c0_164, %c0_165, %c0_166] : memref<3x128x64xbf16, #tpu.memory_space<vmem>>, vector<1x128x64xbf16>
    %202 = vector.shape_cast %201 : vector<1x128x64xbf16> to vector<128x64xbf16>
    %cst_167 = arith.constant dense<0.000000e+00> : vector<40x64xf32>
    %203 = tpu.matmul %200, %202, %cst_167 {dimension_numbers = #tpu.dot_dimension_numbers<[1], [0], [0], [1], [0, 0, 1, 1], [], []>} : vector<40x128xbf16>, vector<128x64xbf16>, vector<40x64xf32> -> vector<40x64xf32>
    %204 = vector.broadcast %199 : vector<1x64xf32> to vector<40x64xf32>
    %205 = arith.addf %203, %204 : vector<40x64xf32>
    %c0_168 = arith.constant 0 : index
    %c0_169 = arith.constant 0 : index
    %c0_170 = arith.constant 0 : index
    %206 = vector.load %arg15[%c0_168, %c0_169, %c0_170] : memref<3x1x64xf32, #tpu.memory_space<vmem>>, vector<1x1x64xf32>
    %207 = vector.shape_cast %206 : vector<1x1x64xf32> to vector<1x64xf32>
    %208 = vector.broadcast %207 : vector<1x64xf32> to vector<40x64xf32>
    %209 = arith.addf %205, %208 : vector<40x64xf32>
    %cst_171 = arith.constant 0.000000e+00 : f32
    %210 = vector.broadcast %cst_171 : f32 to vector<40x64xf32>
    %211 = arith.maximumf %209, %210 : vector<40x64xf32>
    %212 = arith.truncf %211 : vector<40x64xf32> to vector<40x64xbf16>
    %c0_172 = arith.constant 0 : index
    %c0_173 = arith.constant 0 : index
    %c0_174 = arith.constant 0 : index
    %213 = vector.load %arg16[%c0_172, %c0_173, %c0_174] : memref<3x64x128xbf16, #tpu.memory_space<vmem>>, vector<1x64x128xbf16>
    %214 = vector.shape_cast %213 : vector<1x64x128xbf16> to vector<64x128xbf16>
    %cst_175 = arith.constant dense<0.000000e+00> : vector<40x128xf32>
    %215 = tpu.matmul %212, %214, %cst_175 {dimension_numbers = #tpu.dot_dimension_numbers<[1], [0], [0], [1], [0, 0, 1, 1], [], []>} : vector<40x64xbf16>, vector<64x128xbf16>, vector<40x128xf32> -> vector<40x128xf32>
    %c0_176 = arith.constant 0 : index
    %c0_177 = arith.constant 0 : index
    %c0_178 = arith.constant 0 : index
    %216 = vector.load %arg17[%c0_176, %c0_177, %c0_178] : memref<3x1x128xf32, #tpu.memory_space<vmem>>, vector<1x1x128xf32>
    %217 = vector.shape_cast %216 : vector<1x1x128xf32> to vector<1x128xf32>
    %218 = vector.broadcast %217 : vector<1x128xf32> to vector<40x128xf32>
    %219 = arith.addf %215, %218 : vector<40x128xf32>
    %220 = math.tanh %219 : vector<40x128xf32>
    %221 = arith.addf %196, %220 : vector<40x128xf32>
    %c0_179 = arith.constant 0 : index
    %c0_180 = arith.constant 0 : index
    %c40 = arith.constant 40 : index
    %c0_181 = arith.constant 0 : index
    %222 = vector.load %arg19[%c0_179, %c0_180, %c40, %c0_181] : memref<1x3x80x128xf32, #tpu.memory_space<vmem>>, vector<1x1x40x128xf32>
    %223 = vector.shape_cast %222 : vector<1x1x40x128xf32> to vector<40x128xf32>
    %224 = vector.shape_cast %221 : vector<40x128xf32> to vector<1x1x40x128xf32>
    tpu.vector_store %arg19[%c0_179, %c0_180, %c40, %c0_181], %224 {strides = array<i32>} : memref<1x3x80x128xf32, #tpu.memory_space<vmem>>, vector<1x1x40x128xf32>,
    %c1_182 = arith.constant 1 : index
    %c0_183 = arith.constant 0 : index
    %c0_184 = arith.constant 0 : index
    %225 = vector.load %arg14[%c1_182, %c0_183, %c0_184] : memref<3x64x64xbf16, #tpu.memory_space<vmem>>, vector<1x64x64xbf16>
    %226 = vector.shape_cast %225 : vector<1x64x64xbf16> to vector<64x64xbf16>
    %cst_185 = arith.constant dense<0.000000e+00> : vector<1x64xf32>
    %227 = tpu.matmul %195, %226, %cst_185 {dimension_numbers = #tpu.dot_dimension_numbers<[1], [0], [0], [1], [0, 0, 1, 1], [], []>} : vector<1x64xbf16>, vector<64x64xbf16>, vector<1x64xf32> -> vector<1x64xf32>
    %228 = arith.truncf %221 : vector<40x128xf32> to vector<40x128xbf16>
    %c1_186 = arith.constant 1 : index
    %c0_187 = arith.constant 0 : index
    %c0_188 = arith.constant 0 : index
    %229 = vector.load %arg13[%c1_186, %c0_187, %c0_188] : memref<3x128x64xbf16, #tpu.memory_space<vmem>>, vector<1x128x64xbf16>
    %230 = vector.shape_cast %229 : vector<1x128x64xbf16> to vector<128x64xbf16>
    %cst_189 = arith.constant dense<0.000000e+00> : vector<40x64xf32>
    %231 = tpu.matmul %228, %230, %cst_189 {dimension_numbers = #tpu.dot_dimension_numbers<[1], [0], [0], [1], [0, 0, 1, 1], [], []>} : vector<40x128xbf16>, vector<128x64xbf16>, vector<40x64xf32> -> vector<40x64xf32>
    %232 = vector.broadcast %227 : vector<1x64xf32> to vector<40x64xf32>
    %233 = arith.addf %231, %232 : vector<40x64xf32>
    %c1_190 = arith.constant 1 : index
    %c0_191 = arith.constant 0 : index
    %c0_192 = arith.constant 0 : index
    %234 = vector.load %arg15[%c1_190, %c0_191, %c0_192] : memref<3x1x64xf32, #tpu.memory_space<vmem>>, vector<1x1x64xf32>
    %235 = vector.shape_cast %234 : vector<1x1x64xf32> to vector<1x64xf32>
    %236 = vector.broadcast %235 : vector<1x64xf32> to vector<40x64xf32>
    %237 = arith.addf %233, %236 : vector<40x64xf32>
    %cst_193 = arith.constant 0.000000e+00 : f32
    %238 = vector.broadcast %cst_193 : f32 to vector<40x64xf32>
    %239 = arith.maximumf %237, %238 : vector<40x64xf32>
    %240 = arith.truncf %239 : vector<40x64xf32> to vector<40x64xbf16>
    %c1_194 = arith.constant 1 : index
    %c0_195 = arith.constant 0 : index
    %c0_196 = arith.constant 0 : index
    %241 = vector.load %arg16[%c1_194, %c0_195, %c0_196] : memref<3x64x128xbf16, #tpu.memory_space<vmem>>, vector<1x64x128xbf16>
    %242 = vector.shape_cast %241 : vector<1x64x128xbf16> to vector<64x128xbf16>
    %cst_197 = arith.constant dense<0.000000e+00> : vector<40x128xf32>
    %243 = tpu.matmul %240, %242, %cst_197 {dimension_numbers = #tpu.dot_dimension_numbers<[1], [0], [0], [1], [0, 0, 1, 1], [], []>} : vector<40x64xbf16>, vector<64x128xbf16>, vector<40x128xf32> -> vector<40x128xf32>
    %c1_198 = arith.constant 1 : index
    %c0_199 = arith.constant 0 : index
    %c0_200 = arith.constant 0 : index
    %244 = vector.load %arg17[%c1_198, %c0_199, %c0_200] : memref<3x1x128xf32, #tpu.memory_space<vmem>>, vector<1x1x128xf32>
    %245 = vector.shape_cast %244 : vector<1x1x128xf32> to vector<1x128xf32>
    %246 = vector.broadcast %245 : vector<1x128xf32> to vector<40x128xf32>
    %247 = arith.addf %243, %246 : vector<40x128xf32>
    %248 = math.tanh %247 : vector<40x128xf32>
    %249 = arith.addf %221, %248 : vector<40x128xf32>
    %c0_201 = arith.constant 0 : index
    %c1_202 = arith.constant 1 : index
    %c40_203 = arith.constant 40 : index
    %c0_204 = arith.constant 0 : index
    %250 = vector.load %arg19[%c0_201, %c1_202, %c40_203, %c0_204] : memref<1x3x80x128xf32, #tpu.memory_space<vmem>>, vector<1x1x40x128xf32>
    %251 = vector.shape_cast %250 : vector<1x1x40x128xf32> to vector<40x128xf32>
    %252 = vector.shape_cast %249 : vector<40x128xf32> to vector<1x1x40x128xf32>
    tpu.vector_store %arg19[%c0_201, %c1_202, %c40_203, %c0_204], %252 {strides = array<i32>} : memref<1x3x80x128xf32, #tpu.memory_space<vmem>>, vector<1x1x40x128xf32>,
    %c2_205 = arith.constant 2 : index
    %c0_206 = arith.constant 0 : index
    %c0_207 = arith.constant 0 : index
    %253 = vector.load %arg14[%c2_205, %c0_206, %c0_207] : memref<3x64x64xbf16, #tpu.memory_space<vmem>>, vector<1x64x64xbf16>
    %254 = vector.shape_cast %253 : vector<1x64x64xbf16> to vector<64x64xbf16>
    %cst_208 = arith.constant dense<0.000000e+00> : vector<1x64xf32>
    %255 = tpu.matmul %195, %254, %cst_208 {dimension_numbers = #tpu.dot_dimension_numbers<[1], [0], [0], [1], [0, 0, 1, 1], [], []>} : vector<1x64xbf16>, vector<64x64xbf16>, vector<1x64xf32> -> vector<1x64xf32>
    %256 = arith.truncf %249 : vector<40x128xf32> to vector<40x128xbf16>
    %c2_209 = arith.constant 2 : index
    %c0_210 = arith.constant 0 : index
    %c0_211 = arith.constant 0 : index
    %257 = vector.load %arg13[%c2_209, %c0_210, %c0_211] : memref<3x128x64xbf16, #tpu.memory_space<vmem>>, vector<1x128x64xbf16>
    %258 = vector.shape_cast %257 : vector<1x128x64xbf16> to vector<128x64xbf16>
    %cst_212 = arith.constant dense<0.000000e+00> : vector<40x64xf32>
    %259 = tpu.matmul %256, %258, %cst_212 {dimension_numbers = #tpu.dot_dimension_numbers<[1], [0], [0], [1], [0, 0, 1, 1], [], []>} : vector<40x128xbf16>, vector<128x64xbf16>, vector<40x64xf32> -> vector<40x64xf32>
    %260 = vector.broadcast %255 : vector<1x64xf32> to vector<40x64xf32>
    %261 = arith.addf %259, %260 : vector<40x64xf32>
    %c2_213 = arith.constant 2 : index
    %c0_214 = arith.constant 0 : index
    %c0_215 = arith.constant 0 : index
    %262 = vector.load %arg15[%c2_213, %c0_214, %c0_215] : memref<3x1x64xf32, #tpu.memory_space<vmem>>, vector<1x1x64xf32>
    %263 = vector.shape_cast %262 : vector<1x1x64xf32> to vector<1x64xf32>
    %264 = vector.broadcast %263 : vector<1x64xf32> to vector<40x64xf32>
    %265 = arith.addf %261, %264 : vector<40x64xf32>
    %cst_216 = arith.constant 0.000000e+00 : f32
    %266 = vector.broadcast %cst_216 : f32 to vector<40x64xf32>
    %267 = arith.maximumf %265, %266 : vector<40x64xf32>
    %268 = arith.truncf %267 : vector<40x64xf32> to vector<40x64xbf16>
    %c2_217 = arith.constant 2 : index
    %c0_218 = arith.constant 0 : index
    %c0_219 = arith.constant 0 : index
    %269 = vector.load %arg16[%c2_217, %c0_218, %c0_219] : memref<3x64x128xbf16, #tpu.memory_space<vmem>>, vector<1x64x128xbf16>
    %270 = vector.shape_cast %269 : vector<1x64x128xbf16> to vector<64x128xbf16>
    %cst_220 = arith.constant dense<0.000000e+00> : vector<40x128xf32>
    %271 = tpu.matmul %268, %270, %cst_220 {dimension_numbers = #tpu.dot_dimension_numbers<[1], [0], [0], [1], [0, 0, 1, 1], [], []>} : vector<40x64xbf16>, vector<64x128xbf16>, vector<40x128xf32> -> vector<40x128xf32>
    %c2_221 = arith.constant 2 : index
    %c0_222 = arith.constant 0 : index
    %c0_223 = arith.constant 0 : index
    %272 = vector.load %arg17[%c2_221, %c0_222, %c0_223] : memref<3x1x128xf32, #tpu.memory_space<vmem>>, vector<1x1x128xf32>
    %273 = vector.shape_cast %272 : vector<1x1x128xf32> to vector<1x128xf32>
    %274 = vector.broadcast %273 : vector<1x128xf32> to vector<40x128xf32>
    %275 = arith.addf %271, %274 : vector<40x128xf32>
    %276 = math.tanh %275 : vector<40x128xf32>
    %277 = arith.addf %249, %276 : vector<40x128xf32>
    %c0_224 = arith.constant 0 : index
    %c2_225 = arith.constant 2 : index
    %c40_226 = arith.constant 40 : index
    %c0_227 = arith.constant 0 : index
    %278 = vector.load %arg19[%c0_224, %c2_225, %c40_226, %c0_227] : memref<1x3x80x128xf32, #tpu.memory_space<vmem>>, vector<1x1x40x128xf32>
    %279 = vector.shape_cast %278 : vector<1x1x40x128xf32> to vector<40x128xf32>
    %280 = vector.shape_cast %277 : vector<40x128xf32> to vector<1x1x40x128xf32>
    tpu.vector_store %arg19[%c0_224, %c2_225, %c40_226, %c0_227], %280 {strides = array<i32>} : memref<1x3x80x128xf32, #tpu.memory_space<vmem>>, vector<1x1x40x128xf32>,
    return
  }
  func.func @transform_0(%arg0: i32) -> (i32, i32, i32) {
    %c0_i32 = arith.constant 0 : i32
    %c0_i32_0 = arith.constant 0 : i32
    %c0_i32_1 = arith.constant 0 : i32
    return %arg0, %c0_i32, %c0_i32_0 : i32, i32, i32
  }
  func.func @transform_1(%arg0: i32) -> (i32, i32) {
    %c0_i32 = arith.constant 0 : i32
    %c0_i32_0 = arith.constant 0 : i32
    %c0_i32_1 = arith.constant 0 : i32
    return %c0_i32, %c0_i32_0 : i32, i32
  }
  func.func @transform_2(%arg0: i32) -> (i32, i32) {
    %c0_i32 = arith.constant 0 : i32
    %c0_i32_0 = arith.constant 0 : i32
    %c0_i32_1 = arith.constant 0 : i32
    return %c0_i32, %c0_i32_0 : i32, i32
  }
  func.func @transform_3(%arg0: i32) -> (i32, i32, i32) {
    %c0_i32 = arith.constant 0 : i32
    %c0_i32_0 = arith.constant 0 : i32
    %c0_i32_1 = arith.constant 0 : i32
    %c0_i32_2 = arith.constant 0 : i32
    return %c0_i32, %c0_i32_0, %c0_i32_1 : i32, i32, i32
  }
  func.func @transform_4(%arg0: i32) -> (i32, i32) {
    %c0_i32 = arith.constant 0 : i32
    %c0_i32_0 = arith.constant 0 : i32
    %c0_i32_1 = arith.constant 0 : i32
    return %c0_i32, %c0_i32_0 : i32, i32
  }
  func.func @transform_5(%arg0: i32) -> (i32, i32, i32) {
    %c0_i32 = arith.constant 0 : i32
    %c0_i32_0 = arith.constant 0 : i32
    %c0_i32_1 = arith.constant 0 : i32
    %c0_i32_2 = arith.constant 0 : i32
    return %c0_i32, %c0_i32_0, %c0_i32_1 : i32, i32, i32
  }
  func.func @transform_6(%arg0: i32) -> (i32, i32) {
    %c0_i32 = arith.constant 0 : i32
    %c0_i32_0 = arith.constant 0 : i32
    %c0_i32_1 = arith.constant 0 : i32
    return %c0_i32, %c0_i32_0 : i32, i32
  }
  func.func @transform_7(%arg0: i32) -> (i32, i32, i32) {
    %c0_i32 = arith.constant 0 : i32
    %c0_i32_0 = arith.constant 0 : i32
    %c0_i32_1 = arith.constant 0 : i32
    %c0_i32_2 = arith.constant 0 : i32
    return %c0_i32, %c0_i32_0, %c0_i32_1 : i32, i32, i32
  }
  func.func @transform_8(%arg0: i32) -> (i32, i32, i32) {
    %c0_i32 = arith.constant 0 : i32
    %c0_i32_0 = arith.constant 0 : i32
    %c0_i32_1 = arith.constant 0 : i32
    %c0_i32_2 = arith.constant 0 : i32
    return %c0_i32, %c0_i32_0, %c0_i32_1 : i32, i32, i32
  }
  func.func @transform_9(%arg0: i32) -> (i32, i32, i32) {
    %c0_i32 = arith.constant 0 : i32
    %c0_i32_0 = arith.constant 0 : i32
    %c0_i32_1 = arith.constant 0 : i32
    %c0_i32_2 = arith.constant 0 : i32
    return %c0_i32, %c0_i32_0, %c0_i32_1 : i32, i32, i32
  }
  func.func @transform_10(%arg0: i32) -> (i32, i32) {
    %c0_i32 = arith.constant 0 : i32
    %c0_i32_0 = arith.constant 0 : i32
    %c0_i32_1 = arith.constant 0 : i32
    return %c0_i32, %c0_i32_0 : i32, i32
  }
  func.func @transform_11(%arg0: i32) -> (i32, i32) {
    %c0_i32 = arith.constant 0 : i32
    %c0_i32_0 = arith.constant 0 : i32
    %c0_i32_1 = arith.constant 0 : i32
    return %c0_i32, %c0_i32_0 : i32, i32
  }
  func.func @transform_12(%arg0: i32) -> (i32, i32, i32) {
    %c0_i32 = arith.constant 0 : i32
    %c0_i32_0 = arith.constant 0 : i32
    %c0_i32_1 = arith.constant 0 : i32
    %c0_i32_2 = arith.constant 0 : i32
    return %c0_i32, %c0_i32_0, %c0_i32_1 : i32, i32, i32
  }
  func.func @transform_13(%arg0: i32) -> (i32, i32, i32) {
    %c0_i32 = arith.constant 0 : i32
    %c0_i32_0 = arith.constant 0 : i32
    %c0_i32_1 = arith.constant 0 : i32
    %c0_i32_2 = arith.constant 0 : i32
    return %c0_i32, %c0_i32_0, %c0_i32_1 : i32, i32, i32
  }
  func.func @transform_14(%arg0: i32) -> (i32, i32, i32) {
    %c0_i32 = arith.constant 0 : i32
    %c0_i32_0 = arith.constant 0 : i32
    %c0_i32_1 = arith.constant 0 : i32
    %c0_i32_2 = arith.constant 0 : i32
    return %c0_i32, %c0_i32_0, %c0_i32_1 : i32, i32, i32
  }
  func.func @transform_15(%arg0: i32) -> (i32, i32, i32) {
    %c0_i32 = arith.constant 0 : i32
    %c0_i32_0 = arith.constant 0 : i32
    %c0_i32_1 = arith.constant 0 : i32
    %c0_i32_2 = arith.constant 0 : i32
    return %c0_i32, %c0_i32_0, %c0_i32_1 : i32, i32, i32
  }
  func.func @transform_16(%arg0: i32) -> (i32, i32, i32) {
    %c0_i32 = arith.constant 0 : i32
    %c0_i32_0 = arith.constant 0 : i32
    %c0_i32_1 = arith.constant 0 : i32
    %c0_i32_2 = arith.constant 0 : i32
    return %c0_i32, %c0_i32_0, %c0_i32_1 : i32, i32, i32
  }
  func.func @transform_17(%arg0: i32) -> (i32, i32, i32) {
    %c0_i32 = arith.constant 0 : i32
    %c0_i32_0 = arith.constant 0 : i32
    %c0_i32_1 = arith.constant 0 : i32
    return %arg0, %c0_i32, %c0_i32_0 : i32, i32, i32
  }
  func.func @transform_18(%arg0: i32) -> (i32, i32, i32, i32) {
    %c0_i32 = arith.constant 0 : i32
    %c0_i32_0 = arith.constant 0 : i32
    %c0_i32_1 = arith.constant 0 : i32
    %c0_i32_2 = arith.constant 0 : i32
    return %arg0, %c0_i32, %c0_i32_0, %c0_i32_1 : i32, i32, i32, i32
  }
}

</mosaic_0001>

<llo_original>
// kernel: mesh_rcnn_forward.1
$region0: #{mesh_rcnn_forward.1}
  #allocation0 [shape = 'u32[]', space=smem, size = 0x4, offset = 0x4, fixed_abs, tag = 'smem constant byte address 0x4 - core index']
  #allocation1 [shape = 'u32[144,128]{1,0:T(1,128)}', space=vmem, size = 0x12000, scoped, tag = 'internal scratch']
  %s0 = inlined_call_operand.vmem [shape: f32[1,128,48], index: 0, kind: input, shape index: {}]
  %s1 = inlined_call_operand.vmem [shape: bf16[48,16], index: 1, kind: input, shape index: {}]
  %s2 = inlined_call_operand.vmem [shape: f32[1,16], index: 2, kind: input, shape index: {}]
  %s3 = inlined_call_operand.vmem [shape: bf16[4,16,32], index: 3, kind: input, shape index: {}]
  %s4 = inlined_call_operand.vmem [shape: f32[1,32], index: 4, kind: input, shape index: {}]
  %s5 = inlined_call_operand.vmem [shape: bf16[4,32,64], index: 5, kind: input, shape index: {}]
  %s6 = inlined_call_operand.vmem [shape: f32[1,64], index: 6, kind: input, shape index: {}]
  %s7 = inlined_call_operand.vmem [shape: f32[4,2,8], index: 7, kind: input, shape index: {}]
  %s8 = inlined_call_operand.vmem [shape: f32[2,1,8], index: 8, kind: input, shape index: {}]
  %s9 = inlined_call_operand.vmem [shape: bf16[4,64,512], index: 9, kind: input, shape index: {}]
  %s10 = inlined_call_operand.vmem [shape: f32[1,512], index: 10, kind: input, shape index: {}]
  %s11 = inlined_call_operand.vmem [shape: f32[40,128], index: 11, kind: input, shape index: {}]
  %s12 = inlined_call_operand.vmem [shape: bf16[3,128,64], index: 12, kind: input, shape index: {}]
  %s13 = inlined_call_operand.vmem [shape: bf16[3,64,64], index: 13, kind: input, shape index: {}]
  %s14 = inlined_call_operand.vmem [shape: f32[3,1,64], index: 14, kind: input, shape index: {}]
  %s15 = inlined_call_operand.vmem [shape: bf16[3,64,128], index: 15, kind: input, shape index: {}]
  %s16 = inlined_call_operand.vmem [shape: f32[3,1,128], index: 16, kind: input, shape index: {}]
  %s17 = inlined_call_operand.vmem [shape: f32[1,2,512], index: 17, kind: output, shape index: {0}]
  %s18 = inlined_call_operand.vmem [shape: f32[1,3,80,128], index: 18, kind: output, shape index: {1}]
  %19 = xla_tuple %s17, %s18
  %s20 = sld [smem:[#allocation0]]
  $region86: #{mesh_rcnn_forward.1} parent=0
    _
  %s22 = ssub.s32 1, %s20
  %s23 = scalar_select 0, %s22, %s20
  // Predicated region
  $region2: #{mesh_rcnn_forward.1} parent=0 // pred_check
    _
  $region3: #{mesh_rcnn_forward.1} parent=0 // pred_check_branch
    %25 = sbr.rel (0) target = $region5
  $region4: #{mesh_rcnn_forward.1} parent=0 // pred_region
    _
  $region5: #{mesh_rcnn_forward.1} parent=0 // pred_fallthru
    _
  // Predicated region
  $region6: #{mesh_rcnn_forward.1} parent=0 // pred_check
    _
  $region7: #{mesh_rcnn_forward.1} parent=0 // pred_check_branch
    %27 = sbr.rel (0) target = $region9
  $region8: #{mesh_rcnn_forward.1} parent=0 // pred_region
    _
  $region9: #{mesh_rcnn_forward.1} parent=0 // pred_fallthru
    _
  // Predicated region
  $region10: #{mesh_rcnn_forward.1} parent=0 // pred_check
    _
  $region11: #{mesh_rcnn_forward.1} parent=0 // pred_check_branch
    %29 = sbr.rel (0) target = $region13
  $region12: #{mesh_rcnn_forward.1} parent=0 // pred_region
    _
  $region13: #{mesh_rcnn_forward.1} parent=0 // pred_fallthru
    _
  // Predicated region
  $region14: #{mesh_rcnn_forward.1} parent=0 // pred_check
    _
  $region15: #{mesh_rcnn_forward.1} parent=0 // pred_check_branch
    %31 = sbr.rel (0) target = $region17
  $region16: #{mesh_rcnn_forward.1} parent=0 // pred_region
    _
  $region17: #{mesh_rcnn_forward.1} parent=0 // pred_fallthru
    _
  // Predicated region
  $region18: #{mesh_rcnn_forward.1} parent=0 // pred_check
    _
  $region19: #{mesh_rcnn_forward.1} parent=0 // pred_check_branch
    %33 = sbr.rel (0) target = $region21
  $region20: #{mesh_rcnn_forward.1} parent=0 // pred_region
    _
  $region21: #{mesh_rcnn_forward.1} parent=0 // pred_fallthru
    _
  // Predicated region
  $region22: #{mesh_rcnn_forward.1} parent=0 // pred_check
    _
  $region23: #{mesh_rcnn_forward.1} parent=0 // pred_check_branch
    %35 = sbr.rel (0) target = $region25
  $region24: #{mesh_rcnn_forward.1} parent=0 // pred_region
    _
  $region25: #{mesh_rcnn_forward.1} parent=0 // pred_fallthru
    _
  // Predicated region
  $region26: #{mesh_rcnn_forward.1} parent=0 // pred_check
    _
  $region27: #{mesh_rcnn_forward.1} parent=0 // pred_check_branch
    %37 = sbr.rel (0) target = $region29
  $region28: #{mesh_rcnn_forward.1} parent=0 // pred_region
    _
  $region29: #{mesh_rcnn_forward.1} parent=0 // pred_fallthru
    _
  // Predicated region
  $region30: #{mesh_rcnn_forward.1} parent=0 // pred_check
    _
  $region31: #{mesh_rcnn_forward.1} parent=0 // pred_check_branch
    %39 = sbr.rel (0) target = $region33
  $region32: #{mesh_rcnn_forward.1} parent=0 // pred_region
    _
  $region33: #{mesh_rcnn_forward.1} parent=0 // pred_fallthru
    _
  // Predicated region
  $region34: #{mesh_rcnn_forward.1} parent=0 // pred_check
    _
  $region35: #{mesh_rcnn_forward.1} parent=0 // pred_check_branch
    %41 = sbr.rel (0) target = $region37
  $region36: #{mesh_rcnn_forward.1} parent=0 // pred_region
    _
  $region37: #{mesh_rcnn_forward.1} parent=0 // pred_fallthru
    _
  // Predicated region
  $region38: #{mesh_rcnn_forward.1} parent=0 // pred_check
    _
  $region39: #{mesh_rcnn_forward.1} parent=0 // pred_check_branch
    %43 = sbr.rel (0) target = $region41
  $region40: #{mesh_rcnn_forward.1} parent=0 // pred_region
    _
  $region41: #{mesh_rcnn_forward.1} parent=0 // pred_fallthru
    _
  // Predicated region
  $region42: #{mesh_rcnn_forward.1} parent=0 // pred_check
    _
  $region43: #{mesh_rcnn_forward.1} parent=0 // pred_check_branch
    %45 = sbr.rel (0) target = $region45
  $region44: #{mesh_rcnn_forward.1} parent=0 // pred_region
    _
  $region45: #{mesh_rcnn_forward.1} parent=0 // pred_fallthru
    _
  // Predicated region
  $region46: #{mesh_rcnn_forward.1} parent=0 // pred_check
    _
  $region47: #{mesh_rcnn_forward.1} parent=0 // pred_check_branch
    %47 = sbr.rel (0) target = $region49
  $region48: #{mesh_rcnn_forward.1} parent=0 // pred_region
    _
  $region49: #{mesh_rcnn_forward.1} parent=0 // pred_fallthru
    _
  // Predicated region
  $region50: #{mesh_rcnn_forward.1} parent=0 // pred_check
    _
  $region51: #{mesh_rcnn_forward.1} parent=0 // pred_check_branch
    %49 = sbr.rel (0) target = $region53
  $region52: #{mesh_rcnn_forward.1} parent=0 // pred_region
    _
  $region53: #{mesh_rcnn_forward.1} parent=0 // pred_fallthru
    _
  // Predicated region
  $region54: #{mesh_rcnn_forward.1} parent=0 // pred_check
    _
  $region55: #{mesh_rcnn_forward.1} parent=0 // pred_check_branch
    %51 = sbr.rel (0) target = $region57
  $region56: #{mesh_rcnn_forward.1} parent=0 // pred_region
    _
  $region57: #{mesh_rcnn_forward.1} parent=0 // pred_fallthru
    _
  // Predicated region
  $region58: #{mesh_rcnn_forward.1} parent=0 // pred_check
    _
  $region59: #{mesh_rcnn_forward.1} parent=0 // pred_check_branch
    %53 = sbr.rel (0) target = $region61
  $region60: #{mesh_rcnn_forward.1} parent=0 // pred_region
    _
  $region61: #{mesh_rcnn_forward.1} parent=0 // pred_fallthru
    _
  // Predicated region
  $region62: #{mesh_rcnn_forward.1} parent=0 // pred_check
    _
  $region63: #{mesh_rcnn_forward.1} parent=0 // pred_check_branch
    %55 = sbr.rel (0) target = $region65
  $region64: #{mesh_rcnn_forward.1} parent=0 // pred_region
    _
  $region65: #{mesh_rcnn_forward.1} parent=0 // pred_fallthru
    _
  // Predicated region
  $region66: #{mesh_rcnn_forward.1} parent=0 // pred_check
    _
  $region67: #{mesh_rcnn_forward.1} parent=0 // pred_check_branch
    %57 = sbr.rel (0) target = $region69
  $region68: #{mesh_rcnn_forward.1} parent=0 // pred_region
    _
  $region69: #{mesh_rcnn_forward.1} parent=0 // pred_fallthru
    _
  %v59 = vld [vmem:[%s0] sm:$0xff]
  %v60 = vld [vmem:[%s0 + $0x8] sm:$0xff]
  %v61 = vld [vmem:[%s0 + $0x10] sm:$0xff]
  %v62 = vld [vmem:[%s0 + $0x18] sm:$0xff]
  %v63 = vld [vmem:[%s0 + $0x20] sm:$0xff]
  %v64 = vld [vmem:[%s0 + $0x28] sm:$0xff]
  %v65 = vld [vmem:[%s0 + $0x30] sm:$0xff]
  %v66 = vld [vmem:[%s0 + $0x38] sm:$0xff]
  %v67 = vld [vmem:[%s0 + $0x40] sm:$0xff]
  %v68 = vld [vmem:[%s0 + $0x48] sm:$0xff]
  %v69 = vld [vmem:[%s0 + $0x50] sm:$0xff]
  %v70 = vld [vmem:[%s0 + $0x58] sm:$0xff]
  %v71 = vld [vmem:[%s0 + $0x60] sm:$0xff]
  %v72 = vld [vmem:[%s0 + $0x68] sm:$0xff]
  %v73 = vld [vmem:[%s0 + $0x70] sm:$0xff]
  %v74 = vld [vmem:[%s0 + $0x78] sm:$0xff]
  %v75 = vpack.c.bf16 %v60, %v59
  %v76 = vpack.c.bf16 %v62, %v61
  %v77 = vpack.c.bf16 %v64, %v63
  %v78 = vpack.c.bf16 %v66, %v65
  %v79 = vpack.c.bf16 %v68, %v67
  %v80 = vpack.c.bf16 %v70, %v69
  %v81 = vpack.c.bf16 %v72, %v71
  %v82 = vpack.c.bf16 %v74, %v73
  %v83 = vld [vmem:[%s1] sm:$0xf]
  %v84 = vld [vmem:[%s1 + $0x4] sm:$0xf]
  %v85 = vld [vmem:[%s1 + $0x8] sm:$0xf]
  %v86 = vld [vmem:[%s1 + $0xc] sm:$0xf]
  %v87 = vld [vmem:[%s1 + $0x10] sm:$0xf]
  %v88 = vld [vmem:[%s1 + $0x14] sm:$0xf]
  %v89 = vld [vmem:[%s2] sm:$0x1]
  %v91 = vlaneseq
  %v92 = vshrl.u32 %v91, 7
  %v93 = vsub.s32 0, %v92
  %v94 = vrot.slane %v89, %v93
  %v102 = vunpack.c.l.b16 %v83
  %v103 = vunpack.c.l.b16 %v84
  %v104 = vunpack.c.l.b16 %v85
  %v105 = vunpack.c.l.b16 %v86
  %v106 = vunpack.c.l.b16 %v87
  %v107 = vunpack.c.l.b16 %v88
  %v108 = vpack.c.b16 %v103, %v102
  %v109 = vpack.c.b16 %v105, %v104
  %v110 = vpack.c.b16 %v107, %v106
  %vm114 = vcmask 392192
  %v116 = vsel %vm114, %v75, 0
  %v119 = vsel %vm114, %v76, 0
  %v122 = vsel %vm114, %v77, 0
  %v125 = vsel %vm114, %v78, 0
  %v128 = vsel %vm114, %v79, 0
  %v131 = vsel %vm114, %v80, 0
  %v134 = vsel %vm114, %v81, 0
  %v137 = vsel %vm114, %v82, 0
  %139 = vmatprep.subr.bf16.mxu0 0
  %140 = vmatpush1.bf16.msra.mxu0 0
  %141 = vmatprep.subr.bf16.mxu0 0
  %142 = vmatpush1.bf16.msra.mxu0 0
  %143 = vmatprep.subr.bf16.mxu0 0
  %144 = vmatpush1.bf16.msra.mxu0 0
  %145 = vmatprep.subr.bf16.mxu0 0
  %146 = vmatpush1.bf16.msra.mxu0 0
  %147 = vmatprep.subr.bf16.mxu0 0
  %148 = vmatpush1.bf16.msra.mxu0 0
  %149 = vmatprep.subr.bf16.mxu0 0
  %150 = vmatpush1.bf16.msra.mxu0 %v110
  %151 = vmatprep.subr.bf16.mxu0 0
  %152 = vmatpush1.bf16.msra.mxu0 %v109
  %153 = vmatprep.subr.bf16.mxu0 0
  %154 = vmatpush1.bf16.msra.mxu0 %v108
  %155 = vmatprep.subr.bf16.mxu0 0
  %156 = vmatpush2.bf16.msra.mxu0 0
  %157 = vmatprep.subr.bf16.mxu0 0
  %158 = vmatpush2.bf16.msra.mxu0 0
  %159 = vmatprep.subr.bf16.mxu0 0
  %160 = vmatpush2.bf16.msra.mxu0 0
  %161 = vmatprep.subr.bf16.mxu0 0
  %162 = vmatpush2.bf16.msra.mxu0 0
  %163 = vmatprep.subr.bf16.mxu0 0
  %164 = vmatpush2.bf16.msra.mxu0 0
  %165 = vmatprep.subr.bf16.mxu0 0
  %166 = vmatpush2.bf16.msra.mxu0 0
  %167 = vmatprep.subr.bf16.mxu0 0
  %168 = vmatpush2.bf16.msra.mxu0 0
  %169 = vmatprep.subr.bf16.mxu0 0
  %170 = vmatpush2.bf16.msra.mxu0 0
  %171 = vmatprep.mubr.bf16.mxu0 0
  %172 = vmatmul.mubr.bf16.gmra.mxu0 %v116
  %v173 = vpop.f32.mrf.mxu0
  %v174 = vadd.f32 %v94, %v173
  %v175 = vpop.f32.mrf.mxu0
  %v176 = vpop.f32.mrf.mxu0
  %v177 = vadd.f32 %v94, %v176
  %v178 = vpop.f32.mrf.mxu0
  %179 = vmatprep.mubr.bf16.mxu0 0
  %180 = vmatmul.mubr.bf16.gmra.mxu0 %v119
  %v181 = vpop.f32.mrf.mxu0
  %v182 = vadd.f32 %v94, %v181
  %v183 = vpop.f32.mrf.mxu0
  %v184 = vpop.f32.mrf.mxu0
  %v185 = vadd.f32 %v94, %v184
  %v186 = vpop.f32.mrf.mxu0
  %187 = vmatprep.mubr.bf16.mxu0 0
  %188 = vmatmul.mubr.bf16.gmra.mxu0 %v122
  %v189 = vpop.f32.mrf.mxu0
  %v190 = vadd.f32 %v94, %v189
  %v191 = vpop.f32.mrf.mxu0
  %v192 = vpop.f32.mrf.mxu0
  %v193 = vadd.f32 %v94, %v192
  %v194 = vpop.f32.mrf.mxu0
  %195 = vmatprep.mubr.bf16.mxu0 0
  %196 = vmatmul.mubr.bf16.gmra.mxu0 %v125
  %v197 = vpop.f32.mrf.mxu0
  %v198 = vadd.f32 %v94, %v197
  %v199 = vpop.f32.mrf.mxu0
  %v200 = vpop.f32.mrf.mxu0
  %v201 = vadd.f32 %v94, %v200
  %v202 = vpop.f32.mrf.mxu0
  %203 = vmatprep.mubr.bf16.mxu0 0
  %204 = vmatmul.mubr.bf16.gmra.mxu0 %v128
  %v205 = vpop.f32.mrf.mxu0
  %v206 = vadd.f32 %v94, %v205
  %v207 = vpop.f32.mrf.mxu0
  %v208 = vpop.f32.mrf.mxu0
  %v209 = vadd.f32 %v94, %v208
  %v210 = vpop.f32.mrf.mxu0
  %211 = vmatprep.mubr.bf16.mxu0 0
  %212 = vmatmul.mubr.bf16.gmra.mxu0 %v131
  %v213 = vpop.f32.mrf.mxu0
  %v214 = vadd.f32 %v94, %v213
  %v215 = vpop.f32.mrf.mxu0
  %v216 = vpop.f32.mrf.mxu0
  %v217 = vadd.f32 %v94, %v216
  %v218 = vpop.f32.mrf.mxu0
  %219 = vmatprep.mubr.bf16.mxu0 0
  %220 = vmatmul.mubr.bf16.gmra.mxu0 %v134
  %v221 = vpop.f32.mrf.mxu0
  %v222 = vadd.f32 %v94, %v221
  %v223 = vpop.f32.mrf.mxu0
  %v224 = vpop.f32.mrf.mxu0
  %v225 = vadd.f32 %v94, %v224
  %v226 = vpop.f32.mrf.mxu0
  %227 = vmatprep.mubr.bf16.mxu0 0
  %228 = vmatmul.mubr.bf16.gmra.mxu0 %v137
  %v229 = vpop.f32.mrf.mxu0
  %v230 = vadd.f32 %v94, %v229
  %v231 = vpop.f32.mrf.mxu0
  %v232 = vpop.f32.mrf.mxu0
  %v233 = vadd.f32 %v94, %v232
  %v234 = vpop.f32.mrf.mxu0
  %235 = vdwg.mxu0
  %v236 = vmax.f32 %v174, 0.0
  %v237 = vmax.f32 %v177, 0.0
  %v238 = vmax.f32 %v182, 0.0
  %v239 = vmax.f32 %v185, 0.0
  %v240 = vmax.f32 %v190, 0.0
  %v241 = vmax.f32 %v193, 0.0
  %v242 = vmax.f32 %v198, 0.0
  %v243 = vmax.f32 %v201, 0.0
  %v244 = vmax.f32 %v206, 0.0
  %v245 = vmax.f32 %v209, 0.0
  %v246 = vmax.f32 %v214, 0.0
  %v247 = vmax.f32 %v217, 0.0
  %v248 = vmax.f32 %v222, 0.0
  %v249 = vmax.f32 %v225, 0.0
  %v250 = vmax.f32 %v230, 0.0
  %v251 = vmax.f32 %v233, 0.0
  %v252 = vpack.c.bf16 %v237, %v236
  %v253 = vpack.c.bf16 %v239, %v238
  %v254 = vld [vmem:[%s3] sm:$0xf]
  %v255 = vld [vmem:[%s3 + $0x4] sm:$0xf]
  %v256 = vpack.c.bf16 %v241, %v240
  %v257 = vpack.c.bf16 %v243, %v242
  %s258 = scalar_lea.vmem %s3, 8
  %v259 = vld [vmem:[%s258] sm:$0xf]
  %v260 = vld [vmem:[%s258 + $0x4] sm:$0xf]
  %v263 = vunpack.c.l.b16 %v259
  %v264 = vunpack.c.l.b16 %v260
  %v265 = vpack.c.b16 %v264, %v263
  %vm267 = vcmask 130048
  %v269 = vsel %vm267, %v256, 0
  %v272 = vsel %vm267, %v257, 0
  %274 = vmatprep.subr.bf16.mxu0 0
  %275 = vmatpush1.bf16.msra.mxu0 0
  %276 = vmatprep.subr.bf16.mxu0 0
  %277 = vmatpush1.bf16.msra.mxu0 0
  %278 = vmatprep.subr.bf16.mxu0 0
  %279 = vmatpush1.bf16.msra.mxu0 0
  %280 = vmatprep.subr.bf16.mxu0 0
  %281 = vmatpush1.bf16.msra.mxu0 0
  %282 = vmatprep.subr.bf16.mxu0 0
  %283 = vmatpush1.bf16.msra.mxu0 0
  %284 = vmatprep.subr.bf16.mxu0 0
  %285 = vmatpush1.bf16.msra.mxu0 0
  %286 = vmatprep.subr.bf16.mxu0 0
  %287 = vmatpush1.bf16.msra.mxu0 0
  %288 = vmatprep.subr.bf16.mxu0 0
  %289 = vmatpush1.bf16.msra.mxu0 %v265
  %290 = vmatprep.subr.bf16.mxu0 0
  %291 = vmatpush2.bf16.msra.mxu0 0
  %292 = vmatprep.subr.bf16.mxu0 0
  %293 = vmatpush2.bf16.msra.mxu0 0
  %294 = vmatprep.subr.bf16.mxu0 0
  %295 = vmatpush2.bf16.msra.mxu0 0
  %296 = vmatprep.subr.bf16.mxu0 0
  %297 = vmatpush2.bf16.msra.mxu0 0
  %298 = vmatprep.subr.bf16.mxu0 0
  %299 = vmatpush2.bf16.msra.mxu0 0
  %300 = vmatprep.subr.bf16.mxu0 0
  %301 = vmatpush2.bf16.msra.mxu0 0
  %302 = vmatprep.subr.bf16.mxu0 0
  %303 = vmatpush2.bf16.msra.mxu0 0
  %304 = vmatprep.subr.bf16.mxu0 0
  %305 = vmatpush2.bf16.msra.mxu0 0
  %306 = vmatprep.mubr.bf16.mxu0 0
  %307 = vmatmul.mubr.bf16.gmra.mxu0 %v269
  %v308 = vpop.f32.mrf.mxu0
  %v309 = vadd.f32 0.0, %v308
  %v310 = vpop.f32.mrf.mxu0
  %v311 = vpop.f32.mrf.mxu0
  %v312 = vadd.f32 0.0, %v311
  %v313 = vpop.f32.mrf.mxu0
  %314 = vmatprep.mubr.bf16.mxu0 0
  %315 = vmatmul.mubr.bf16.gmra.mxu0 %v272
  %v316 = vpop.f32.mrf.mxu0
  %v317 = vadd.f32 0.0, %v316
  %v318 = vpop.f32.mrf.mxu0
  %v319 = vpop.f32.mrf.mxu0
  %v320 = vadd.f32 0.0, %v319
  %v321 = vpop.f32.mrf.mxu0
  %322 = vdwg.mxu0
  %v325 = vunpack.c.l.b16 %v254
  %v326 = vunpack.c.l.b16 %v255
  %v327 = vpack.c.b16 %v326, %v325
  %v330 = vsel %vm267, %v252, 0
  %v333 = vsel %vm267, %v253, 0
  %335 = vmatprep.subr.bf16.mxu0 0
  %336 = vmatpush1.bf16.msra.mxu0 0
  %337 = vmatprep.subr.bf16.mxu0 0
  %338 = vmatpush1.bf16.msra.mxu0 0
  %339 = vmatprep.subr.bf16.mxu0 0
  %340 = vmatpush1.bf16.msra.mxu0 0
  %341 = vmatprep.subr.bf16.mxu0 0
  %342 = vmatpush1.bf16.msra.mxu0 0
  %343 = vmatprep.subr.bf16.mxu0 0
  %344 = vmatpush1.bf16.msra.mxu0 0
  %345 = vmatprep.subr.bf16.mxu0 0
  %346 = vmatpush1.bf16.msra.mxu0 0
  %347 = vmatprep.subr.bf16.mxu0 0
  %348 = vmatpush1.bf16.msra.mxu0 0
  %349 = vmatprep.subr.bf16.mxu0 0
  %350 = vmatpush1.bf16.msra.mxu0 %v327
  %351 = vmatprep.subr.bf16.mxu0 0
  %352 = vmatpush2.bf16.msra.mxu0 0
  %353 = vmatprep.subr.bf16.mxu0 0
  %354 = vmatpush2.bf16.msra.mxu0 0
  %355 = vmatprep.subr.bf16.mxu0 0
  %356 = vmatpush2.bf16.msra.mxu0 0
  %357 = vmatprep.subr.bf16.mxu0 0
  %358 = vmatpush2.bf16.msra.mxu0 0
  %359 = vmatprep.subr.bf16.mxu0 0
  %360 = vmatpush2.bf16.msra.mxu0 0
  %361 = vmatprep.subr.bf16.mxu0 0
  %362 = vmatpush2.bf16.msra.mxu0 0
  %363 = vmatprep.subr.bf16.mxu0 0
  %364 = vmatpush2.bf16.msra.mxu0 0
  %365 = vmatprep.subr.bf16.mxu0 0
  %366 = vmatpush2.bf16.msra.mxu0 0
  %367 = vmatprep.mubr.bf16.mxu0 0
  %368 = vmatmul.mubr.bf16.gmra.mxu0 %v330
  %v369 = vpop.f32.mrf.mxu0
  %v370 = vadd.f32 %v309, %v369
  %v371 = vpop.f32.mrf.mxu0
  %v372 = vpop.f32.mrf.mxu0
  %v373 = vadd.f32 %v312, %v372
  %v374 = vpop.f32.mrf.mxu0
  %375 = vmatprep.mubr.bf16.mxu0 0
  %376 = vmatmul.mubr.bf16.gmra.mxu0 %v333
  %v377 = vpop.f32.mrf.mxu0
  %v378 = vadd.f32 %v317, %v377
  %v379 = vpop.f32.mrf.mxu0
  %v380 = vpop.f32.mrf.mxu0
  %v381 = vadd.f32 %v320, %v380
  %v382 = vpop.f32.mrf.mxu0
  %383 = vdwg.mxu0
  %v384 = vpack.c.bf16 %v245, %v244
  %v385 = vpack.c.bf16 %v247, %v246
  %s386 = scalar_lea.vmem %s3, 16
  %v387 = vld [vmem:[%s386] sm:$0xf]
  %v388 = vld [vmem:[%s386 + $0x4] sm:$0xf]
  %v391 = vunpack.c.l.b16 %v387
  %v392 = vunpack.c.l.b16 %v388
  %v393 = vpack.c.b16 %v392, %v391
  %v396 = vsel %vm267, %v384, 0
  %v399 = vsel %vm267, %v385, 0
  %401 = vmatprep.subr.bf16.mxu0 0
  %402 = vmatpush1.bf16.msra.mxu0 0
  %403 = vmatprep.subr.bf16.mxu0 0
  %404 = vmatpush1.bf16.msra.mxu0 0
  %405 = vmatprep.subr.bf16.mxu0 0
  %406 = vmatpush1.bf16.msra.mxu0 0
  %407 = vmatprep.subr.bf16.mxu0 0
  %408 = vmatpush1.bf16.msra.mxu0 0
  %409 = vmatprep.subr.bf16.mxu0 0
  %410 = vmatpush1.bf16.msra.mxu0 0
  %411 = vmatprep.subr.bf16.mxu0 0
  %412 = vmatpush1.bf16.msra.mxu0 0
  %413 = vmatprep.subr.bf16.mxu0 0
  %414 = vmatpush1.bf16.msra.mxu0 0
  %415 = vmatprep.subr.bf16.mxu0 0
  %416 = vmatpush1.bf16.msra.mxu0 %v393
  %417 = vmatprep.subr.bf16.mxu0 0
  %418 = vmatpush2.bf16.msra.mxu0 0
  %419 = vmatprep.subr.bf16.mxu0 0
  %420 = vmatpush2.bf16.msra.mxu0 0
  %421 = vmatprep.subr.bf16.mxu0 0
  %422 = vmatpush2.bf16.msra.mxu0 0
  %423 = vmatprep.subr.bf16.mxu0 0
  %424 = vmatpush2.bf16.msra.mxu0 0
  %425 = vmatprep.subr.bf16.mxu0 0
  %426 = vmatpush2.bf16.msra.mxu0 0
  %427 = vmatprep.subr.bf16.mxu0 0
  %428 = vmatpush2.bf16.msra.mxu0 0
  %429 = vmatprep.subr.bf16.mxu0 0
  %430 = vmatpush2.bf16.msra.mxu0 0
  %431 = vmatprep.subr.bf16.mxu0 0
  %432 = vmatpush2.bf16.msra.mxu0 0
  %433 = vmatprep.mubr.bf16.mxu0 0
  %434 = vmatmul.mubr.bf16.gmra.mxu0 %v396
  %v435 = vpop.f32.mrf.mxu0
  %v436 = vadd.f32 0.0, %v435
  %v437 = vpop.f32.mrf.mxu0
  %v438 = vpop.f32.mrf.mxu0
  %v439 = vadd.f32 0.0, %v438
  %v440 = vpop.f32.mrf.mxu0
  %441 = vmatprep.mubr.bf16.mxu0 0
  %442 = vmatmul.mubr.bf16.gmra.mxu0 %v399
  %v443 = vpop.f32.mrf.mxu0
  %v444 = vadd.f32 0.0, %v443
  %v445 = vpop.f32.mrf.mxu0
  %v446 = vpop.f32.mrf.mxu0
  %v447 = vadd.f32 0.0, %v446
  %v448 = vpop.f32.mrf.mxu0
  %449 = vdwg.mxu0
  %v450 = vadd.f32 %v370, %v436
  %v451 = vadd.f32 %v373, %v439
  %v452 = vadd.f32 %v378, %v444
  %v453 = vadd.f32 %v381, %v447
  %v454 = vpack.c.bf16 %v249, %v248
  %v455 = vpack.c.bf16 %v251, %v250
  %s456 = scalar_lea.vmem %s3, 24
  %v457 = vld [vmem:[%s456] sm:$0xf]
  %v458 = vld [vmem:[%s456 + $0x4] sm:$0xf]
  %v461 = vunpack.c.l.b16 %v457
  %v462 = vunpack.c.l.b16 %v458
  %v463 = vpack.c.b16 %v462, %v461
  %v466 = vsel %vm267, %v454, 0
  %v469 = vsel %vm267, %v455, 0
  %471 = vmatprep.subr.bf16.mxu0 0
  %472 = vmatpush1.bf16.msra.mxu0 0
  %473 = vmatprep.subr.bf16.mxu0 0
  %474 = vmatpush1.bf16.msra.mxu0 0
  %475 = vmatprep.subr.bf16.mxu0 0
  %476 = vmatpush1.bf16.msra.mxu0 0
  %477 = vmatprep.subr.bf16.mxu0 0
  %478 = vmatpush1.bf16.msra.mxu0 0
  %479 = vmatprep.subr.bf16.mxu0 0
  %480 = vmatpush1.bf16.msra.mxu0 0
  %481 = vmatprep.subr.bf16.mxu0 0
  %482 = vmatpush1.bf16.msra.mxu0 0
  %483 = vmatprep.subr.bf16.mxu0 0
  %484 = vmatpush1.bf16.msra.mxu0 0
  %485 = vmatprep.subr.bf16.mxu0 0
  %486 = vmatpush1.bf16.msra.mxu0 %v463
  %487 = vmatprep.subr.bf16.mxu0 0
  %488 = vmatpush2.bf16.msra.mxu0 0
  %489 = vmatprep.subr.bf16.mxu0 0
  %490 = vmatpush2.bf16.msra.mxu0 0
  %491 = vmatprep.subr.bf16.mxu0 0
  %492 = vmatpush2.bf16.msra.mxu0 0
  %493 = vmatprep.subr.bf16.mxu0 0
  %494 = vmatpush2.bf16.msra.mxu0 0
  %495 = vmatprep.subr.bf16.mxu0 0
  %496 = vmatpush2.bf16.msra.mxu0 0
  %497 = vmatprep.subr.bf16.mxu0 0
  %498 = vmatpush2.bf16.msra.mxu0 0
  %499 = vmatprep.subr.bf16.mxu0 0
  %500 = vmatpush2.bf16.msra.mxu0 0
  %501 = vmatprep.subr.bf16.mxu0 0
  %502 = vmatpush2.bf16.msra.mxu0 0
  %503 = vmatprep.mubr.bf16.mxu0 0
  %504 = vmatmul.mubr.bf16.gmra.mxu0 %v466
  %v505 = vpop.f32.mrf.mxu0
  %v506 = vadd.f32 0.0, %v505
  %v507 = vpop.f32.mrf.mxu0
  %v508 = vpop.f32.mrf.mxu0
  %v509 = vadd.f32 0.0, %v508
  %v510 = vpop.f32.mrf.mxu0
  %511 = vmatprep.mubr.bf16.mxu0 0
  %512 = vmatmul.mubr.bf16.gmra.mxu0 %v469
  %v513 = vpop.f32.mrf.mxu0
  %v514 = vadd.f32 0.0, %v513
  %v515 = vpop.f32.mrf.mxu0
  %v516 = vpop.f32.mrf.mxu0
  %v517 = vadd.f32 0.0, %v516
  %v518 = vpop.f32.mrf.mxu0
  %519 = vdwg.mxu0
  %v520 = vadd.f32 %v450, %v506
  %v521 = vadd.f32 %v451, %v509
  %v522 = vadd.f32 %v452, %v514
  %v523 = vadd.f32 %v453, %v517
  %v524 = vld [vmem:[%s4] sm:$0x1]
  %v526 = vlaneseq
  %v527 = vshrl.u32 %v526, 7
  %v528 = vsub.s32 0, %v527
  %v529 = vrot.slane %v524, %v528
  %v531 = vadd.f32 %v520, %v529
  %v532 = vadd.f32 %v521, %v529
  %v533 = vadd.f32 %v522, %v529
  %v534 = vadd.f32 %v523, %v529
  %v535 = vmax.f32 %v531, 0.0
  %v536 = vmax.f32 %v532, 0.0
  %v537 = vmax.f32 %v533, 0.0
  %v538 = vmax.f32 %v534, 0.0
  %v539 = vpack.c.bf16 %v535, %v535
  %v540 = vld [vmem:[%s5] sm:$0xf]
  %v541 = vld [vmem:[%s5 + $0x4] sm:$0xf]
  %v542 = vld [vmem:[%s5 + $0x8] sm:$0xf]
  %v543 = vld [vmem:[%s5 + $0xc] sm:$0xf]
  %v544 = vpack.c.bf16 %v536, %v536
  %s545 = scalar_lea.vmem %s5, 16
  %v546 = vld [vmem:[%s545] sm:$0xf]
  %v547 = vld [vmem:[%s545 + $0x4] sm:$0xf]
  %v548 = vld [vmem:[%s545 + $0x8] sm:$0xf]
  %v549 = vld [vmem:[%s545 + $0xc] sm:$0xf]
  %v554 = vunpack.c.l.b16 %v546
  %v555 = vunpack.c.l.b16 %v547
  %v556 = vunpack.c.l.b16 %v548
  %v557 = vunpack.c.l.b16 %v549
  %v558 = vpack.c.b16 %v555, %v554
  %v559 = vpack.c.b16 %v557, %v556
  %vm562 = vcmask 261120
  %v564 = vsel %vm562, %v544, 0
  %566 = vmatprep.subr.bf16.mxu0 0
  %567 = vmatpush1.bf16.msra.mxu0 0
  %568 = vmatprep.subr.bf16.mxu0 0
  %569 = vmatpush1.bf16.msra.mxu0 0
  %570 = vmatprep.subr.bf16.mxu0 0
  %571 = vmatpush1.bf16.msra.mxu0 0
  %572 = vmatprep.subr.bf16.mxu0 0
  %573 = vmatpush1.bf16.msra.mxu0 0
  %574 = vmatprep.subr.bf16.mxu0 0
  %575 = vmatpush1.bf16.msra.mxu0 0
  %576 = vmatprep.subr.bf16.mxu0 0
  %577 = vmatpush1.bf16.msra.mxu0 0
  %578 = vmatprep.subr.bf16.mxu0 0
  %579 = vmatpush1.bf16.msra.mxu0 %v559
  %580 = vmatprep.subr.bf16.mxu0 0
  %581 = vmatpush1.bf16.msra.mxu0 %v558
  %582 = vmatprep.subr.bf16.mxu0 0
  %583 = vmatpush2.bf16.msra.mxu0 0
  %584 = vmatprep.subr.bf16.mxu0 0
  %585 = vmatpush2.bf16.msra.mxu0 0
  %586 = vmatprep.subr.bf16.mxu0 0
  %587 = vmatpush2.bf16.msra.mxu0 0
  %588 = vmatprep.subr.bf16.mxu0 0
  %589 = vmatpush2.bf16.msra.mxu0 0
  %590 = vmatprep.subr.bf16.mxu0 0
  %591 = vmatpush2.bf16.msra.mxu0 0
  %592 = vmatprep.subr.bf16.mxu0 0
  %593 = vmatpush2.bf16.msra.mxu0 0
  %594 = vmatprep.subr.bf16.mxu0 0
  %595 = vmatpush2.bf16.msra.mxu0 0
  %596 = vmatprep.subr.bf16.mxu0 0
  %597 = vmatpush2.bf16.msra.mxu0 0
  %598 = vmatprep.mubr.bf16.mxu0 0
  %599 = vmatmul.mubr.bf16.gmra.mxu0 %v564
  %v600 = vpop.f32.mrf.mxu0
  %v601 = vadd.f32 0.0, %v600
  %v602 = vpop.f32.mrf.mxu0
  %v603 = vpop.f32.mrf.mxu0
  %v604 = vpop.f32.mrf.mxu0
  %605 = vdwg.mxu0
  %v610 = vunpack.c.l.b16 %v540
  %v611 = vunpack.c.l.b16 %v541
  %v612 = vunpack.c.l.b16 %v542
  %v613 = vunpack.c.l.b16 %v543
  %v614 = vpack.c.b16 %v611, %v610
  %v615 = vpack.c.b16 %v613, %v612
  %v619 = vsel %vm562, %v539, 0
  %621 = vmatprep.subr.bf16.mxu0 0
  %622 = vmatpush1.bf16.msra.mxu0 0
  %623 = vmatprep.subr.bf16.mxu0 0
  %624 = vmatpush1.bf16.msra.mxu0 0
  %625 = vmatprep.subr.bf16.mxu0 0
  %626 = vmatpush1.bf16.msra.mxu0 0
  %627 = vmatprep.subr.bf16.mxu0 0
  %628 = vmatpush1.bf16.msra.mxu0 0
  %629 = vmatprep.subr.bf16.mxu0 0
  %630 = vmatpush1.bf16.msra.mxu0 0
  %631 = vmatprep.subr.bf16.mxu0 0
  %632 = vmatpush1.bf16.msra.mxu0 0
  %633 = vmatprep.subr.bf16.mxu0 0
  %634 = vmatpush1.bf16.msra.mxu0 %v615
  %635 = vmatprep.subr.bf16.mxu0 0
  %636 = vmatpush1.bf16.msra.mxu0 %v614
  %637 = vmatprep.subr.bf16.mxu0 0
  %638 = vmatpush2.bf16.msra.mxu0 0
  %639 = vmatprep.subr.bf16.mxu0 0
  %640 = vmatpush2.bf16.msra.mxu0 0
  %641 = vmatprep.subr.bf16.mxu0 0
  %642 = vmatpush2.bf16.msra.mxu0 0
  %643 = vmatprep.subr.bf16.mxu0 0
  %644 = vmatpush2.bf16.msra.mxu0 0
  %645 = vmatprep.subr.bf16.mxu0 0
  %646 = vmatpush2.bf16.msra.mxu0 0
  %647 = vmatprep.subr.bf16.mxu0 0
  %648 = vmatpush2.bf16.msra.mxu0 0
  %649 = vmatprep.subr.bf16.mxu0 0
  %650 = vmatpush2.bf16.msra.mxu0 0
  %651 = vmatprep.subr.bf16.mxu0 0
  %652 = vmatpush2.bf16.msra.mxu0 0
  %653 = vmatprep.mubr.bf16.mxu0 0
  %654 = vmatmul.mubr.bf16.gmra.mxu0 %v619
  %v655 = vpop.f32.mrf.mxu0
  %v656 = vadd.f32 %v601, %v655
  %v657 = vpop.f32.mrf.mxu0
  %v658 = vpop.f32.mrf.mxu0
  %v659 = vpop.f32.mrf.mxu0
  %660 = vdwg.mxu0
  %v661 = vpack.c.bf16 %v537, %v537
  %s662 = scalar_lea.vmem %s5, 32
  %v663 = vld [vmem:[%s662] sm:$0xf]
  %v664 = vld [vmem:[%s662 + $0x4] sm:$0xf]
  %v665 = vld [vmem:[%s662 + $0x8] sm:$0xf]
  %v666 = vld [vmem:[%s662 + $0xc] sm:$0xf]
  %v671 = vunpack.c.l.b16 %v663
  %v672 = vunpack.c.l.b16 %v664
  %v673 = vunpack.c.l.b16 %v665
  %v674 = vunpack.c.l.b16 %v666
  %v675 = vpack.c.b16 %v672, %v671
  %v676 = vpack.c.b16 %v674, %v673
  %v680 = vsel %vm562, %v661, 0
  %682 = vmatprep.subr.bf16.mxu0 0
  %683 = vmatpush1.bf16.msra.mxu0 0
  %684 = vmatprep.subr.bf16.mxu0 0
  %685 = vmatpush1.bf16.msra.mxu0 0
  %686 = vmatprep.subr.bf16.mxu0 0
  %687 = vmatpush1.bf16.msra.mxu0 0
  %688 = vmatprep.subr.bf16.mxu0 0
  %689 = vmatpush1.bf16.msra.mxu0 0
  %690 = vmatprep.subr.bf16.mxu0 0
  %691 = vmatpush1.bf16.msra.mxu0 0
  %692 = vmatprep.subr.bf16.mxu0 0
  %693 = vmatpush1.bf16.msra.mxu0 0
  %694 = vmatprep.subr.bf16.mxu0 0
  %695 = vmatpush1.bf16.msra.mxu0 %v676
  %696 = vmatprep.subr.bf16.mxu0 0
  %697 = vmatpush1.bf16.msra.mxu0 %v675
  %698 = vmatprep.subr.bf16.mxu0 0
  %699 = vmatpush2.bf16.msra.mxu0 0
  %700 = vmatprep.subr.bf16.mxu0 0
  %701 = vmatpush2.bf16.msra.mxu0 0
  %702 = vmatprep.subr.bf16.mxu0 0
  %703 = vmatpush2.bf16.msra.mxu0 0
  %704 = vmatprep.subr.bf16.mxu0 0
  %705 = vmatpush2.bf16.msra.mxu0 0
  %706 = vmatprep.subr.bf16.mxu0 0
  %707 = vmatpush2.bf16.msra.mxu0 0
  %708 = vmatprep.subr.bf16.mxu0 0
  %709 = vmatpush2.bf16.msra.mxu0 0
  %710 = vmatprep.subr.bf16.mxu0 0
  %711 = vmatpush2.bf16.msra.mxu0 0
  %712 = vmatprep.subr.bf16.mxu0 0
  %713 = vmatpush2.bf16.msra.mxu0 0
  %714 = vmatprep.mubr.bf16.mxu0 0
  %715 = vmatmul.mubr.bf16.gmra.mxu0 %v680
  %v716 = vpop.f32.mrf.mxu0
  %v717 = vadd.f32 0.0, %v716
  %v718 = vpop.f32.mrf.mxu0
  %v719 = vpop.f32.mrf.mxu0
  %v720 = vpop.f32.mrf.mxu0
  %721 = vdwg.mxu0
  %v722 = vadd.f32 %v656, %v717
  %v723 = vpack.c.bf16 %v538, %v538
  %s724 = scalar_lea.vmem %s5, 48
  %v725 = vld [vmem:[%s724] sm:$0xf]
  %v726 = vld [vmem:[%s724 + $0x4] sm:$0xf]
  %v727 = vld [vmem:[%s724 + $0x8] sm:$0xf]
  %v728 = vld [vmem:[%s724 + $0xc] sm:$0xf]
  %v733 = vunpack.c.l.b16 %v725
  %v734 = vunpack.c.l.b16 %v726
  %v735 = vunpack.c.l.b16 %v727
  %v736 = vunpack.c.l.b16 %v728
  %v737 = vpack.c.b16 %v734, %v733
  %v738 = vpack.c.b16 %v736, %v735
  %v742 = vsel %vm562, %v723, 0
  %744 = vmatprep.subr.bf16.mxu0 0
  %745 = vmatpush1.bf16.msra.mxu0 0
  %746 = vmatprep.subr.bf16.mxu0 0
  %747 = vmatpush1.bf16.msra.mxu0 0
  %748 = vmatprep.subr.bf16.mxu0 0
  %749 = vmatpush1.bf16.msra.mxu0 0
  %750 = vmatprep.subr.bf16.mxu0 0
  %751 = vmatpush1.bf16.msra.mxu0 0
  %752 = vmatprep.subr.bf16.mxu0 0
  %753 = vmatpush1.bf16.msra.mxu0 0
  %754 = vmatprep.subr.bf16.mxu0 0
  %755 = vmatpush1.bf16.msra.mxu0 0
  %756 = vmatprep.subr.bf16.mxu0 0
  %757 = vmatpush1.bf16.msra.mxu0 %v738
  %758 = vmatprep.subr.bf16.mxu0 0
  %759 = vmatpush1.bf16.msra.mxu0 %v737
  %760 = vmatprep.subr.bf16.mxu0 0
  %761 = vmatpush2.bf16.msra.mxu0 0
  %762 = vmatprep.subr.bf16.mxu0 0
  %763 = vmatpush2.bf16.msra.mxu0 0
  %764 = vmatprep.subr.bf16.mxu0 0
  %765 = vmatpush2.bf16.msra.mxu0 0
  %766 = vmatprep.subr.bf16.mxu0 0
  %767 = vmatpush2.bf16.msra.mxu0 0
  %768 = vmatprep.subr.bf16.mxu0 0
  %769 = vmatpush2.bf16.msra.mxu0 0
  %770 = vmatprep.subr.bf16.mxu0 0
  %771 = vmatpush2.bf16.msra.mxu0 0
  %772 = vmatprep.subr.bf16.mxu0 0
  %773 = vmatpush2.bf16.msra.mxu0 0
  %774 = vmatprep.subr.bf16.mxu0 0
  %775 = vmatpush2.bf16.msra.mxu0 0
  %776 = vmatprep.mubr.bf16.mxu0 0
  %777 = vmatmul.mubr.bf16.gmra.mxu0 %v742
  %v778 = vpop.f32.mrf.mxu0
  %v779 = vadd.f32 0.0, %v778
  %v780 = vpop.f32.mrf.mxu0
  %v781 = vpop.f32.mrf.mxu0
  %v782 = vpop.f32.mrf.mxu0
  %783 = vdwg.mxu0
  %v784 = vadd.f32 %v722, %v779
  %v785 = vld [vmem:[%s6] sm:$0x1]
  %v787 = vlaneseq
  %v788 = vshrl.u32 %v787, 7
  %v789 = vsub.s32 0, %v788
  %v790 = vrot.slane %v785, %v789
  %v792 = vadd.f32 %v784, %v790
  %v793 = vmax.f32 %v792, 0.0
  %v794 = vld [vmem:[%s7] sm:$0x3]
  %vm795 = vcmask 64512
  %v797 = vsel %vm795, %v794, 0
  %799 = vmatprep.subr.mxu0 0.0
  %800 = vmatpush1.msra.mxu0 0.0
  %801 = vmatprep.subr.mxu0 0.0
  %802 = vmatpush1.msra.mxu0 0.0
  %803 = vmatprep.subr.mxu0 0.0
  %804 = vmatpush1.msra.mxu0 0.0
  %805 = vmatprep.subr.mxu0 0.0
  %806 = vmatpush1.msra.mxu0 0.0
  %807 = vmatprep.subr.mxu0 0.0
  %808 = vmatpush1.msra.mxu0 0.0
  %809 = vmatprep.subr.mxu0 0.0
  %810 = vmatpush1.msra.mxu0 0.0
  %811 = vmatprep.subr.mxu0 0.0
  %812 = vmatpush1.msra.mxu0 0.0
  %813 = vmatprep.subr.mxu0 0.0
  %814 = vmatpush1.msra.mxu0 0.0
  %815 = vmatprep.subr.mxu0 0.0
  %816 = vmatpush1.msra.mxu0 0.0
  %817 = vmatprep.subr.mxu0 0.0
  %818 = vmatpush1.msra.mxu0 0.0
  %819 = vmatprep.subr.mxu0 0.0
  %820 = vmatpush1.msra.mxu0 0.0
  %821 = vmatprep.subr.mxu0 0.0
  %822 = vmatpush1.msra.mxu0 0.0
  %823 = vmatprep.subr.mxu0 0.0
  %824 = vmatpush1.msra.mxu0 0.0
  %825 = vmatprep.subr.mxu0 0.0
  %826 = vmatpush1.msra.mxu0 0.0
  %827 = vmatprep.subr.mxu0 0.0
  %828 = vmatpush1.msra.mxu0 0.0
  %829 = vmatprep.subr.mxu0 0.0
  %830 = vmatpush1.msra.mxu0 %v793
  %831 = vmatprep.subr.mxu0 0.0
  %832 = vmatpush2.msra.mxu0 0.0
  %833 = vmatprep.subr.mxu0 0.0
  %834 = vmatpush2.msra.mxu0 0.0
  %835 = vmatprep.subr.mxu0 0.0
  %836 = vmatpush2.msra.mxu0 0.0
  %837 = vmatprep.subr.mxu0 0.0
  %838 = vmatpush2.msra.mxu0 0.0
  %839 = vmatprep.subr.mxu0 0.0
  %840 = vmatpush2.msra.mxu0 0.0
  %841 = vmatprep.subr.mxu0 0.0
  %842 = vmatpush2.msra.mxu0 0.0
  %843 = vmatprep.subr.mxu0 0.0
  %844 = vmatpush2.msra.mxu0 0.0
  %845 = vmatprep.subr.mxu0 0.0
  %846 = vmatpush2.msra.mxu0 0.0
  %847 = vmatprep.subr.mxu0 0.0
  %848 = vmatpush2.msra.mxu0 0.0
  %849 = vmatprep.subr.mxu0 0.0
  %850 = vmatpush2.msra.mxu0 0.0
  %851 = vmatprep.subr.mxu0 0.0
  %852 = vmatpush2.msra.mxu0 0.0
  %853 = vmatprep.subr.mxu0 0.0
  %854 = vmatpush2.msra.mxu0 0.0
  %855 = vmatprep.subr.mxu0 0.0
  %856 = vmatpush2.msra.mxu0 0.0
  %857 = vmatprep.subr.mxu0 0.0
  %858 = vmatpush2.msra.mxu0 0.0
  %859 = vmatprep.subr.mxu0 0.0
  %860 = vmatpush2.msra.mxu0 0.0
  %861 = vmatprep.subr.mxu0 0.0
  %862 = vmatpush2.msra.mxu0 0.0
  %863 = vmatprep.mubr.f32.mxu0 0.0
  %864 = vmatmul.mubr.f32.gmra.mxu0 %v797
  %v865 = vpop.f32.mrf.mxu0
  %v866 = vadd.f32 0.0, %v865
  %v867 = vpop.f32.mrf.mxu0
  %868 = vdwg.mxu0
  %v869 = vpack.c.bf16 %v866, %v866
  %v870 = vld [vmem:[%s9] sm:$0xff]
  %v871 = vld [vmem:[%s9 + $0x8] sm:$0xff]
  %v872 = vld [vmem:[%s9 + $0x10] sm:$0xff]
  %v873 = vld [vmem:[%s9 + $0x18] sm:$0xff]
  %v874 = vld [vmem:[%s9 + $0x20] sm:$0xff]
  %v875 = vld [vmem:[%s9 + $0x28] sm:$0xff]
  %v876 = vld [vmem:[%s9 + $0x30] sm:$0xff]
  %v877 = vld [vmem:[%s9 + $0x38] sm:$0xff]
  %v878 = vld [vmem:[%s9 + $0x40] sm:$0xff]
  %v879 = vld [vmem:[%s9 + $0x48] sm:$0xff]
  %v880 = vld [vmem:[%s9 + $0x50] sm:$0xff]
  %v881 = vld [vmem:[%s9 + $0x58] sm:$0xff]
  %v882 = vld [vmem:[%s9 + $0x60] sm:$0xff]
  %v883 = vld [vmem:[%s9 + $0x68] sm:$0xff]
  %v884 = vld [vmem:[%s9 + $0x70] sm:$0xff]
  %v885 = vld [vmem:[%s9 + $0x78] sm:$0xff]
  %s886 = scalar_lea.vmem %s7, 2
  %v887 = vld [vmem:[%s886] sm:$0x3]
  %v889 = vsel %vm795, %v887, 0
  %891 = vmatprep.subr.mxu0 0.0
  %892 = vmatpush1.msra.mxu0 0.0
  %893 = vmatprep.subr.mxu0 0.0
  %894 = vmatpush1.msra.mxu0 0.0
  %895 = vmatprep.subr.mxu0 0.0
  %896 = vmatpush1.msra.mxu0 0.0
  %897 = vmatprep.subr.mxu0 0.0
  %898 = vmatpush1.msra.mxu0 0.0
  %899 = vmatprep.subr.mxu0 0.0
  %900 = vmatpush1.msra.mxu0 0.0
  %901 = vmatprep.subr.mxu0 0.0
  %902 = vmatpush1.msra.mxu0 0.0
  %903 = vmatprep.subr.mxu0 0.0
  %904 = vmatpush1.msra.mxu0 0.0
  %905 = vmatprep.subr.mxu0 0.0
  %906 = vmatpush1.msra.mxu0 0.0
  %907 = vmatprep.subr.mxu0 0.0
  %908 = vmatpush1.msra.mxu0 0.0
  %909 = vmatprep.subr.mxu0 0.0
  %910 = vmatpush1.msra.mxu0 0.0
  %911 = vmatprep.subr.mxu0 0.0
  %912 = vmatpush1.msra.mxu0 0.0
  %913 = vmatprep.subr.mxu0 0.0
  %914 = vmatpush1.msra.mxu0 0.0
  %915 = vmatprep.subr.mxu0 0.0
  %916 = vmatpush1.msra.mxu0 0.0
  %917 = vmatprep.subr.mxu0 0.0
  %918 = vmatpush1.msra.mxu0 0.0
  %919 = vmatprep.subr.mxu0 0.0
  %920 = vmatpush1.msra.mxu0 0.0
  %921 = vmatprep.subr.mxu0 0.0
  %922 = vmatpush1.msra.mxu0 %v793
  %923 = vmatprep.subr.mxu0 0.0
  %924 = vmatpush2.msra.mxu0 0.0
  %925 = vmatprep.subr.mxu0 0.0
  %926 = vmatpush2.msra.mxu0 0.0
  %927 = vmatprep.subr.mxu0 0.0
  %928 = vmatpush2.msra.mxu0 0.0
  %929 = vmatprep.subr.mxu0 0.0
  %930 = vmatpush2.msra.mxu0 0.0
  %931 = vmatprep.subr.mxu0 0.0
  %932 = vmatpush2.msra.mxu0 0.0
  %933 = vmatprep.subr.mxu0 0.0
  %934 = vmatpush2.msra.mxu0 0.0
  %935 = vmatprep.subr.mxu0 0.0
  %936 = vmatpush2.msra.mxu0 0.0
  %937 = vmatprep.subr.mxu0 0.0
  %938 = vmatpush2.msra.mxu0 0.0
  %939 = vmatprep.subr.mxu0 0.0
  %940 = vmatpush2.msra.mxu0 0.0
  %941 = vmatprep.subr.mxu0 0.0
  %942 = vmatpush2.msra.mxu0 0.0
  %943 = vmatprep.subr.mxu0 0.0
  %944 = vmatpush2.msra.mxu0 0.0
  %945 = vmatprep.subr.mxu0 0.0
  %946 = vmatpush2.msra.mxu0 0.0
  %947 = vmatprep.subr.mxu0 0.0
  %948 = vmatpush2.msra.mxu0 0.0
  %949 = vmatprep.subr.mxu0 0.0
  %950 = vmatpush2.msra.mxu0 0.0
  %951 = vmatprep.subr.mxu0 0.0
  %952 = vmatpush2.msra.mxu0 0.0
  %953 = vmatprep.subr.mxu0 0.0
  %954 = vmatpush2.msra.mxu0 0.0
  %955 = vmatprep.mubr.f32.mxu0 0.0
  %956 = vmatmul.mubr.f32.gmra.mxu0 %v889
  %v957 = vpop.f32.mrf.mxu0
  %v958 = vadd.f32 0.0, %v957
  %v959 = vpop.f32.mrf.mxu0
  %960 = vdwg.mxu0
  %v961 = vpack.c.bf16 %v958, %v958
  %s962 = scalar_lea.vmem %s9, 128
  %v963 = vld [vmem:[%s962] sm:$0xff]
  %v964 = vld [vmem:[%s962 + $0x8] sm:$0xff]
  %v965 = vld [vmem:[%s962 + $0x10] sm:$0xff]
  %v966 = vld [vmem:[%s962 + $0x18] sm:$0xff]
  %v967 = vld [vmem:[%s962 + $0x20] sm:$0xff]
  %v968 = vld [vmem:[%s962 + $0x28] sm:$0xff]
  %v969 = vld [vmem:[%s962 + $0x30] sm:$0xff]
  %v970 = vld [vmem:[%s962 + $0x38] sm:$0xff]
  %v971 = vld [vmem:[%s962 + $0x40] sm:$0xff]
  %v972 = vld [vmem:[%s962 + $0x48] sm:$0xff]
  %v973 = vld [vmem:[%s962 + $0x50] sm:$0xff]
  %v974 = vld [vmem:[%s962 + $0x58] sm:$0xff]
  %v975 = vld [vmem:[%s962 + $0x60] sm:$0xff]
  %v976 = vld [vmem:[%s962 + $0x68] sm:$0xff]
  %v977 = vld [vmem:[%s962 + $0x70] sm:$0xff]
  %v978 = vld [vmem:[%s962 + $0x78] sm:$0xff]
  %v995 = vunpack.c.l.b16 %v963
  %v996 = vunpack.c.h.b16 %v963
  %v997 = vunpack.c.l.b16 %v964
  %v998 = vunpack.c.h.b16 %v964
  %v999 = vunpack.c.l.b16 %v965
  %v1000 = vunpack.c.h.b16 %v965
  %v1001 = vunpack.c.l.b16 %v966
  %v1002 = vunpack.c.h.b16 %v966
  %v1003 = vunpack.c.l.b16 %v967
  %v1004 = vunpack.c.h.b16 %v967
  %v1005 = vunpack.c.l.b16 %v968
  %v1006 = vunpack.c.h.b16 %v968
  %v1007 = vunpack.c.l.b16 %v969
  %v1008 = vunpack.c.h.b16 %v969
  %v1009 = vunpack.c.l.b16 %v970
  %v1010 = vunpack.c.h.b16 %v970
  %v1011 = vunpack.c.l.b16 %v971
  %v1012 = vunpack.c.h.b16 %v971
  %v1013 = vunpack.c.l.b16 %v972
  %v1014 = vunpack.c.h.b16 %v972
  %v1015 = vunpack.c.l.b16 %v973
  %v1016 = vunpack.c.h.b16 %v973
  %v1017 = vunpack.c.l.b16 %v974
  %v1018 = vunpack.c.h.b16 %v974
  %v1019 = vunpack.c.l.b16 %v975
  %v1020 = vunpack.c.h.b16 %v975
  %v1021 = vunpack.c.l.b16 %v976
  %v1022 = vunpack.c.h.b16 %v976
  %v1023 = vunpack.c.l.b16 %v977
  %v1024 = vunpack.c.h.b16 %v977
  %v1025 = vunpack.c.l.b16 %v978
  %v1026 = vunpack.c.h.b16 %v978
  %v1027 = vpack.c.b16 %v999, %v995
  %v1028 = vpack.c.b16 %v1000, %v996
  %v1029 = vpack.c.b16 %v1001, %v997
  %v1030 = vpack.c.b16 %v1002, %v998
  %v1031 = vpack.c.b16 %v1007, %v1003
  %v1032 = vpack.c.b16 %v1008, %v1004
  %v1033 = vpack.c.b16 %v1009, %v1005
  %v1034 = vpack.c.b16 %v1010, %v1006
  %v1035 = vpack.c.b16 %v1015, %v1011
  %v1036 = vpack.c.b16 %v1016, %v1012
  %v1037 = vpack.c.b16 %v1017, %v1013
  %v1038 = vpack.c.b16 %v1018, %v1014
  %v1039 = vpack.c.b16 %v1023, %v1019
  %v1040 = vpack.c.b16 %v1024, %v1020
  %v1041 = vpack.c.b16 %v1025, %v1021
  %v1042 = vpack.c.b16 %v1026, %v1022
  %vm1059 = vcmask 523264
  %v1061 = vsel %vm1059, %v961, 0
  %1063 = vmatprep.subr.bf16.mxu0 0
  %1064 = vmatpush1.bf16.msra.mxu0 0
  %1065 = vmatprep.subr.bf16.mxu0 0
  %1066 = vmatpush1.bf16.msra.mxu0 0
  %1067 = vmatprep.subr.bf16.mxu0 0
  %1068 = vmatpush1.bf16.msra.mxu0 0
  %1069 = vmatprep.subr.bf16.mxu0 0
  %1070 = vmatpush1.bf16.msra.mxu0 0
  %1071 = vmatprep.subr.bf16.mxu0 %v1040
  %1072 = vmatpush1.bf16.msra.mxu0 %v1039
  %1073 = vmatprep.subr.bf16.mxu0 %v1036
  %1074 = vmatpush1.bf16.msra.mxu0 %v1035
  %1075 = vmatprep.subr.bf16.mxu0 %v1032
  %1076 = vmatpush1.bf16.msra.mxu0 %v1031
  %1077 = vmatprep.subr.bf16.mxu0 %v1028
  %1078 = vmatpush1.bf16.msra.mxu0 %v1027
  %1079 = vmatprep.subr.bf16.mxu0 0
  %1080 = vmatpush2.bf16.msra.mxu0 0
  %1081 = vmatprep.subr.bf16.mxu0 0
  %1082 = vmatpush2.bf16.msra.mxu0 0
  %1083 = vmatprep.subr.bf16.mxu0 0
  %1084 = vmatpush2.bf16.msra.mxu0 0
  %1085 = vmatprep.subr.bf16.mxu0 0
  %1086 = vmatpush2.bf16.msra.mxu0 0
  %1087 = vmatprep.subr.bf16.mxu0 0
  %1088 = vmatpush2.bf16.msra.mxu0 0
  %1089 = vmatprep.subr.bf16.mxu0 0
  %1090 = vmatpush2.bf16.msra.mxu0 0
  %1091 = vmatprep.subr.bf16.mxu0 0
  %1092 = vmatpush2.bf16.msra.mxu0 0
  %1093 = vmatprep.subr.bf16.mxu0 0
  %1094 = vmatpush2.bf16.msra.mxu0 0
  %1095 = vmatprep.mubr.bf16.mxu0 0
  %1096 = vmatmul.mubr.bf16.gmra.mxu0 %v1061
  %v1097 = vpop.f32.mrf.mxu0
  %v1098 = vadd.f32 0.0, %v1097
  %v1099 = vpop.f32.mrf.mxu0
  %v1100 = vadd.f32 0.0, %v1099
  %v1101 = vpop.f32.mrf.mxu0
  %v1102 = vpop.f32.mrf.mxu0
  %1103 = vdwg.mxu0
  %1104 = vmatprep.subr.bf16.mxu0 0
  %1105 = vmatpush1.bf16.msra.mxu0 0
  %1106 = vmatprep.subr.bf16.mxu0 0
  %1107 = vmatpush1.bf16.msra.mxu0 0
  %1108 = vmatprep.subr.bf16.mxu0 0
  %1109 = vmatpush1.bf16.msra.mxu0 0
  %1110 = vmatprep.subr.bf16.mxu0 0
  %1111 = vmatpush1.bf16.msra.mxu0 0
  %1112 = vmatprep.subr.bf16.mxu0 %v1042
  %1113 = vmatpush1.bf16.msra.mxu0 %v1041
  %1114 = vmatprep.subr.bf16.mxu0 %v1038
  %1115 = vmatpush1.bf16.msra.mxu0 %v1037
  %1116 = vmatprep.subr.bf16.mxu0 %v1034
  %1117 = vmatpush1.bf16.msra.mxu0 %v1033
  %1118 = vmatprep.subr.bf16.mxu0 %v1030
  %1119 = vmatpush1.bf16.msra.mxu0 %v1029
  %1120 = vmatprep.subr.bf16.mxu0 0
  %1121 = vmatpush2.bf16.msra.mxu0 0
  %1122 = vmatprep.subr.bf16.mxu0 0
  %1123 = vmatpush2.bf16.msra.mxu0 0
  %1124 = vmatprep.subr.bf16.mxu0 0
  %1125 = vmatpush2.bf16.msra.mxu0 0
  %1126 = vmatprep.subr.bf16.mxu0 0
  %1127 = vmatpush2.bf16.msra.mxu0 0
  %1128 = vmatprep.subr.bf16.mxu0 0
  %1129 = vmatpush2.bf16.msra.mxu0 0
  %1130 = vmatprep.subr.bf16.mxu0 0
  %1131 = vmatpush2.bf16.msra.mxu0 0
  %1132 = vmatprep.subr.bf16.mxu0 0
  %1133 = vmatpush2.bf16.msra.mxu0 0
  %1134 = vmatprep.subr.bf16.mxu0 0
  %1135 = vmatpush2.bf16.msra.mxu0 0
  %1136 = vmatprep.mubr.bf16.mxu0 0
  %1137 = vmatmul.mubr.bf16.gmra.mxu0 %v1061
  %v1138 = vpop.f32.mrf.mxu0
  %v1139 = vadd.f32 0.0, %v1138
  %v1140 = vpop.f32.mrf.mxu0
  %v1141 = vadd.f32 0.0, %v1140
  %v1142 = vpop.f32.mrf.mxu0
  %v1143 = vpop.f32.mrf.mxu0
  %1144 = vdwg.mxu0
  %v1161 = vunpack.c.l.b16 %v870
  %v1162 = vunpack.c.h.b16 %v870
  %v1163 = vunpack.c.l.b16 %v871
  %v1164 = vunpack.c.h.b16 %v871
  %v1165 = vunpack.c.l.b16 %v872
  %v1166 = vunpack.c.h.b16 %v872
  %v1167 = vunpack.c.l.b16 %v873
  %v1168 = vunpack.c.h.b16 %v873
  %v1169 = vunpack.c.l.b16 %v874
  %v1170 = vunpack.c.h.b16 %v874
  %v1171 = vunpack.c.l.b16 %v875
  %v1172 = vunpack.c.h.b16 %v875
  %v1173 = vunpack.c.l.b16 %v876
  %v1174 = vunpack.c.h.b16 %v876
  %v1175 = vunpack.c.l.b16 %v877
  %v1176 = vunpack.c.h.b16 %v877
  %v1177 = vunpack.c.l.b16 %v878
  %v1178 = vunpack.c.h.b16 %v878
  %v1179 = vunpack.c.l.b16 %v879
  %v1180 = vunpack.c.h.b16 %v879
  %v1181 = vunpack.c.l.b16 %v880
  %v1182 = vunpack.c.h.b16 %v880
  %v1183 = vunpack.c.l.b16 %v881
  %v1184 = vunpack.c.h.b16 %v881
  %v1185 = vunpack.c.l.b16 %v882
  %v1186 = vunpack.c.h.b16 %v882
  %v1187 = vunpack.c.l.b16 %v883
  %v1188 = vunpack.c.h.b16 %v883
  %v1189 = vunpack.c.l.b16 %v884
  %v1190 = vunpack.c.h.b16 %v884
  %v1191 = vunpack.c.l.b16 %v885
  %v1192 = vunpack.c.h.b16 %v885
  %v1193 = vpack.c.b16 %v1165, %v1161
  %v1194 = vpack.c.b16 %v1166, %v1162
  %v1195 = vpack.c.b16 %v1167, %v1163
  %v1196 = vpack.c.b16 %v1168, %v1164
  %v1197 = vpack.c.b16 %v1173, %v1169
  %v1198 = vpack.c.b16 %v1174, %v1170
  %v1199 = vpack.c.b16 %v1175, %v1171
  %v1200 = vpack.c.b16 %v1176, %v1172
  %v1201 = vpack.c.b16 %v1181, %v1177
  %v1202 = vpack.c.b16 %v1182, %v1178
  %v1203 = vpack.c.b16 %v1183, %v1179
  %v1204 = vpack.c.b16 %v1184, %v1180
  %v1205 = vpack.c.b16 %v1189, %v1185
  %v1206 = vpack.c.b16 %v1190, %v1186
  %v1207 = vpack.c.b16 %v1191, %v1187
  %v1208 = vpack.c.b16 %v1192, %v1188
  %v1226 = vsel %vm1059, %v869, 0
  %1228 = vmatprep.subr.bf16.mxu0 0
  %1229 = vmatpush1.bf16.msra.mxu0 0
  %1230 = vmatprep.subr.bf16.mxu0 0
  %1231 = vmatpush1.bf16.msra.mxu0 0
  %1232 = vmatprep.subr.bf16.mxu0 0
  %1233 = vmatpush1.bf16.msra.mxu0 0
  %1234 = vmatprep.subr.bf16.mxu0 0
  %1235 = vmatpush1.bf16.msra.mxu0 0
  %1236 = vmatprep.subr.bf16.mxu0 %v1206
  %1237 = vmatpush1.bf16.msra.mxu0 %v1205
  %1238 = vmatprep.subr.bf16.mxu0 %v1202
  %1239 = vmatpush1.bf16.msra.mxu0 %v1201
  %1240 = vmatprep.subr.bf16.mxu0 %v1198
  %1241 = vmatpush1.bf16.msra.mxu0 %v1197
  %1242 = vmatprep.subr.bf16.mxu0 %v1194
  %1243 = vmatpush1.bf16.msra.mxu0 %v1193
  %1244 = vmatprep.subr.bf16.mxu0 0
  %1245 = vmatpush2.bf16.msra.mxu0 0
  %1246 = vmatprep.subr.bf16.mxu0 0
  %1247 = vmatpush2.bf16.msra.mxu0 0
  %1248 = vmatprep.subr.bf16.mxu0 0
  %1249 = vmatpush2.bf16.msra.mxu0 0
  %1250 = vmatprep.subr.bf16.mxu0 0
  %1251 = vmatpush2.bf16.msra.mxu0 0
  %1252 = vmatprep.subr.bf16.mxu0 0
  %1253 = vmatpush2.bf16.msra.mxu0 0
  %1254 = vmatprep.subr.bf16.mxu0 0
  %1255 = vmatpush2.bf16.msra.mxu0 0
  %1256 = vmatprep.subr.bf16.mxu0 0
  %1257 = vmatpush2.bf16.msra.mxu0 0
  %1258 = vmatprep.subr.bf16.mxu0 0
  %1259 = vmatpush2.bf16.msra.mxu0 0
  %1260 = vmatprep.mubr.bf16.mxu0 0
  %1261 = vmatmul.mubr.bf16.gmra.mxu0 %v1226
  %v1262 = vpop.f32.mrf.mxu0
  %v1263 = vadd.f32 %v1098, %v1262
  %v1264 = vpop.f32.mrf.mxu0
  %v1265 = vadd.f32 %v1100, %v1264
  %v1266 = vpop.f32.mrf.mxu0
  %v1267 = vpop.f32.mrf.mxu0
  %1268 = vdwg.mxu0
  %1269 = vmatprep.subr.bf16.mxu0 0
  %1270 = vmatpush1.bf16.msra.mxu0 0
  %1271 = vmatprep.subr.bf16.mxu0 0
  %1272 = vmatpush1.bf16.msra.mxu0 0
  %1273 = vmatprep.subr.bf16.mxu0 0
  %1274 = vmatpush1.bf16.msra.mxu0 0
  %1275 = vmatprep.subr.bf16.mxu0 0
  %1276 = vmatpush1.bf16.msra.mxu0 0
  %1277 = vmatprep.subr.bf16.mxu0 %v1208
  %1278 = vmatpush1.bf16.msra.mxu0 %v1207
  %1279 = vmatprep.subr.bf16.mxu0 %v1204
  %1280 = vmatpush1.bf16.msra.mxu0 %v1203
  %1281 = vmatprep.subr.bf16.mxu0 %v1200
  %1282 = vmatpush1.bf16.msra.mxu0 %v1199
  %1283 = vmatprep.subr.bf16.mxu0 %v1196
  %1284 = vmatpush1.bf16.msra.mxu0 %v1195
  %1285 = vmatprep.subr.bf16.mxu0 0
  %1286 = vmatpush2.bf16.msra.mxu0 0
  %1287 = vmatprep.subr.bf16.mxu0 0
  %1288 = vmatpush2.bf16.msra.mxu0 0
  %1289 = vmatprep.subr.bf16.mxu0 0
  %1290 = vmatpush2.bf16.msra.mxu0 0
  %1291 = vmatprep.subr.bf16.mxu0 0
  %1292 = vmatpush2.bf16.msra.mxu0 0
  %1293 = vmatprep.subr.bf16.mxu0 0
  %1294 = vmatpush2.bf16.msra.mxu0 0
  %1295 = vmatprep.subr.bf16.mxu0 0
  %1296 = vmatpush2.bf16.msra.mxu0 0
  %1297 = vmatprep.subr.bf16.mxu0 0
  %1298 = vmatpush2.bf16.msra.mxu0 0
  %1299 = vmatprep.subr.bf16.mxu0 0
  %1300 = vmatpush2.bf16.msra.mxu0 0
  %1301 = vmatprep.mubr.bf16.mxu0 0
  %1302 = vmatmul.mubr.bf16.gmra.mxu0 %v1226
  %v1303 = vpop.f32.mrf.mxu0
  %v1304 = vadd.f32 %v1139, %v1303
  %v1305 = vpop.f32.mrf.mxu0
  %v1306 = vadd.f32 %v1141, %v1305
  %v1307 = vpop.f32.mrf.mxu0
  %v1308 = vpop.f32.mrf.mxu0
  %1309 = vdwg.mxu0
  %s1310 = scalar_lea.vmem %s7, 4
  %v1311 = vld [vmem:[%s1310] sm:$0x3]
  %v1313 = vsel %vm795, %v1311, 0
  %1315 = vmatprep.subr.mxu0 0.0
  %1316 = vmatpush1.msra.mxu0 0.0
  %1317 = vmatprep.subr.mxu0 0.0
  %1318 = vmatpush1.msra.mxu0 0.0
  %1319 = vmatprep.subr.mxu0 0.0
  %1320 = vmatpush1.msra.mxu0 0.0
  %1321 = vmatprep.subr.mxu0 0.0
  %1322 = vmatpush1.msra.mxu0 0.0
  %1323 = vmatprep.subr.mxu0 0.0
  %1324 = vmatpush1.msra.mxu0 0.0
  %1325 = vmatprep.subr.mxu0 0.0
  %1326 = vmatpush1.msra.mxu0 0.0
  %1327 = vmatprep.subr.mxu0 0.0
  %1328 = vmatpush1.msra.mxu0 0.0
  %1329 = vmatprep.subr.mxu0 0.0
  %1330 = vmatpush1.msra.mxu0 0.0
  %1331 = vmatprep.subr.mxu0 0.0
  %1332 = vmatpush1.msra.mxu0 0.0
  %1333 = vmatprep.subr.mxu0 0.0
  %1334 = vmatpush1.msra.mxu0 0.0
  %1335 = vmatprep.subr.mxu0 0.0
  %1336 = vmatpush1.msra.mxu0 0.0
  %1337 = vmatprep.subr.mxu0 0.0
  %1338 = vmatpush1.msra.mxu0 0.0
  %1339 = vmatprep.subr.mxu0 0.0
  %1340 = vmatpush1.msra.mxu0 0.0
  %1341 = vmatprep.subr.mxu0 0.0
  %1342 = vmatpush1.msra.mxu0 0.0
  %1343 = vmatprep.subr.mxu0 0.0
  %1344 = vmatpush1.msra.mxu0 0.0
  %1345 = vmatprep.subr.mxu0 0.0
  %1346 = vmatpush1.msra.mxu0 %v793
  %1347 = vmatprep.subr.mxu0 0.0
  %1348 = vmatpush2.msra.mxu0 0.0
  %1349 = vmatprep.subr.mxu0 0.0
  %1350 = vmatpush2.msra.mxu0 0.0
  %1351 = vmatprep.subr.mxu0 0.0
  %1352 = vmatpush2.msra.mxu0 0.0
  %1353 = vmatprep.subr.mxu0 0.0
  %1354 = vmatpush2.msra.mxu0 0.0
  %1355 = vmatprep.subr.mxu0 0.0
  %1356 = vmatpush2.msra.mxu0 0.0
  %1357 = vmatprep.subr.mxu0 0.0
  %1358 = vmatpush2.msra.mxu0 0.0
  %1359 = vmatprep.subr.mxu0 0.0
  %1360 = vmatpush2.msra.mxu0 0.0
  %1361 = vmatprep.subr.mxu0 0.0
  %1362 = vmatpush2.msra.mxu0 0.0
  %1363 = vmatprep.subr.mxu0 0.0
  %1364 = vmatpush2.msra.mxu0 0.0
  %1365 = vmatprep.subr.mxu0 0.0
  %1366 = vmatpush2.msra.mxu0 0.0
  %1367 = vmatprep.subr.mxu0 0.0
  %1368 = vmatpush2.msra.mxu0 0.0
  %1369 = vmatprep.subr.mxu0 0.0
  %1370 = vmatpush2.msra.mxu0 0.0
  %1371 = vmatprep.subr.mxu0 0.0
  %1372 = vmatpush2.msra.mxu0 0.0
  %1373 = vmatprep.subr.mxu0 0.0
  %1374 = vmatpush2.msra.mxu0 0.0
  %1375 = vmatprep.subr.mxu0 0.0
  %1376 = vmatpush2.msra.mxu0 0.0
  %1377 = vmatprep.subr.mxu0 0.0
  %1378 = vmatpush2.msra.mxu0 0.0
  %1379 = vmatprep.mubr.f32.mxu0 0.0
  %1380 = vmatmul.mubr.f32.gmra.mxu0 %v1313
  %v1381 = vpop.f32.mrf.mxu0
  %v1382 = vadd.f32 0.0, %v1381
  %v1383 = vpop.f32.mrf.mxu0
  %1384 = vdwg.mxu0
  %v1385 = vpack.c.bf16 %v1382, %v1382
  %s1386 = scalar_lea.vmem %s9, 256
  %v1387 = vld [vmem:[%s1386] sm:$0xff]
  %v1388 = vld [vmem:[%s1386 + $0x8] sm:$0xff]
  %v1389 = vld [vmem:[%s1386 + $0x10] sm:$0xff]
  %v1390 = vld [vmem:[%s1386 + $0x18] sm:$0xff]
  %v1391 = vld [vmem:[%s1386 + $0x20] sm:$0xff]
  %v1392 = vld [vmem:[%s1386 + $0x28] sm:$0xff]
  %v1393 = vld [vmem:[%s1386 + $0x30] sm:$0xff]
  %v1394 = vld [vmem:[%s1386 + $0x38] sm:$0xff]
  %v1395 = vld [vmem:[%s1386 + $0x40] sm:$0xff]
  %v1396 = vld [vmem:[%s1386 + $0x48] sm:$0xff]
  %v1397 = vld [vmem:[%s1386 + $0x50] sm:$0xff]
  %v1398 = vld [vmem:[%s1386 + $0x58] sm:$0xff]
  %v1399 = vld [vmem:[%s1386 + $0x60] sm:$0xff]
  %v1400 = vld [vmem:[%s1386 + $0x68] sm:$0xff]
  %v1401 = vld [vmem:[%s1386 + $0x70] sm:$0xff]
  %v1402 = vld [vmem:[%s1386 + $0x78] sm:$0xff]
  %v1419 = vunpack.c.l.b16 %v1387
  %v1420 = vunpack.c.h.b16 %v1387
  %v1421 = vunpack.c.l.b16 %v1388
  %v1422 = vunpack.c.h.b16 %v1388
  %v1423 = vunpack.c.l.b16 %v1389
  %v1424 = vunpack.c.h.b16 %v1389
  %v1425 = vunpack.c.l.b16 %v1390
  %v1426 = vunpack.c.h.b16 %v1390
  %v1427 = vunpack.c.l.b16 %v1391
  %v1428 = vunpack.c.h.b16 %v1391
  %v1429 = vunpack.c.l.b16 %v1392
  %v1430 = vunpack.c.h.b16 %v1392
  %v1431 = vunpack.c.l.b16 %v1393
  %v1432 = vunpack.c.h.b16 %v1393
  %v1433 = vunpack.c.l.b16 %v1394
  %v1434 = vunpack.c.h.b16 %v1394
  %v1435 = vunpack.c.l.b16 %v1395
  %v1436 = vunpack.c.h.b16 %v1395
  %v1437 = vunpack.c.l.b16 %v1396
  %v1438 = vunpack.c.h.b16 %v1396
  %v1439 = vunpack.c.l.b16 %v1397
  %v1440 = vunpack.c.h.b16 %v1397
  %v1441 = vunpack.c.l.b16 %v1398
  %v1442 = vunpack.c.h.b16 %v1398
  %v1443 = vunpack.c.l.b16 %v1399
  %v1444 = vunpack.c.h.b16 %v1399
  %v1445 = vunpack.c.l.b16 %v1400
  %v1446 = vunpack.c.h.b16 %v1400
  %v1447 = vunpack.c.l.b16 %v1401
  %v1448 = vunpack.c.h.b16 %v1401
  %v1449 = vunpack.c.l.b16 %v1402
  %v1450 = vunpack.c.h.b16 %v1402
  %v1451 = vpack.c.b16 %v1423, %v1419
  %v1452 = vpack.c.b16 %v1424, %v1420
  %v1453 = vpack.c.b16 %v1425, %v1421
  %v1454 = vpack.c.b16 %v1426, %v1422
  %v1455 = vpack.c.b16 %v1431, %v1427
  %v1456 = vpack.c.b16 %v1432, %v1428
  %v1457 = vpack.c.b16 %v1433, %v1429
  %v1458 = vpack.c.b16 %v1434, %v1430
  %v1459 = vpack.c.b16 %v1439, %v1435
  %v1460 = vpack.c.b16 %v1440, %v1436
  %v1461 = vpack.c.b16 %v1441, %v1437
  %v1462 = vpack.c.b16 %v1442, %v1438
  %v1463 = vpack.c.b16 %v1447, %v1443
  %v1464 = vpack.c.b16 %v1448, %v1444
  %v1465 = vpack.c.b16 %v1449, %v1445
  %v1466 = vpack.c.b16 %v1450, %v1446
  %v1484 = vsel %vm1059, %v1385, 0
  %1486 = vmatprep.subr.bf16.mxu0 0
  %1487 = vmatpush1.bf16.msra.mxu0 0
  %1488 = vmatprep.subr.bf16.mxu0 0
  %1489 = vmatpush1.bf16.msra.mxu0 0
  %1490 = vmatprep.subr.bf16.mxu0 0
  %1491 = vmatpush1.bf16.msra.mxu0 0
  %1492 = vmatprep.subr.bf16.mxu0 0
  %1493 = vmatpush1.bf16.msra.mxu0 0
  %1494 = vmatprep.subr.bf16.mxu0 %v1464
  %1495 = vmatpush1.bf16.msra.mxu0 %v1463
  %1496 = vmatprep.subr.bf16.mxu0 %v1460
  %1497 = vmatpush1.bf16.msra.mxu0 %v1459
  %1498 = vmatprep.subr.bf16.mxu0 %v1456
  %1499 = vmatpush1.bf16.msra.mxu0 %v1455
  %1500 = vmatprep.subr.bf16.mxu0 %v1452
  %1501 = vmatpush1.bf16.msra.mxu0 %v1451
  %1502 = vmatprep.subr.bf16.mxu0 0
  %1503 = vmatpush2.bf16.msra.mxu0 0
  %1504 = vmatprep.subr.bf16.mxu0 0
  %1505 = vmatpush2.bf16.msra.mxu0 0
  %1506 = vmatprep.subr.bf16.mxu0 0
  %1507 = vmatpush2.bf16.msra.mxu0 0
  %1508 = vmatprep.subr.bf16.mxu0 0
  %1509 = vmatpush2.bf16.msra.mxu0 0
  %1510 = vmatprep.subr.bf16.mxu0 0
  %1511 = vmatpush2.bf16.msra.mxu0 0
  %1512 = vmatprep.subr.bf16.mxu0 0
  %1513 = vmatpush2.bf16.msra.mxu0 0
  %1514 = vmatprep.subr.bf16.mxu0 0
  %1515 = vmatpush2.bf16.msra.mxu0 0
  %1516 = vmatprep.subr.bf16.mxu0 0
  %1517 = vmatpush2.bf16.msra.mxu0 0
  %1518 = vmatprep.mubr.bf16.mxu0 0
  %1519 = vmatmul.mubr.bf16.gmra.mxu0 %v1484
  %v1520 = vpop.f32.mrf.mxu0
  %v1521 = vadd.f32 0.0, %v1520
  %v1522 = vpop.f32.mrf.mxu0
  %v1523 = vadd.f32 0.0, %v1522
  %v1524 = vpop.f32.mrf.mxu0
  %v1525 = vpop.f32.mrf.mxu0
  %1526 = vdwg.mxu0
  %1527 = vmatprep.subr.bf16.mxu0 0
  %1528 = vmatpush1.bf16.msra.mxu0 0
  %1529 = vmatprep.subr.bf16.mxu0 0
  %1530 = vmatpush1.bf16.msra.mxu0 0
  %1531 = vmatprep.subr.bf16.mxu0 0
  %1532 = vmatpush1.bf16.msra.mxu0 0
  %1533 = vmatprep.subr.bf16.mxu0 0
  %1534 = vmatpush1.bf16.msra.mxu0 0
  %1535 = vmatprep.subr.bf16.mxu0 %v1466
  %1536 = vmatpush1.bf16.msra.mxu0 %v1465
  %1537 = vmatprep.subr.bf16.mxu0 %v1462
  %1538 = vmatpush1.bf16.msra.mxu0 %v1461
  %1539 = vmatprep.subr.bf16.mxu0 %v1458
  %1540 = vmatpush1.bf16.msra.mxu0 %v1457
  %1541 = vmatprep.subr.bf16.mxu0 %v1454
  %1542 = vmatpush1.bf16.msra.mxu0 %v1453
  %1543 = vmatprep.subr.bf16.mxu0 0
  %1544 = vmatpush2.bf16.msra.mxu0 0
  %1545 = vmatprep.subr.bf16.mxu0 0
  %1546 = vmatpush2.bf16.msra.mxu0 0
  %1547 = vmatprep.subr.bf16.mxu0 0
  %1548 = vmatpush2.bf16.msra.mxu0 0
  %1549 = vmatprep.subr.bf16.mxu0 0
  %1550 = vmatpush2.bf16.msra.mxu0 0
  %1551 = vmatprep.subr.bf16.mxu0 0
  %1552 = vmatpush2.bf16.msra.mxu0 0
  %1553 = vmatprep.subr.bf16.mxu0 0
  %1554 = vmatpush2.bf16.msra.mxu0 0
  %1555 = vmatprep.subr.bf16.mxu0 0
  %1556 = vmatpush2.bf16.msra.mxu0 0
  %1557 = vmatprep.subr.bf16.mxu0 0
  %1558 = vmatpush2.bf16.msra.mxu0 0
  %1559 = vmatprep.mubr.bf16.mxu0 0
  %1560 = vmatmul.mubr.bf16.gmra.mxu0 %v1484
  %v1561 = vpop.f32.mrf.mxu0
  %v1562 = vadd.f32 0.0, %v1561
  %v1563 = vpop.f32.mrf.mxu0
  %v1564 = vadd.f32 0.0, %v1563
  %v1565 = vpop.f32.mrf.mxu0
  %v1566 = vpop.f32.mrf.mxu0
  %1567 = vdwg.mxu0
  %v1568 = vadd.f32 %v1263, %v1521
  %v1569 = vadd.f32 %v1265, %v1523
  %v1570 = vadd.f32 %v1304, %v1562
  %v1571 = vadd.f32 %v1306, %v1564
  %s1572 = scalar_lea.vmem %s7, 6
  %v1573 = vld [vmem:[%s1572] sm:$0x3]
  %v1575 = vsel %vm795, %v1573, 0
  %1577 = vmatprep.subr.mxu0 0.0
  %1578 = vmatpush1.msra.mxu0 0.0
  %1579 = vmatprep.subr.mxu0 0.0
  %1580 = vmatpush1.msra.mxu0 0.0
  %1581 = vmatprep.subr.mxu0 0.0
  %1582 = vmatpush1.msra.mxu0 0.0
  %1583 = vmatprep.subr.mxu0 0.0
  %1584 = vmatpush1.msra.mxu0 0.0
  %1585 = vmatprep.subr.mxu0 0.0
  %1586 = vmatpush1.msra.mxu0 0.0
  %1587 = vmatprep.subr.mxu0 0.0
  %1588 = vmatpush1.msra.mxu0 0.0
  %1589 = vmatprep.subr.mxu0 0.0
  %1590 = vmatpush1.msra.mxu0 0.0
  %1591 = vmatprep.subr.mxu0 0.0
  %1592 = vmatpush1.msra.mxu0 0.0
  %1593 = vmatprep.subr.mxu0 0.0
  %1594 = vmatpush1.msra.mxu0 0.0
  %1595 = vmatprep.subr.mxu0 0.0
  %1596 = vmatpush1.msra.mxu0 0.0
  %1597 = vmatprep.subr.mxu0 0.0
  %1598 = vmatpush1.msra.mxu0 0.0
  %1599 = vmatprep.subr.mxu0 0.0
  %1600 = vmatpush1.msra.mxu0 0.0
  %1601 = vmatprep.subr.mxu0 0.0
  %1602 = vmatpush1.msra.mxu0 0.0
  %1603 = vmatprep.subr.mxu0 0.0
  %1604 = vmatpush1.msra.mxu0 0.0
  %1605 = vmatprep.subr.mxu0 0.0
  %1606 = vmatpush1.msra.mxu0 0.0
  %1607 = vmatprep.subr.mxu0 0.0
  %1608 = vmatpush1.msra.mxu0 %v793
  %1609 = vmatprep.subr.mxu0 0.0
  %1610 = vmatpush2.msra.mxu0 0.0
  %1611 = vmatprep.subr.mxu0 0.0
  %1612 = vmatpush2.msra.mxu0 0.0
  %1613 = vmatprep.subr.mxu0 0.0
  %1614 = vmatpush2.msra.mxu0 0.0
  %1615 = vmatprep.subr.mxu0 0.0
  %1616 = vmatpush2.msra.mxu0 0.0
  %1617 = vmatprep.subr.mxu0 0.0
  %1618 = vmatpush2.msra.mxu0 0.0
  %1619 = vmatprep.subr.mxu0 0.0
  %1620 = vmatpush2.msra.mxu0 0.0
  %1621 = vmatprep.subr.mxu0 0.0
  %1622 = vmatpush2.msra.mxu0 0.0
  %1623 = vmatprep.subr.mxu0 0.0
  %1624 = vmatpush2.msra.mxu0 0.0
  %1625 = vmatprep.subr.mxu0 0.0
  %1626 = vmatpush2.msra.mxu0 0.0
  %1627 = vmatprep.subr.mxu0 0.0
  %1628 = vmatpush2.msra.mxu0 0.0
  %1629 = vmatprep.subr.mxu0 0.0
  %1630 = vmatpush2.msra.mxu0 0.0
  %1631 = vmatprep.subr.mxu0 0.0
  %1632 = vmatpush2.msra.mxu0 0.0
  %1633 = vmatprep.subr.mxu0 0.0
  %1634 = vmatpush2.msra.mxu0 0.0
  %1635 = vmatprep.subr.mxu0 0.0
  %1636 = vmatpush2.msra.mxu0 0.0
  %1637 = vmatprep.subr.mxu0 0.0
  %1638 = vmatpush2.msra.mxu0 0.0
  %1639 = vmatprep.subr.mxu0 0.0
  %1640 = vmatpush2.msra.mxu0 0.0
  %1641 = vmatprep.mubr.f32.mxu0 0.0
  %1642 = vmatmul.mubr.f32.gmra.mxu0 %v1575
  %v1643 = vpop.f32.mrf.mxu0
  %v1644 = vadd.f32 0.0, %v1643
  %v1645 = vpop.f32.mrf.mxu0
  %1646 = vdwg.mxu0
  %v1647 = vpack.c.bf16 %v1644, %v1644
  %s1648 = scalar_lea.vmem %s9, 384
  %v1649 = vld [vmem:[%s1648] sm:$0xff]
  %v1650 = vld [vmem:[%s1648 + $0x8] sm:$0xff]
  %v1651 = vld [vmem:[%s1648 + $0x10] sm:$0xff]
  %v1652 = vld [vmem:[%s1648 + $0x18] sm:$0xff]
  %v1653 = vld [vmem:[%s1648 + $0x20] sm:$0xff]
  %v1654 = vld [vmem:[%s1648 + $0x28] sm:$0xff]
  %v1655 = vld [vmem:[%s1648 + $0x30] sm:$0xff]
  %v1656 = vld [vmem:[%s1648 + $0x38] sm:$0xff]
  %v1657 = vld [vmem:[%s1648 + $0x40] sm:$0xff]
  %v1658 = vld [vmem:[%s1648 + $0x48] sm:$0xff]
  %v1659 = vld [vmem:[%s1648 + $0x50] sm:$0xff]
  %v1660 = vld [vmem:[%s1648 + $0x58] sm:$0xff]
  %v1661 = vld [vmem:[%s1648 + $0x60] sm:$0xff]
  %v1662 = vld [vmem:[%s1648 + $0x68] sm:$0xff]
  %v1663 = vld [vmem:[%s1648 + $0x70] sm:$0xff]
  %v1664 = vld [vmem:[%s1648 + $0x78] sm:$0xff]
  %v1681 = vunpack.c.l.b16 %v1649
  %v1682 = vunpack.c.h.b16 %v1649
  %v1683 = vunpack.c.l.b16 %v1650
  %v1684 = vunpack.c.h.b16 %v1650
  %v1685 = vunpack.c.l.b16 %v1651
  %v1686 = vunpack.c.h.b16 %v1651
  %v1687 = vunpack.c.l.b16 %v1652
  %v1688 = vunpack.c.h.b16 %v1652
  %v1689 = vunpack.c.l.b16 %v1653
  %v1690 = vunpack.c.h.b16 %v1653
  %v1691 = vunpack.c.l.b16 %v1654
  %v1692 = vunpack.c.h.b16 %v1654
  %v1693 = vunpack.c.l.b16 %v1655
  %v1694 = vunpack.c.h.b16 %v1655
  %v1695 = vunpack.c.l.b16 %v1656
  %v1696 = vunpack.c.h.b16 %v1656
  %v1697 = vunpack.c.l.b16 %v1657
  %v1698 = vunpack.c.h.b16 %v1657
  %v1699 = vunpack.c.l.b16 %v1658
  %v1700 = vunpack.c.h.b16 %v1658
  %v1701 = vunpack.c.l.b16 %v1659
  %v1702 = vunpack.c.h.b16 %v1659
  %v1703 = vunpack.c.l.b16 %v1660
  %v1704 = vunpack.c.h.b16 %v1660
  %v1705 = vunpack.c.l.b16 %v1661
  %v1706 = vunpack.c.h.b16 %v1661
  %v1707 = vunpack.c.l.b16 %v1662
  %v1708 = vunpack.c.h.b16 %v1662
  %v1709 = vunpack.c.l.b16 %v1663
  %v1710 = vunpack.c.h.b16 %v1663
  %v1711 = vunpack.c.l.b16 %v1664
  %v1712 = vunpack.c.h.b16 %v1664
  %v1713 = vpack.c.b16 %v1685, %v1681
  %v1714 = vpack.c.b16 %v1686, %v1682
  %v1715 = vpack.c.b16 %v1687, %v1683
  %v1716 = vpack.c.b16 %v1688, %v1684
  %v1717 = vpack.c.b16 %v1693, %v1689
  %v1718 = vpack.c.b16 %v1694, %v1690
  %v1719 = vpack.c.b16 %v1695, %v1691
  %v1720 = vpack.c.b16 %v1696, %v1692
  %v1721 = vpack.c.b16 %v1701, %v1697
  %v1722 = vpack.c.b16 %v1702, %v1698
  %v1723 = vpack.c.b16 %v1703, %v1699
  %v1724 = vpack.c.b16 %v1704, %v1700
  %v1725 = vpack.c.b16 %v1709, %v1705
  %v1726 = vpack.c.b16 %v1710, %v1706
  %v1727 = vpack.c.b16 %v1711, %v1707
  %v1728 = vpack.c.b16 %v1712, %v1708
  %v1746 = vsel %vm1059, %v1647, 0
  %1748 = vmatprep.subr.bf16.mxu0 0
  %1749 = vmatpush1.bf16.msra.mxu0 0
  %1750 = vmatprep.subr.bf16.mxu0 0
  %1751 = vmatpush1.bf16.msra.mxu0 0
  %1752 = vmatprep.subr.bf16.mxu0 0
  %1753 = vmatpush1.bf16.msra.mxu0 0
  %1754 = vmatprep.subr.bf16.mxu0 0
  %1755 = vmatpush1.bf16.msra.mxu0 0
  %1756 = vmatprep.subr.bf16.mxu0 %v1726
  %1757 = vmatpush1.bf16.msra.mxu0 %v1725
  %1758 = vmatprep.subr.bf16.mxu0 %v1722
  %1759 = vmatpush1.bf16.msra.mxu0 %v1721
  %1760 = vmatprep.subr.bf16.mxu0 %v1718
  %1761 = vmatpush1.bf16.msra.mxu0 %v1717
  %1762 = vmatprep.subr.bf16.mxu0 %v1714
  %1763 = vmatpush1.bf16.msra.mxu0 %v1713
  %1764 = vmatprep.subr.bf16.mxu0 0
  %1765 = vmatpush2.bf16.msra.mxu0 0
  %1766 = vmatprep.subr.bf16.mxu0 0
  %1767 = vmatpush2.bf16.msra.mxu0 0
  %1768 = vmatprep.subr.bf16.mxu0 0
  %1769 = vmatpush2.bf16.msra.mxu0 0
  %1770 = vmatprep.subr.bf16.mxu0 0
  %1771 = vmatpush2.bf16.msra.mxu0 0
  %1772 = vmatprep.subr.bf16.mxu0 0
  %1773 = vmatpush2.bf16.msra.mxu0 0
  %1774 = vmatprep.subr.bf16.mxu0 0
  %1775 = vmatpush2.bf16.msra.mxu0 0
  %1776 = vmatprep.subr.bf16.mxu0 0
  %1777 = vmatpush2.bf16.msra.mxu0 0
  %1778 = vmatprep.subr.bf16.mxu0 0
  %1779 = vmatpush2.bf16.msra.mxu0 0
  %1780 = vmatprep.mubr.bf16.mxu0 0
  %1781 = vmatmul.mubr.bf16.gmra.mxu0 %v1746
  %v1782 = vpop.f32.mrf.mxu0
  %v1783 = vadd.f32 0.0, %v1782
  %v1784 = vpop.f32.mrf.mxu0
  %v1785 = vadd.f32 0.0, %v1784
  %v1786 = vpop.f32.mrf.mxu0
  %v1787 = vpop.f32.mrf.mxu0
  %1788 = vdwg.mxu0
  %1789 = vmatprep.subr.bf16.mxu0 0
  %1790 = vmatpush1.bf16.msra.mxu0 0
  %1791 = vmatprep.subr.bf16.mxu0 0
  %1792 = vmatpush1.bf16.msra.mxu0 0
  %1793 = vmatprep.subr.bf16.mxu0 0
  %1794 = vmatpush1.bf16.msra.mxu0 0
  %1795 = vmatprep.subr.bf16.mxu0 0
  %1796 = vmatpush1.bf16.msra.mxu0 0
  %1797 = vmatprep.subr.bf16.mxu0 %v1728
  %1798 = vmatpush1.bf16.msra.mxu0 %v1727
  %1799 = vmatprep.subr.bf16.mxu0 %v1724
  %1800 = vmatpush1.bf16.msra.mxu0 %v1723
  %1801 = vmatprep.subr.bf16.mxu0 %v1720
  %1802 = vmatpush1.bf16.msra.mxu0 %v1719
  %1803 = vmatprep.subr.bf16.mxu0 %v1716
  %1804 = vmatpush1.bf16.msra.mxu0 %v1715
  %1805 = vmatprep.subr.bf16.mxu0 0
  %1806 = vmatpush2.bf16.msra.mxu0 0
  %1807 = vmatprep.subr.bf16.mxu0 0
  %1808 = vmatpush2.bf16.msra.mxu0 0
  %1809 = vmatprep.subr.bf16.mxu0 0
  %1810 = vmatpush2.bf16.msra.mxu0 0
  %1811 = vmatprep.subr.bf16.mxu0 0
  %1812 = vmatpush2.bf16.msra.mxu0 0
  %1813 = vmatprep.subr.bf16.mxu0 0
  %1814 = vmatpush2.bf16.msra.mxu0 0
  %1815 = vmatprep.subr.bf16.mxu0 0
  %1816 = vmatpush2.bf16.msra.mxu0 0
  %1817 = vmatprep.subr.bf16.mxu0 0
  %1818 = vmatpush2.bf16.msra.mxu0 0
  %1819 = vmatprep.subr.bf16.mxu0 0
  %1820 = vmatpush2.bf16.msra.mxu0 0
  %1821 = vmatprep.mubr.bf16.mxu0 0
  %1822 = vmatmul.mubr.bf16.gmra.mxu0 %v1746
  %v1823 = vpop.f32.mrf.mxu0
  %v1824 = vadd.f32 0.0, %v1823
  %v1825 = vpop.f32.mrf.mxu0
  %v1826 = vadd.f32 0.0, %v1825
  %v1827 = vpop.f32.mrf.mxu0
  %v1828 = vpop.f32.mrf.mxu0
  %1829 = vdwg.mxu0
  %v1830 = vadd.f32 %v1568, %v1783
  %v1831 = vadd.f32 %v1569, %v1785
  %v1832 = vadd.f32 %v1570, %v1824
  %v1833 = vadd.f32 %v1571, %v1826
  %v1834 = vld [vmem:[%s10] sm:$0xf]
  %v1836 = vlaneseq
  %v1837 = vshrl.u32 %v1836, 7
  %v1838 = vsub.s32 0, %v1837
  %v1839 = vrot.slane %v1834, %v1838
  %v1840 = vlaneseq
  %v1841 = vshrl.u32 %v1840, 7
  %v1842 = vsub.s32 1, %v1841
  %v1843 = vrot.slane %v1834, %v1842
  %v1844 = vlaneseq
  %v1845 = vshrl.u32 %v1844, 7
  %v1846 = vsub.s32 2, %v1845
  %v1847 = vrot.slane %v1834, %v1846
  %v1848 = vlaneseq
  %v1849 = vshrl.u32 %v1848, 7
  %v1850 = vsub.s32 3, %v1849
  %v1851 = vrot.slane %v1834, %v1850
  %v1856 = vadd.f32 %v1830, %v1839
  %v1857 = vadd.f32 %v1831, %v1843
  %v1858 = vadd.f32 %v1832, %v1847
  %v1859 = vadd.f32 %v1833, %v1851
  %v1864 = vcombine.low %v1856, %v1857
  %v1865 = vcombine.low %v1858, %v1859
  %v1867 = vunpack.c.l.s4 1983009808
  %v1868 = vunpack.c.0.s8 %v1867
  %v1869 = vlaneseq
  %v1870 = vshrl.u32 %v1869, 7
  %v1871 = vsub.s32 %v1868, %v1870
  %v1872 = vrot.slane %v1864, %v1871
  %v1874 = vunpack.c.l.s4 1983009808
  %v1875 = vunpack.c.0.s8 %v1874
  %v1876 = vlaneseq
  %v1877 = vshrl.u32 %v1876, 7
  %v1878 = vsub.s32 %v1875, %v1877
  %v1879 = vrot.slane %v1865, %v1878
  %v1880 = vcombine.low %v1872, %v1879
  %1882 = vst [vmem:[%s17] sm:$0xff] %v1880
  %v1883 = vld [vmem:[%s8] sm:$0x1]
  %v1885 = vsel %vm795, %v1883, 0
  %1887 = vmatprep.subr.mxu0 0.0
  %1888 = vmatpush1.msra.mxu0 0.0
  %1889 = vmatprep.subr.mxu0 0.0
  %1890 = vmatpush1.msra.mxu0 0.0
  %1891 = vmatprep.subr.mxu0 0.0
  %1892 = vmatpush1.msra.mxu0 0.0
  %1893 = vmatprep.subr.mxu0 0.0
  %1894 = vmatpush1.msra.mxu0 0.0
  %1895 = vmatprep.subr.mxu0 0.0
  %1896 = vmatpush1.msra.mxu0 0.0
  %1897 = vmatprep.subr.mxu0 0.0
  %1898 = vmatpush1.msra.mxu0 0.0
  %1899 = vmatprep.subr.mxu0 0.0
  %1900 = vmatpush1.msra.mxu0 0.0
  %1901 = vmatprep.subr.mxu0 0.0
  %1902 = vmatpush1.msra.mxu0 0.0
  %1903 = vmatprep.subr.mxu0 0.0
  %1904 = vmatpush1.msra.mxu0 0.0
  %1905 = vmatprep.subr.mxu0 0.0
  %1906 = vmatpush1.msra.mxu0 0.0
  %1907 = vmatprep.subr.mxu0 0.0
  %1908 = vmatpush1.msra.mxu0 0.0
  %1909 = vmatprep.subr.mxu0 0.0
  %1910 = vmatpush1.msra.mxu0 0.0
  %1911 = vmatprep.subr.mxu0 0.0
  %1912 = vmatpush1.msra.mxu0 0.0
  %1913 = vmatprep.subr.mxu0 0.0
  %1914 = vmatpush1.msra.mxu0 0.0
  %1915 = vmatprep.subr.mxu0 0.0
  %1916 = vmatpush1.msra.mxu0 0.0
  %1917 = vmatprep.subr.mxu0 0.0
  %1918 = vmatpush1.msra.mxu0 %v793
  %1919 = vmatprep.subr.mxu0 0.0
  %1920 = vmatpush2.msra.mxu0 0.0
  %1921 = vmatprep.subr.mxu0 0.0
  %1922 = vmatpush2.msra.mxu0 0.0
  %1923 = vmatprep.subr.mxu0 0.0
  %1924 = vmatpush2.msra.mxu0 0.0
  %1925 = vmatprep.subr.mxu0 0.0
  %1926 = vmatpush2.msra.mxu0 0.0
  %1927 = vmatprep.subr.mxu0 0.0
  %1928 = vmatpush2.msra.mxu0 0.0
  %1929 = vmatprep.subr.mxu0 0.0
  %1930 = vmatpush2.msra.mxu0 0.0
  %1931 = vmatprep.subr.mxu0 0.0
  %1932 = vmatpush2.msra.mxu0 0.0
  %1933 = vmatprep.subr.mxu0 0.0
  %1934 = vmatpush2.msra.mxu0 0.0
  %1935 = vmatprep.subr.mxu0 0.0
  %1936 = vmatpush2.msra.mxu0 0.0
  %1937 = vmatprep.subr.mxu0 0.0
  %1938 = vmatpush2.msra.mxu0 0.0
  %1939 = vmatprep.subr.mxu0 0.0
  %1940 = vmatpush2.msra.mxu0 0.0
  %1941 = vmatprep.subr.mxu0 0.0
  %1942 = vmatpush2.msra.mxu0 0.0
  %1943 = vmatprep.subr.mxu0 0.0
  %1944 = vmatpush2.msra.mxu0 0.0
  %1945 = vmatprep.subr.mxu0 0.0
  %1946 = vmatpush2.msra.mxu0 0.0
  %1947 = vmatprep.subr.mxu0 0.0
  %1948 = vmatpush2.msra.mxu0 0.0
  %1949 = vmatprep.subr.mxu0 0.0
  %1950 = vmatpush2.msra.mxu0 0.0
  %1951 = vmatprep.mubr.f32.mxu0 0.0
  %1952 = vmatmul.mubr.f32.gmra.mxu0 %v1885
  %v1953 = vpop.f32.mrf.mxu0
  %v1954 = vadd.f32 0.0, %v1953
  %v1955 = vpop.f32.mrf.mxu0
  %1956 = vdwg.mxu0
  %v1957 = vpack.c.bf16 %v1954, %v1954
  %v1958 = vld [vmem:[%s11] sm:$0xff]
  %v1959 = vld [vmem:[%s11 + $0x8] sm:$0xff]
  %v1960 = vld [vmem:[%s11 + $0x10] sm:$0xff]
  %v1961 = vld [vmem:[%s11 + $0x18] sm:$0xff]
  %v1962 = vld [vmem:[%s11 + $0x20] sm:$0xff]
  %v1963 = vld [vmem:[%s13] sm:$0xf]
  %v1964 = vld [vmem:[%s13 + $0x4] sm:$0xf]
  %v1965 = vld [vmem:[%s13 + $0x8] sm:$0xf]
  %v1966 = vld [vmem:[%s13 + $0xc] sm:$0xf]
  %v1967 = vld [vmem:[%s13 + $0x10] sm:$0xf]
  %v1968 = vld [vmem:[%s13 + $0x14] sm:$0xf]
  %v1969 = vld [vmem:[%s13 + $0x18] sm:$0xf]
  %v1970 = vld [vmem:[%s13 + $0x1c] sm:$0xf]
  %v1979 = vunpack.c.l.b16 %v1963
  %v1980 = vunpack.c.l.b16 %v1964
  %v1981 = vunpack.c.l.b16 %v1965
  %v1982 = vunpack.c.l.b16 %v1966
  %v1983 = vunpack.c.l.b16 %v1967
  %v1984 = vunpack.c.l.b16 %v1968
  %v1985 = vunpack.c.l.b16 %v1969
  %v1986 = vunpack.c.l.b16 %v1970
  %v1987 = vpack.c.b16 %v1980, %v1979
  %v1988 = vpack.c.b16 %v1982, %v1981
  %v1989 = vpack.c.b16 %v1984, %v1983
  %v1990 = vpack.c.b16 %v1986, %v1985
  %v1996 = vsel %vm1059, %v1957, 0
  %1998 = vmatprep.subr.bf16.mxu0 0
  %1999 = vmatpush1.bf16.msra.mxu0 0
  %2000 = vmatprep.subr.bf16.mxu0 0
  %2001 = vmatpush1.bf16.msra.mxu0 0
  %2002 = vmatprep.subr.bf16.mxu0 0
  %2003 = vmatpush1.bf16.msra.mxu0 0
  %2004 = vmatprep.subr.bf16.mxu0 0
  %2005 = vmatpush1.bf16.msra.mxu0 0
  %2006 = vmatprep.subr.bf16.mxu0 0
  %2007 = vmatpush1.bf16.msra.mxu0 %v1990
  %2008 = vmatprep.subr.bf16.mxu0 0
  %2009 = vmatpush1.bf16.msra.mxu0 %v1989
  %2010 = vmatprep.subr.bf16.mxu0 0
  %2011 = vmatpush1.bf16.msra.mxu0 %v1988
  %2012 = vmatprep.subr.bf16.mxu0 0
  %2013 = vmatpush1.bf16.msra.mxu0 %v1987
  %2014 = vmatprep.subr.bf16.mxu0 0
  %2015 = vmatpush2.bf16.msra.mxu0 0
  %2016 = vmatprep.subr.bf16.mxu0 0
  %2017 = vmatpush2.bf16.msra.mxu0 0
  %2018 = vmatprep.subr.bf16.mxu0 0
  %2019 = vmatpush2.bf16.msra.mxu0 0
  %2020 = vmatprep.subr.bf16.mxu0 0
  %2021 = vmatpush2.bf16.msra.mxu0 0
  %2022 = vmatprep.subr.bf16.mxu0 0
  %2023 = vmatpush2.bf16.msra.mxu0 0
  %2024 = vmatprep.subr.bf16.mxu0 0
  %2025 = vmatpush2.bf16.msra.mxu0 0
  %2026 = vmatprep.subr.bf16.mxu0 0
  %2027 = vmatpush2.bf16.msra.mxu0 0
  %2028 = vmatprep.subr.bf16.mxu0 0
  %2029 = vmatpush2.bf16.msra.mxu0 0
  %2030 = vmatprep.mubr.bf16.mxu0 0
  %2031 = vmatmul.mubr.bf16.gmra.mxu0 %v1996
  %v2032 = vpop.f32.mrf.mxu0
  %v2033 = vadd.f32 0.0, %v2032
  %v2034 = vpop.f32.mrf.mxu0
  %v2035 = vpop.f32.mrf.mxu0
  %v2036 = vpop.f32.mrf.mxu0
  %2037 = vdwg.mxu0
  %v2038 = vpack.c.bf16 %v1959, %v1958
  %v2039 = vpack.c.bf16 %v1961, %v1960
  %v2040 = vpack.c.bf16 %v1962, %v1962
  %v2041 = vld [vmem:[%s12] sm:$0xf]
  %v2042 = vld [vmem:[%s12 + $0x4] sm:$0xf]
  %v2043 = vld [vmem:[%s12 + $0x8] sm:$0xf]
  %v2044 = vld [vmem:[%s12 + $0xc] sm:$0xf]
  %v2045 = vld [vmem:[%s12 + $0x10] sm:$0xf]
  %v2046 = vld [vmem:[%s12 + $0x14] sm:$0xf]
  %v2047 = vld [vmem:[%s12 + $0x18] sm:$0xf]
  %v2048 = vld [vmem:[%s12 + $0x1c] sm:$0xf]
  %v2049 = vld [vmem:[%s12 + $0x20] sm:$0xf]
  %v2050 = vld [vmem:[%s12 + $0x24] sm:$0xf]
  %v2051 = vld [vmem:[%s12 + $0x28] sm:$0xf]
  %v2052 = vld [vmem:[%s12 + $0x2c] sm:$0xf]
  %v2053 = vld [vmem:[%s12 + $0x30] sm:$0xf]
  %v2054 = vld [vmem:[%s12 + $0x34] sm:$0xf]
  %v2055 = vld [vmem:[%s12 + $0x38] sm:$0xf]
  %v2056 = vld [vmem:[%s12 + $0x3c] sm:$0xf]
  %v2057 = vlaneseq
  %v2058 = vshrl.u32 %v2057, 7
  %v2059 = vsub.s32 0, %v2058
  %v2060 = vrot.slane %v2033, %v2059
  %v2077 = vunpack.c.l.b16 %v2041
  %v2078 = vunpack.c.l.b16 %v2042
  %v2079 = vunpack.c.l.b16 %v2043
  %v2080 = vunpack.c.l.b16 %v2044
  %v2081 = vunpack.c.l.b16 %v2045
  %v2082 = vunpack.c.l.b16 %v2046
  %v2083 = vunpack.c.l.b16 %v2047
  %v2084 = vunpack.c.l.b16 %v2048
  %v2085 = vunpack.c.l.b16 %v2049
  %v2086 = vunpack.c.l.b16 %v2050
  %v2087 = vunpack.c.l.b16 %v2051
  %v2088 = vunpack.c.l.b16 %v2052
  %v2089 = vunpack.c.l.b16 %v2053
  %v2090 = vunpack.c.l.b16 %v2054
  %v2091 = vunpack.c.l.b16 %v2055
  %v2092 = vunpack.c.l.b16 %v2056
  %v2093 = vpack.c.b16 %v2078, %v2077
  %v2094 = vpack.c.b16 %v2080, %v2079
  %v2095 = vpack.c.b16 %v2082, %v2081
  %v2096 = vpack.c.b16 %v2084, %v2083
  %v2097 = vpack.c.b16 %v2086, %v2085
  %v2098 = vpack.c.b16 %v2088, %v2087
  %v2099 = vpack.c.b16 %v2090, %v2089
  %v2100 = vpack.c.b16 %v2092, %v2091
  %2109 = vmatprep.subr.bf16.mxu0 0
  %2110 = vmatpush1.bf16.msra.mxu0 %v2100
  %2111 = vmatprep.subr.bf16.mxu0 0
  %2112 = vmatpush1.bf16.msra.mxu0 %v2099
  %2113 = vmatprep.subr.bf16.mxu0 0
  %2114 = vmatpush1.bf16.msra.mxu0 %v2098
  %2115 = vmatprep.subr.bf16.mxu0 0
  %2116 = vmatpush1.bf16.msra.mxu0 %v2097
  %2117 = vmatprep.subr.bf16.mxu0 0
  %2118 = vmatpush1.bf16.msra.mxu0 %v2096
  %2119 = vmatprep.subr.bf16.mxu0 0
  %2120 = vmatpush1.bf16.msra.mxu0 %v2095
  %2121 = vmatprep.subr.bf16.mxu0 0
  %2122 = vmatpush1.bf16.msra.mxu0 %v2094
  %2123 = vmatprep.subr.bf16.mxu0 0
  %2124 = vmatpush1.bf16.msra.mxu0 %v2093
  %2125 = vmatprep.subr.bf16.mxu0 0
  %2126 = vmatpush2.bf16.msra.mxu0 0
  %2127 = vmatprep.subr.bf16.mxu0 0
  %2128 = vmatpush2.bf16.msra.mxu0 0
  %2129 = vmatprep.subr.bf16.mxu0 0
  %2130 = vmatpush2.bf16.msra.mxu0 0
  %2131 = vmatprep.subr.bf16.mxu0 0
  %2132 = vmatpush2.bf16.msra.mxu0 0
  %2133 = vmatprep.subr.bf16.mxu0 0
  %2134 = vmatpush2.bf16.msra.mxu0 0
  %2135 = vmatprep.subr.bf16.mxu0 0
  %2136 = vmatpush2.bf16.msra.mxu0 0
  %2137 = vmatprep.subr.bf16.mxu0 0
  %2138 = vmatpush2.bf16.msra.mxu0 0
  %2139 = vmatprep.subr.bf16.mxu0 0
  %2140 = vmatpush2.bf16.msra.mxu0 0
  %2141 = vmatprep.mubr.bf16.mxu0 0
  %2142 = vmatmul.mubr.bf16.gmra.mxu0 %v2038
  %v2143 = vpop.f32.mrf.mxu0
  %v2144 = vadd.f32 %v2060, %v2143
  %v2145 = vpop.f32.mrf.mxu0
  %v2146 = vpop.f32.mrf.mxu0
  %v2147 = vadd.f32 %v2060, %v2146
  %v2148 = vpop.f32.mrf.mxu0
  %2149 = vmatprep.mubr.bf16.mxu0 0
  %2150 = vmatmul.mubr.bf16.gmra.mxu0 %v2039
  %v2151 = vpop.f32.mrf.mxu0
  %v2152 = vadd.f32 %v2060, %v2151
  %v2153 = vpop.f32.mrf.mxu0
  %v2154 = vpop.f32.mrf.mxu0
  %v2155 = vadd.f32 %v2060, %v2154
  %v2156 = vpop.f32.mrf.mxu0
  %2157 = vmatprep.mubr.bf16.mxu0 0
  %2158 = vmatmul.mubr.bf16.gmra.mxu0 %v2040
  %v2159 = vpop.f32.mrf.mxu0
  %v2160 = vadd.f32 %v2060, %v2159
  %v2161 = vpop.f32.mrf.mxu0
  %v2162 = vpop.f32.mrf.mxu0
  %v2163 = vpop.f32.mrf.mxu0
  %2164 = vdwg.mxu0
  %v2165 = vld [vmem:[%s14] sm:$0x1]
  %v2167 = vlaneseq
  %v2168 = vshrl.u32 %v2167, 7
  %v2169 = vsub.s32 0, %v2168
  %v2170 = vrot.slane %v2165, %v2169
  %v2172 = vadd.f32 %v2144, %v2170
  %v2173 = vadd.f32 %v2147, %v2170
  %v2174 = vadd.f32 %v2152, %v2170
  %v2175 = vadd.f32 %v2155, %v2170
  %v2176 = vadd.f32 %v2160, %v2170
  %v2177 = vmax.f32 %v2172, 0.0
  %v2178 = vmax.f32 %v2173, 0.0
  %v2179 = vmax.f32 %v2174, 0.0
  %v2180 = vmax.f32 %v2175, 0.0
  %v2181 = vmax.f32 %v2176, 0.0
  %v2182 = vpack.c.bf16 %v2178, %v2177
  %v2183 = vpack.c.bf16 %v2180, %v2179
  %v2184 = vpack.c.bf16 %v2181, %v2181
  %v2185 = vld [vmem:[%s15] sm:$0xf]
  %v2186 = vld [vmem:[%s15 + $0x4] sm:$0xf]
  %v2187 = vld [vmem:[%s15 + $0x8] sm:$0xf]
  %v2188 = vld [vmem:[%s15 + $0xc] sm:$0xf]
  %v2189 = vld [vmem:[%s15 + $0x10] sm:$0xf]
  %v2190 = vld [vmem:[%s15 + $0x14] sm:$0xf]
  %v2191 = vld [vmem:[%s15 + $0x18] sm:$0xf]
  %v2192 = vld [vmem:[%s15 + $0x1c] sm:$0xf]
  %v2193 = vld [vmem:[%s16] sm:$0x1]
  %v2195 = vlaneseq
  %v2196 = vshrl.u32 %v2195, 7
  %v2197 = vsub.s32 0, %v2196
  %v2198 = vrot.slane %v2193, %v2197
  %v2208 = vunpack.c.l.b16 %v2185
  %v2209 = vunpack.c.l.b16 %v2186
  %v2210 = vunpack.c.l.b16 %v2187
  %v2211 = vunpack.c.l.b16 %v2188
  %v2212 = vunpack.c.l.b16 %v2189
  %v2213 = vunpack.c.l.b16 %v2190
  %v2214 = vunpack.c.l.b16 %v2191
  %v2215 = vunpack.c.l.b16 %v2192
  %v2216 = vpack.c.b16 %v2209, %v2208
  %v2217 = vpack.c.b16 %v2211, %v2210
  %v2218 = vpack.c.b16 %v2213, %v2212
  %v2219 = vpack.c.b16 %v2215, %v2214
  %v2225 = vsel %vm1059, %v2182, 0
  %v2228 = vsel %vm1059, %v2183, 0
  %v2231 = vsel %vm1059, %v2184, 0
  %2233 = vmatprep.subr.bf16.mxu0 0
  %2234 = vmatpush1.bf16.msra.mxu0 0
  %2235 = vmatprep.subr.bf16.mxu0 0
  %2236 = vmatpush1.bf16.msra.mxu0 0
  %2237 = vmatprep.subr.bf16.mxu0 0
  %2238 = vmatpush1.bf16.msra.mxu0 0
  %2239 = vmatprep.subr.bf16.mxu0 0
  %2240 = vmatpush1.bf16.msra.mxu0 0
  %2241 = vmatprep.subr.bf16.mxu0 0
  %2242 = vmatpush1.bf16.msra.mxu0 %v2219
  %2243 = vmatprep.subr.bf16.mxu0 0
  %2244 = vmatpush1.bf16.msra.mxu0 %v2218
  %2245 = vmatprep.subr.bf16.mxu0 0
  %2246 = vmatpush1.bf16.msra.mxu0 %v2217
  %2247 = vmatprep.subr.bf16.mxu0 0
  %2248 = vmatpush1.bf16.msra.mxu0 %v2216
  %2249 = vmatprep.subr.bf16.mxu0 0
  %2250 = vmatpush2.bf16.msra.mxu0 0
  %2251 = vmatprep.subr.bf16.mxu0 0
  %2252 = vmatpush2.bf16.msra.mxu0 0
  %2253 = vmatprep.subr.bf16.mxu0 0
  %2254 = vmatpush2.bf16.msra.mxu0 0
  %2255 = vmatprep.subr.bf16.mxu0 0
  %2256 = vmatpush2.bf16.msra.mxu0 0
  %2257 = vmatprep.subr.bf16.mxu0 0
  %2258 = vmatpush2.bf16.msra.mxu0 0
  %2259 = vmatprep.subr.bf16.mxu0 0
  %2260 = vmatpush2.bf16.msra.mxu0 0
  %2261 = vmatprep.subr.bf16.mxu0 0
  %2262 = vmatpush2.bf16.msra.mxu0 0
  %2263 = vmatprep.subr.bf16.mxu0 0
  %2264 = vmatpush2.bf16.msra.mxu0 0
  %2265 = vmatprep.mubr.bf16.mxu0 0
  %2266 = vmatmul.mubr.bf16.gmra.mxu0 %v2225
  %v2267 = vpop.f32.mrf.mxu0
  %v2268 = vadd.f32 %v2198, %v2267
  %v2269 = vpop.f32.mrf.mxu0
  %v2270 = vpop.f32.mrf.mxu0
  %v2271 = vadd.f32 %v2198, %v2270
  %v2272 = vpop.f32.mrf.mxu0
  %2273 = vmatprep.mubr.bf16.mxu0 0
  %2274 = vmatmul.mubr.bf16.gmra.mxu0 %v2228
  %v2275 = vpop.f32.mrf.mxu0
  %v2276 = vadd.f32 %v2198, %v2275
  %v2277 = vpop.f32.mrf.mxu0
  %v2278 = vpop.f32.mrf.mxu0
  %v2279 = vadd.f32 %v2198, %v2278
  %v2280 = vpop.f32.mrf.mxu0
  %2281 = vmatprep.mubr.bf16.mxu0 0
  %2282 = vmatmul.mubr.bf16.gmra.mxu0 %v2231
  %v2283 = vpop.f32.mrf.mxu0
  %v2284 = vadd.f32 %v2198, %v2283
  %v2285 = vpop.f32.mrf.mxu0
  %v2286 = vpop.f32.mrf.mxu0
  %v2287 = vpop.f32.mrf.mxu0
  %2288 = vdwg.mxu0
  %v2289 = vtanh.pop %v2268
  %v2290 = vtanh.pop %v2271
  %v2291 = vtanh.pop %v2276
  %v2292 = vtanh.pop %v2279
  %v2293 = vtanh.pop %v2284
  %v2294 = vadd.f32 %v1958, %v2289
  %v2295 = vadd.f32 %v1959, %v2290
  %v2296 = vadd.f32 %v1960, %v2291
  %v2297 = vadd.f32 %v1961, %v2292
  %v2298 = vadd.f32 %v1962, %v2293
  %2299 = vst [vmem:[%s18] sm:$0xff] %v2294
  %2300 = vst [vmem:[%s18 + $0x8] sm:$0xff] %v2295
  %2301 = vst [vmem:[%s18 + $0x10] sm:$0xff] %v2296
  %2302 = vst [vmem:[%s18 + $0x18] sm:$0xff] %v2297
  %2303 = vst [vmem:[%s18 + $0x20] sm:$0xff] %v2298
  %s2304 = scalar_lea.vmem %s13, 32
  %v2305 = vld [vmem:[%s2304] sm:$0xf]
  %v2306 = vld [vmem:[%s2304 + $0x4] sm:$0xf]
  %v2307 = vld [vmem:[%s2304 + $0x8] sm:$0xf]
  %v2308 = vld [vmem:[%s2304 + $0xc] sm:$0xf]
  %v2309 = vld [vmem:[%s2304 + $0x10] sm:$0xf]
  %v2310 = vld [vmem:[%s2304 + $0x14] sm:$0xf]
  %v2311 = vld [vmem:[%s2304 + $0x18] sm:$0xf]
  %v2312 = vld [vmem:[%s2304 + $0x1c] sm:$0xf]
  %v2321 = vunpack.c.l.b16 %v2305
  %v2322 = vunpack.c.l.b16 %v2306
  %v2323 = vunpack.c.l.b16 %v2307
  %v2324 = vunpack.c.l.b16 %v2308
  %v2325 = vunpack.c.l.b16 %v2309
  %v2326 = vunpack.c.l.b16 %v2310
  %v2327 = vunpack.c.l.b16 %v2311
  %v2328 = vunpack.c.l.b16 %v2312
  %v2329 = vpack.c.b16 %v2322, %v2321
  %v2330 = vpack.c.b16 %v2324, %v2323
  %v2331 = vpack.c.b16 %v2326, %v2325
  %v2332 = vpack.c.b16 %v2328, %v2327
  %2337 = vmatprep.subr.bf16.mxu0 0
  %2338 = vmatpush1.bf16.msra.mxu0 0
  %2339 = vmatprep.subr.bf16.mxu0 0
  %2340 = vmatpush1.bf16.msra.mxu0 0
  %2341 = vmatprep.subr.bf16.mxu0 0
  %2342 = vmatpush1.bf16.msra.mxu0 0
  %2343 = vmatprep.subr.bf16.mxu0 0
  %2344 = vmatpush1.bf16.msra.mxu0 0
  %2345 = vmatprep.subr.bf16.mxu0 0
  %2346 = vmatpush1.bf16.msra.mxu0 %v2332
  %2347 = vmatprep.subr.bf16.mxu0 0
  %2348 = vmatpush1.bf16.msra.mxu0 %v2331
  %2349 = vmatprep.subr.bf16.mxu0 0
  %2350 = vmatpush1.bf16.msra.mxu0 %v2330
  %2351 = vmatprep.subr.bf16.mxu0 0
  %2352 = vmatpush1.bf16.msra.mxu0 %v2329
  %2353 = vmatprep.subr.bf16.mxu0 0
  %2354 = vmatpush2.bf16.msra.mxu0 0
  %2355 = vmatprep.subr.bf16.mxu0 0
  %2356 = vmatpush2.bf16.msra.mxu0 0
  %2357 = vmatprep.subr.bf16.mxu0 0
  %2358 = vmatpush2.bf16.msra.mxu0 0
  %2359 = vmatprep.subr.bf16.mxu0 0
  %2360 = vmatpush2.bf16.msra.mxu0 0
  %2361 = vmatprep.subr.bf16.mxu0 0
  %2362 = vmatpush2.bf16.msra.mxu0 0
  %2363 = vmatprep.subr.bf16.mxu0 0
  %2364 = vmatpush2.bf16.msra.mxu0 0
  %2365 = vmatprep.subr.bf16.mxu0 0
  %2366 = vmatpush2.bf16.msra.mxu0 0
  %2367 = vmatprep.subr.bf16.mxu0 0
  %2368 = vmatpush2.bf16.msra.mxu0 0
  %2369 = vmatprep.mubr.bf16.mxu0 0
  %2370 = vmatmul.mubr.bf16.gmra.mxu0 %v1996
  %v2371 = vpop.f32.mrf.mxu0
  %v2372 = vadd.f32 0.0, %v2371
  %v2373 = vpop.f32.mrf.mxu0
  %v2374 = vpop.f32.mrf.mxu0
  %v2375 = vpop.f32.mrf.mxu0
  %2376 = vdwg.mxu0
  %v2377 = vpack.c.bf16 %v2295, %v2294
  %v2378 = vpack.c.bf16 %v2297, %v2296
  %v2379 = vpack.c.bf16 %v2298, %v2298
  %s2380 = scalar_lea.vmem %s12, 64
  %v2381 = vld [vmem:[%s2380] sm:$0xf]
  %v2382 = vld [vmem:[%s2380 + $0x4] sm:$0xf]
  %v2383 = vld [vmem:[%s2380 + $0x8] sm:$0xf]
  %v2384 = vld [vmem:[%s2380 + $0xc] sm:$0xf]
  %v2385 = vld [vmem:[%s2380 + $0x10] sm:$0xf]
  %v2386 = vld [vmem:[%s2380 + $0x14] sm:$0xf]
  %v2387 = vld [vmem:[%s2380 + $0x18] sm:$0xf]
  %v2388 = vld [vmem:[%s2380 + $0x1c] sm:$0xf]
  %v2389 = vld [vmem:[%s2380 + $0x20] sm:$0xf]
  %v2390 = vld [vmem:[%s2380 + $0x24] sm:$0xf]
  %v2391 = vld [vmem:[%s2380 + $0x28] sm:$0xf]
  %v2392 = vld [vmem:[%s2380 + $0x2c] sm:$0xf]
  %v2393 = vld [vmem:[%s2380 + $0x30] sm:$0xf]
  %v2394 = vld [vmem:[%s2380 + $0x34] sm:$0xf]
  %v2395 = vld [vmem:[%s2380 + $0x38] sm:$0xf]
  %v2396 = vld [vmem:[%s2380 + $0x3c] sm:$0xf]
  %v2397 = vlaneseq
  %v2398 = vshrl.u32 %v2397, 7
  %v2399 = vsub.s32 0, %v2398
  %v2400 = vrot.slane %v2372, %v2399
  %v2417 = vunpack.c.l.b16 %v2381
  %v2418 = vunpack.c.l.b16 %v2382
  %v2419 = vunpack.c.l.b16 %v2383
  %v2420 = vunpack.c.l.b16 %v2384
  %v2421 = vunpack.c.l.b16 %v2385
  %v2422 = vunpack.c.l.b16 %v2386
  %v2423 = vunpack.c.l.b16 %v2387
  %v2424 = vunpack.c.l.b16 %v2388
  %v2425 = vunpack.c.l.b16 %v2389
  %v2426 = vunpack.c.l.b16 %v2390
  %v2427 = vunpack.c.l.b16 %v2391
  %v2428 = vunpack.c.l.b16 %v2392
  %v2429 = vunpack.c.l.b16 %v2393
  %v2430 = vunpack.c.l.b16 %v2394
  %v2431 = vunpack.c.l.b16 %v2395
  %v2432 = vunpack.c.l.b16 %v2396
  %v2433 = vpack.c.b16 %v2418, %v2417
  %v2434 = vpack.c.b16 %v2420, %v2419
  %v2435 = vpack.c.b16 %v2422, %v2421
  %v2436 = vpack.c.b16 %v2424, %v2423
  %v2437 = vpack.c.b16 %v2426, %v2425
  %v2438 = vpack.c.b16 %v2428, %v2427
  %v2439 = vpack.c.b16 %v2430, %v2429
  %v2440 = vpack.c.b16 %v2432, %v2431
  %2449 = vmatprep.subr.bf16.mxu0 0
  %2450 = vmatpush1.bf16.msra.mxu0 %v2440
  %2451 = vmatprep.subr.bf16.mxu0 0
  %2452 = vmatpush1.bf16.msra.mxu0 %v2439
  %2453 = vmatprep.subr.bf16.mxu0 0
  %2454 = vmatpush1.bf16.msra.mxu0 %v2438
  %2455 = vmatprep.subr.bf16.mxu0 0
  %2456 = vmatpush1.bf16.msra.mxu0 %v2437
  %2457 = vmatprep.subr.bf16.mxu0 0
  %2458 = vmatpush1.bf16.msra.mxu0 %v2436
  %2459 = vmatprep.subr.bf16.mxu0 0
  %2460 = vmatpush1.bf16.msra.mxu0 %v2435
  %2461 = vmatprep.subr.bf16.mxu0 0
  %2462 = vmatpush1.bf16.msra.mxu0 %v2434
  %2463 = vmatprep.subr.bf16.mxu0 0
  %2464 = vmatpush1.bf16.msra.mxu0 %v2433
  %2465 = vmatprep.subr.bf16.mxu0 0
  %2466 = vmatpush2.bf16.msra.mxu0 0
  %2467 = vmatprep.subr.bf16.mxu0 0
  %2468 = vmatpush2.bf16.msra.mxu0 0
  %2469 = vmatprep.subr.bf16.mxu0 0
  %2470 = vmatpush2.bf16.msra.mxu0 0
  %2471 = vmatprep.subr.bf16.mxu0 0
  %2472 = vmatpush2.bf16.msra.mxu0 0
  %2473 = vmatprep.subr.bf16.mxu0 0
  %2474 = vmatpush2.bf16.msra.mxu0 0
  %2475 = vmatprep.subr.bf16.mxu0 0
  %2476 = vmatpush2.bf16.msra.mxu0 0
  %2477 = vmatprep.subr.bf16.mxu0 0
  %2478 = vmatpush2.bf16.msra.mxu0 0
  %2479 = vmatprep.subr.bf16.mxu0 0
  %2480 = vmatpush2.bf16.msra.mxu0 0
  %2481 = vmatprep.mubr.bf16.mxu0 0
  %2482 = vmatmul.mubr.bf16.gmra.mxu0 %v2377
  %v2483 = vpop.f32.mrf.mxu0
  %v2484 = vadd.f32 %v2400, %v2483
  %v2485 = vpop.f32.mrf.mxu0
  %v2486 = vpop.f32.mrf.mxu0
  %v2487 = vadd.f32 %v2400, %v2486
  %v2488 = vpop.f32.mrf.mxu0
  %2489 = vmatprep.mubr.bf16.mxu0 0
  %2490 = vmatmul.mubr.bf16.gmra.mxu0 %v2378
  %v2491 = vpop.f32.mrf.mxu0
  %v2492 = vadd.f32 %v2400, %v2491
  %v2493 = vpop.f32.mrf.mxu0
  %v2494 = vpop.f32.mrf.mxu0
  %v2495 = vadd.f32 %v2400, %v2494
  %v2496 = vpop.f32.mrf.mxu0
  %2497 = vmatprep.mubr.bf16.mxu0 0
  %2498 = vmatmul.mubr.bf16.gmra.mxu0 %v2379
  %v2499 = vpop.f32.mrf.mxu0
  %v2500 = vadd.f32 %v2400, %v2499
  %v2501 = vpop.f32.mrf.mxu0
  %v2502 = vpop.f32.mrf.mxu0
  %v2503 = vpop.f32.mrf.mxu0
  %2504 = vdwg.mxu0
  %s2505 = scalar_lea.vmem %s14, 1
  %v2506 = vld [vmem:[%s2505] sm:$0x1]
  %v2508 = vlaneseq
  %v2509 = vshrl.u32 %v2508, 7
  %v2510 = vsub.s32 0, %v2509
  %v2511 = vrot.slane %v2506, %v2510
  %v2513 = vadd.f32 %v2484, %v2511
  %v2514 = vadd.f32 %v2487, %v2511
  %v2515 = vadd.f32 %v2492, %v2511
  %v2516 = vadd.f32 %v2495, %v2511
  %v2517 = vadd.f32 %v2500, %v2511
  %v2518 = vmax.f32 %v2513, 0.0
  %v2519 = vmax.f32 %v2514, 0.0
  %v2520 = vmax.f32 %v2515, 0.0
  %v2521 = vmax.f32 %v2516, 0.0
  %v2522 = vmax.f32 %v2517, 0.0
  %v2523 = vpack.c.bf16 %v2519, %v2518
  %v2524 = vpack.c.bf16 %v2521, %v2520
  %v2525 = vpack.c.bf16 %v2522, %v2522
  %s2526 = scalar_lea.vmem %s15, 32
  %v2527 = vld [vmem:[%s2526] sm:$0xf]
  %v2528 = vld [vmem:[%s2526 + $0x4] sm:$0xf]
  %v2529 = vld [vmem:[%s2526 + $0x8] sm:$0xf]
  %v2530 = vld [vmem:[%s2526 + $0xc] sm:$0xf]
  %v2531 = vld [vmem:[%s2526 + $0x10] sm:$0xf]
  %v2532 = vld [vmem:[%s2526 + $0x14] sm:$0xf]
  %v2533 = vld [vmem:[%s2526 + $0x18] sm:$0xf]
  %v2534 = vld [vmem:[%s2526 + $0x1c] sm:$0xf]
  %s2535 = scalar_lea.vmem %s16, 1
  %v2536 = vld [vmem:[%s2535] sm:$0x1]
  %v2538 = vlaneseq
  %v2539 = vshrl.u32 %v2538, 7
  %v2540 = vsub.s32 0, %v2539
  %v2541 = vrot.slane %v2536, %v2540
  %v2551 = vunpack.c.l.b16 %v2527
  %v2552 = vunpack.c.l.b16 %v2528
  %v2553 = vunpack.c.l.b16 %v2529
  %v2554 = vunpack.c.l.b16 %v2530
  %v2555 = vunpack.c.l.b16 %v2531
  %v2556 = vunpack.c.l.b16 %v2532
  %v2557 = vunpack.c.l.b16 %v2533
  %v2558 = vunpack.c.l.b16 %v2534
  %v2559 = vpack.c.b16 %v2552, %v2551
  %v2560 = vpack.c.b16 %v2554, %v2553
  %v2561 = vpack.c.b16 %v2556, %v2555
  %v2562 = vpack.c.b16 %v2558, %v2557
  %v2568 = vsel %vm1059, %v2523, 0
  %v2571 = vsel %vm1059, %v2524, 0
  %v2574 = vsel %vm1059, %v2525, 0
  %2576 = vmatprep.subr.bf16.mxu0 0
  %2577 = vmatpush1.bf16.msra.mxu0 0
  %2578 = vmatprep.subr.bf16.mxu0 0
  %2579 = vmatpush1.bf16.msra.mxu0 0
  %2580 = vmatprep.subr.bf16.mxu0 0
  %2581 = vmatpush1.bf16.msra.mxu0 0
  %2582 = vmatprep.subr.bf16.mxu0 0
  %2583 = vmatpush1.bf16.msra.mxu0 0
  %2584 = vmatprep.subr.bf16.mxu0 0
  %2585 = vmatpush1.bf16.msra.mxu0 %v2562
  %2586 = vmatprep.subr.bf16.mxu0 0
  %2587 = vmatpush1.bf16.msra.mxu0 %v2561
  %2588 = vmatprep.subr.bf16.mxu0 0
  %2589 = vmatpush1.bf16.msra.mxu0 %v2560
  %2590 = vmatprep.subr.bf16.mxu0 0
  %2591 = vmatpush1.bf16.msra.mxu0 %v2559
  %2592 = vmatprep.subr.bf16.mxu0 0
  %2593 = vmatpush2.bf16.msra.mxu0 0
  %2594 = vmatprep.subr.bf16.mxu0 0
  %2595 = vmatpush2.bf16.msra.mxu0 0
  %2596 = vmatprep.subr.bf16.mxu0 0
  %2597 = vmatpush2.bf16.msra.mxu0 0
  %2598 = vmatprep.subr.bf16.mxu0 0
  %2599 = vmatpush2.bf16.msra.mxu0 0
  %2600 = vmatprep.subr.bf16.mxu0 0
  %2601 = vmatpush2.bf16.msra.mxu0 0
  %2602 = vmatprep.subr.bf16.mxu0 0
  %2603 = vmatpush2.bf16.msra.mxu0 0
  %2604 = vmatprep.subr.bf16.mxu0 0
  %2605 = vmatpush2.bf16.msra.mxu0 0
  %2606 = vmatprep.subr.bf16.mxu0 0
  %2607 = vmatpush2.bf16.msra.mxu0 0
  %2608 = vmatprep.mubr.bf16.mxu0 0
  %2609 = vmatmul.mubr.bf16.gmra.mxu0 %v2568
  %v2610 = vpop.f32.mrf.mxu0
  %v2611 = vadd.f32 %v2541, %v2610
  %v2612 = vpop.f32.mrf.mxu0
  %v2613 = vpop.f32.mrf.mxu0
  %v2614 = vadd.f32 %v2541, %v2613
  %v2615 = vpop.f32.mrf.mxu0
  %2616 = vmatprep.mubr.bf16.mxu0 0
  %2617 = vmatmul.mubr.bf16.gmra.mxu0 %v2571
  %v2618 = vpop.f32.mrf.mxu0
  %v2619 = vadd.f32 %v2541, %v2618
  %v2620 = vpop.f32.mrf.mxu0
  %v2621 = vpop.f32.mrf.mxu0
  %v2622 = vadd.f32 %v2541, %v2621
  %v2623 = vpop.f32.mrf.mxu0
  %2624 = vmatprep.mubr.bf16.mxu0 0
  %2625 = vmatmul.mubr.bf16.gmra.mxu0 %v2574
  %v2626 = vpop.f32.mrf.mxu0
  %v2627 = vadd.f32 %v2541, %v2626
  %v2628 = vpop.f32.mrf.mxu0
  %v2629 = vpop.f32.mrf.mxu0
  %v2630 = vpop.f32.mrf.mxu0
  %2631 = vdwg.mxu0
  %v2632 = vtanh.pop %v2611
  %v2633 = vtanh.pop %v2614
  %v2634 = vtanh.pop %v2619
  %v2635 = vtanh.pop %v2622
  %v2636 = vtanh.pop %v2627
  %v2637 = vadd.f32 %v2294, %v2632
  %v2638 = vadd.f32 %v2295, %v2633
  %v2639 = vadd.f32 %v2296, %v2634
  %v2640 = vadd.f32 %v2297, %v2635
  %v2641 = vadd.f32 %v2298, %v2636
  %s2642 = scalar_lea.vmem %s18, 80
  %2643 = vst [vmem:[%s2642] sm:$0xff] %v2637
  %2644 = vst [vmem:[%s2642 + $0x8] sm:$0xff] %v2638
  %2645 = vst [vmem:[%s2642 + $0x10] sm:$0xff] %v2639
  %2646 = vst [vmem:[%s2642 + $0x18] sm:$0xff] %v2640
  %2647 = vst [vmem:[%s2642 + $0x20] sm:$0xff] %v2641
  %s2648 = scalar_lea.vmem %s13, 64
  %v2649 = vld [vmem:[%s2648] sm:$0xf]
  %v2650 = vld [vmem:[%s2648 + $0x4] sm:$0xf]
  %v2651 = vld [vmem:[%s2648 + $0x8] sm:$0xf]
  %v2652 = vld [vmem:[%s2648 + $0xc] sm:$0xf]
  %v2653 = vld [vmem:[%s2648 + $0x10] sm:$0xf]
  %v2654 = vld [vmem:[%s2648 + $0x14] sm:$0xf]
  %v2655 = vld [vmem:[%s2648 + $0x18] sm:$0xf]
  %v2656 = vld [vmem:[%s2648 + $0x1c] sm:$0xf]
  %v2665 = vunpack.c.l.b16 %v2649
  %v2666 = vunpack.c.l.b16 %v2650
  %v2667 = vunpack.c.l.b16 %v2651
  %v2668 = vunpack.c.l.b16 %v2652
  %v2669 = vunpack.c.l.b16 %v2653
  %v2670 = vunpack.c.l.b16 %v2654
  %v2671 = vunpack.c.l.b16 %v2655
  %v2672 = vunpack.c.l.b16 %v2656
  %v2673 = vpack.c.b16 %v2666, %v2665
  %v2674 = vpack.c.b16 %v2668, %v2667
  %v2675 = vpack.c.b16 %v2670, %v2669
  %v2676 = vpack.c.b16 %v2672, %v2671
  %2681 = vmatprep.subr.bf16.mxu0 0
  %2682 = vmatpush1.bf16.msra.mxu0 0
  %2683 = vmatprep.subr.bf16.mxu0 0
  %2684 = vmatpush1.bf16.msra.mxu0 0
  %2685 = vmatprep.subr.bf16.mxu0 0
  %2686 = vmatpush1.bf16.msra.mxu0 0
  %2687 = vmatprep.subr.bf16.mxu0 0
  %2688 = vmatpush1.bf16.msra.mxu0 0
  %2689 = vmatprep.subr.bf16.mxu0 0
  %2690 = vmatpush1.bf16.msra.mxu0 %v2676
  %2691 = vmatprep.subr.bf16.mxu0 0
  %2692 = vmatpush1.bf16.msra.mxu0 %v2675
  %2693 = vmatprep.subr.bf16.mxu0 0
  %2694 = vmatpush1.bf16.msra.mxu0 %v2674
  %2695 = vmatprep.subr.bf16.mxu0 0
  %2696 = vmatpush1.bf16.msra.mxu0 %v2673
  %2697 = vmatprep.subr.bf16.mxu0 0
  %2698 = vmatpush2.bf16.msra.mxu0 0
  %2699 = vmatprep.subr.bf16.mxu0 0
  %2700 = vmatpush2.bf16.msra.mxu0 0
  %2701 = vmatprep.subr.bf16.mxu0 0
  %2702 = vmatpush2.bf16.msra.mxu0 0
  %2703 = vmatprep.subr.bf16.mxu0 0
  %2704 = vmatpush2.bf16.msra.mxu0 0
  %2705 = vmatprep.subr.bf16.mxu0 0
  %2706 = vmatpush2.bf16.msra.mxu0 0
  %2707 = vmatprep.subr.bf16.mxu0 0
  %2708 = vmatpush2.bf16.msra.mxu0 0
  %2709 = vmatprep.subr.bf16.mxu0 0
  %2710 = vmatpush2.bf16.msra.mxu0 0
  %2711 = vmatprep.subr.bf16.mxu0 0
  %2712 = vmatpush2.bf16.msra.mxu0 0
  %2713 = vmatprep.mubr.bf16.mxu0 0
  %2714 = vmatmul.mubr.bf16.gmra.mxu0 %v1996
  %v2715 = vpop.f32.mrf.mxu0
  %v2716 = vadd.f32 0.0, %v2715
  %v2717 = vpop.f32.mrf.mxu0
  %v2718 = vpop.f32.mrf.mxu0
  %v2719 = vpop.f32.mrf.mxu0
  %2720 = vdwg.mxu0
  %v2721 = vpack.c.bf16 %v2638, %v2637
  %v2722 = vpack.c.bf16 %v2640, %v2639
  %v2723 = vpack.c.bf16 %v2641, %v2641
  %s2724 = scalar_lea.vmem %s12, 128
  %v2725 = vld [vmem:[%s2724] sm:$0xf]
  %v2726 = vld [vmem:[%s2724 + $0x4] sm:$0xf]
  %v2727 = vld [vmem:[%s2724 + $0x8] sm:$0xf]
  %v2728 = vld [vmem:[%s2724 + $0xc] sm:$0xf]
  %v2729 = vld [vmem:[%s2724 + $0x10] sm:$0xf]
  %v2730 = vld [vmem:[%s2724 + $0x14] sm:$0xf]
  %v2731 = vld [vmem:[%s2724 + $0x18] sm:$0xf]
  %v2732 = vld [vmem:[%s2724 + $0x1c] sm:$0xf]
  %v2733 = vld [vmem:[%s2724 + $0x20] sm:$0xf]
  %v2734 = vld [vmem:[%s2724 + $0x24] sm:$0xf]
  %v2735 = vld [vmem:[%s2724 + $0x28] sm:$0xf]
  %v2736 = vld [vmem:[%s2724 + $0x2c] sm:$0xf]
  %v2737 = vld [vmem:[%s2724 + $0x30] sm:$0xf]
  %v2738 = vld [vmem:[%s2724 + $0x34] sm:$0xf]
  %v2739 = vld [vmem:[%s2724 + $0x38] sm:$0xf]
  %v2740 = vld [vmem:[%s2724 + $0x3c] sm:$0xf]
  %v2741 = vlaneseq
  %v2742 = vshrl.u32 %v2741, 7
  %v2743 = vsub.s32 0, %v2742
  %v2744 = vrot.slane %v2716, %v2743
  %v2761 = vunpack.c.l.b16 %v2725
  %v2762 = vunpack.c.l.b16 %v2726
  %v2763 = vunpack.c.l.b16 %v2727
  %v2764 = vunpack.c.l.b16 %v2728
  %v2765 = vunpack.c.l.b16 %v2729
  %v2766 = vunpack.c.l.b16 %v2730
  %v2767 = vunpack.c.l.b16 %v2731
  %v2768 = vunpack.c.l.b16 %v2732
  %v2769 = vunpack.c.l.b16 %v2733
  %v2770 = vunpack.c.l.b16 %v2734
  %v2771 = vunpack.c.l.b16 %v2735
  %v2772 = vunpack.c.l.b16 %v2736
  %v2773 = vunpack.c.l.b16 %v2737
  %v2774 = vunpack.c.l.b16 %v2738
  %v2775 = vunpack.c.l.b16 %v2739
  %v2776 = vunpack.c.l.b16 %v2740
  %v2777 = vpack.c.b16 %v2762, %v2761
  %v2778 = vpack.c.b16 %v2764, %v2763
  %v2779 = vpack.c.b16 %v2766, %v2765
  %v2780 = vpack.c.b16 %v2768, %v2767
  %v2781 = vpack.c.b16 %v2770, %v2769
  %v2782 = vpack.c.b16 %v2772, %v2771
  %v2783 = vpack.c.b16 %v2774, %v2773
  %v2784 = vpack.c.b16 %v2776, %v2775
  %2793 = vmatprep.subr.bf16.mxu0 0
  %2794 = vmatpush1.bf16.msra.mxu0 %v2784
  %2795 = vmatprep.subr.bf16.mxu0 0
  %2796 = vmatpush1.bf16.msra.mxu0 %v2783
  %2797 = vmatprep.subr.bf16.mxu0 0
  %2798 = vmatpush1.bf16.msra.mxu0 %v2782
  %2799 = vmatprep.subr.bf16.mxu0 0
  %2800 = vmatpush1.bf16.msra.mxu0 %v2781
  %2801 = vmatprep.subr.bf16.mxu0 0
  %2802 = vmatpush1.bf16.msra.mxu0 %v2780
  %2803 = vmatprep.subr.bf16.mxu0 0
  %2804 = vmatpush1.bf16.msra.mxu0 %v2779
  %2805 = vmatprep.subr.bf16.mxu0 0
  %2806 = vmatpush1.bf16.msra.mxu0 %v2778
  %2807 = vmatprep.subr.bf16.mxu0 0
  %2808 = vmatpush1.bf16.msra.mxu0 %v2777
  %2809 = vmatprep.subr.bf16.mxu0 0
  %2810 = vmatpush2.bf16.msra.mxu0 0
  %2811 = vmatprep.subr.bf16.mxu0 0
  %2812 = vmatpush2.bf16.msra.mxu0 0
  %2813 = vmatprep.subr.bf16.mxu0 0
  %2814 = vmatpush2.bf16.msra.mxu0 0
  %2815 = vmatprep.subr.bf16.mxu0 0
  %2816 = vmatpush2.bf16.msra.mxu0 0
  %2817 = vmatprep.subr.bf16.mxu0 0
  %2818 = vmatpush2.bf16.msra.mxu0 0
  %2819 = vmatprep.subr.bf16.mxu0 0
  %2820 = vmatpush2.bf16.msra.mxu0 0
  %2821 = vmatprep.subr.bf16.mxu0 0
  %2822 = vmatpush2.bf16.msra.mxu0 0
  %2823 = vmatprep.subr.bf16.mxu0 0
  %2824 = vmatpush2.bf16.msra.mxu0 0
  %2825 = vmatprep.mubr.bf16.mxu0 0
  %2826 = vmatmul.mubr.bf16.gmra.mxu0 %v2721
  %v2827 = vpop.f32.mrf.mxu0
  %v2828 = vadd.f32 %v2744, %v2827
  %v2829 = vpop.f32.mrf.mxu0
  %v2830 = vpop.f32.mrf.mxu0
  %v2831 = vadd.f32 %v2744, %v2830
  %v2832 = vpop.f32.mrf.mxu0
  %2833 = vmatprep.mubr.bf16.mxu0 0
  %2834 = vmatmul.mubr.bf16.gmra.mxu0 %v2722
  %v2835 = vpop.f32.mrf.mxu0
  %v2836 = vadd.f32 %v2744, %v2835
  %v2837 = vpop.f32.mrf.mxu0
  %v2838 = vpop.f32.mrf.mxu0
  %v2839 = vadd.f32 %v2744, %v2838
  %v2840 = vpop.f32.mrf.mxu0
  %2841 = vmatprep.mubr.bf16.mxu0 0
  %2842 = vmatmul.mubr.bf16.gmra.mxu0 %v2723
  %v2843 = vpop.f32.mrf.mxu0
  %v2844 = vadd.f32 %v2744, %v2843
  %v2845 = vpop.f32.mrf.mxu0
  %v2846 = vpop.f32.mrf.mxu0
  %v2847 = vpop.f32.mrf.mxu0
  %2848 = vdwg.mxu0
  %s2849 = scalar_lea.vmem %s14, 2
  %v2850 = vld [vmem:[%s2849] sm:$0x1]
  %v2852 = vlaneseq
  %v2853 = vshrl.u32 %v2852, 7
  %v2854 = vsub.s32 0, %v2853
  %v2855 = vrot.slane %v2850, %v2854
  %v2857 = vadd.f32 %v2828, %v2855
  %v2858 = vadd.f32 %v2831, %v2855
  %v2859 = vadd.f32 %v2836, %v2855
  %v2860 = vadd.f32 %v2839, %v2855
  %v2861 = vadd.f32 %v2844, %v2855
  %v2862 = vmax.f32 %v2857, 0.0
  %v2863 = vmax.f32 %v2858, 0.0
  %v2864 = vmax.f32 %v2859, 0.0
  %v2865 = vmax.f32 %v2860, 0.0
  %v2866 = vmax.f32 %v2861, 0.0
  %v2867 = vpack.c.bf16 %v2863, %v2862
  %v2868 = vpack.c.bf16 %v2865, %v2864
  %v2869 = vpack.c.bf16 %v2866, %v2866
  %s2870 = scalar_lea.vmem %s15, 64
  %v2871 = vld [vmem:[%s2870] sm:$0xf]
  %v2872 = vld [vmem:[%s2870 + $0x4] sm:$0xf]
  %v2873 = vld [vmem:[%s2870 + $0x8] sm:$0xf]
  %v2874 = vld [vmem:[%s2870 + $0xc] sm:$0xf]
  %v2875 = vld [vmem:[%s2870 + $0x10] sm:$0xf]
  %v2876 = vld [vmem:[%s2870 + $0x14] sm:$0xf]
  %v2877 = vld [vmem:[%s2870 + $0x18] sm:$0xf]
  %v2878 = vld [vmem:[%s2870 + $0x1c] sm:$0xf]
  %s2879 = scalar_lea.vmem %s16, 2
  %v2880 = vld [vmem:[%s2879] sm:$0x1]
  %v2882 = vlaneseq
  %v2883 = vshrl.u32 %v2882, 7
  %v2884 = vsub.s32 0, %v2883
  %v2885 = vrot.slane %v2880, %v2884
  %v2895 = vunpack.c.l.b16 %v2871
  %v2896 = vunpack.c.l.b16 %v2872
  %v2897 = vunpack.c.l.b16 %v2873
  %v2898 = vunpack.c.l.b16 %v2874
  %v2899 = vunpack.c.l.b16 %v2875
  %v2900 = vunpack.c.l.b16 %v2876
  %v2901 = vunpack.c.l.b16 %v2877
  %v2902 = vunpack.c.l.b16 %v2878
  %v2903 = vpack.c.b16 %v2896, %v2895
  %v2904 = vpack.c.b16 %v2898, %v2897
  %v2905 = vpack.c.b16 %v2900, %v2899
  %v2906 = vpack.c.b16 %v2902, %v2901
  %v2912 = vsel %vm1059, %v2867, 0
  %v2915 = vsel %vm1059, %v2868, 0
  %v2918 = vsel %vm1059, %v2869, 0
  %2920 = vmatprep.subr.bf16.mxu0 0
  %2921 = vmatpush1.bf16.msra.mxu0 0
  %2922 = vmatprep.subr.bf16.mxu0 0
  %2923 = vmatpush1.bf16.msra.mxu0 0
  %2924 = vmatprep.subr.bf16.mxu0 0
  %2925 = vmatpush1.bf16.msra.mxu0 0
  %2926 = vmatprep.subr.bf16.mxu0 0
  %2927 = vmatpush1.bf16.msra.mxu0 0
  %2928 = vmatprep.subr.bf16.mxu0 0
  %2929 = vmatpush1.bf16.msra.mxu0 %v2906
  %2930 = vmatprep.subr.bf16.mxu0 0
  %2931 = vmatpush1.bf16.msra.mxu0 %v2905
  %2932 = vmatprep.subr.bf16.mxu0 0
  %2933 = vmatpush1.bf16.msra.mxu0 %v2904
  %2934 = vmatprep.subr.bf16.mxu0 0
  %2935 = vmatpush1.bf16.msra.mxu0 %v2903
  %2936 = vmatprep.subr.bf16.mxu0 0
  %2937 = vmatpush2.bf16.msra.mxu0 0
  %2938 = vmatprep.subr.bf16.mxu0 0
  %2939 = vmatpush2.bf16.msra.mxu0 0
  %2940 = vmatprep.subr.bf16.mxu0 0
  %2941 = vmatpush2.bf16.msra.mxu0 0
  %2942 = vmatprep.subr.bf16.mxu0 0
  %2943 = vmatpush2.bf16.msra.mxu0 0
  %2944 = vmatprep.subr.bf16.mxu0 0
  %2945 = vmatpush2.bf16.msra.mxu0 0
  %2946 = vmatprep.subr.bf16.mxu0 0
  %2947 = vmatpush2.bf16.msra.mxu0 0
  %2948 = vmatprep.subr.bf16.mxu0 0
  %2949 = vmatpush2.bf16.msra.mxu0 0
  %2950 = vmatprep.subr.bf16.mxu0 0
  %2951 = vmatpush2.bf16.msra.mxu0 0
  %2952 = vmatprep.mubr.bf16.mxu0 0
  %2953 = vmatmul.mubr.bf16.gmra.mxu0 %v2912
  %v2954 = vpop.f32.mrf.mxu0
  %v2955 = vadd.f32 %v2885, %v2954
  %v2956 = vpop.f32.mrf.mxu0
  %v2957 = vpop.f32.mrf.mxu0
  %v2958 = vadd.f32 %v2885, %v2957
  %v2959 = vpop.f32.mrf.mxu0
  %2960 = vmatprep.mubr.bf16.mxu0 0
  %2961 = vmatmul.mubr.bf16.gmra.mxu0 %v2915
  %v2962 = vpop.f32.mrf.mxu0
  %v2963 = vadd.f32 %v2885, %v2962
  %v2964 = vpop.f32.mrf.mxu0
  %v2965 = vpop.f32.mrf.mxu0
  %v2966 = vadd.f32 %v2885, %v2965
  %v2967 = vpop.f32.mrf.mxu0
  %2968 = vmatprep.mubr.bf16.mxu0 0
  %2969 = vmatmul.mubr.bf16.gmra.mxu0 %v2918
  %v2970 = vpop.f32.mrf.mxu0
  %v2971 = vadd.f32 %v2885, %v2970
  %v2972 = vpop.f32.mrf.mxu0
  %v2973 = vpop.f32.mrf.mxu0
  %v2974 = vpop.f32.mrf.mxu0
  %2975 = vdwg.mxu0
  %v2976 = vtanh.pop %v2955
  %v2977 = vtanh.pop %v2958
  %v2978 = vtanh.pop %v2963
  %v2979 = vtanh.pop %v2966
  %v2980 = vtanh.pop %v2971
  %v2981 = vadd.f32 %v2637, %v2976
  %v2982 = vadd.f32 %v2638, %v2977
  %v2983 = vadd.f32 %v2639, %v2978
  %v2984 = vadd.f32 %v2640, %v2979
  %v2985 = vadd.f32 %v2641, %v2980
  %s2986 = scalar_lea.vmem %s18, 160
  %2987 = vst [vmem:[%s2986] sm:$0xff] %v2981
  %2988 = vst [vmem:[%s2986 + $0x8] sm:$0xff] %v2982
  %2989 = vst [vmem:[%s2986 + $0x10] sm:$0xff] %v2983
  %2990 = vst [vmem:[%s2986 + $0x18] sm:$0xff] %v2984
  %2991 = vst [vmem:[%s2986 + $0x20] sm:$0xff] %v2985
  %s2992 = scalar_lea.vmem %s8, 1
  %v2993 = vld [vmem:[%s2992] sm:$0x1]
  %v2995 = vsel %vm795, %v2993, 0
  %2997 = vmatprep.subr.mxu0 0.0
  %2998 = vmatpush1.msra.mxu0 0.0
  %2999 = vmatprep.subr.mxu0 0.0
  %3000 = vmatpush1.msra.mxu0 0.0
  %3001 = vmatprep.subr.mxu0 0.0
  %3002 = vmatpush1.msra.mxu0 0.0
  %3003 = vmatprep.subr.mxu0 0.0
  %3004 = vmatpush1.msra.mxu0 0.0
  %3005 = vmatprep.subr.mxu0 0.0
  %3006 = vmatpush1.msra.mxu0 0.0
  %3007 = vmatprep.subr.mxu0 0.0
  %3008 = vmatpush1.msra.mxu0 0.0
  %3009 = vmatprep.subr.mxu0 0.0
  %3010 = vmatpush1.msra.mxu0 0.0
  %3011 = vmatprep.subr.mxu0 0.0
  %3012 = vmatpush1.msra.mxu0 0.0
  %3013 = vmatprep.subr.mxu0 0.0
  %3014 = vmatpush1.msra.mxu0 0.0
  %3015 = vmatprep.subr.mxu0 0.0
  %3016 = vmatpush1.msra.mxu0 0.0
  %3017 = vmatprep.subr.mxu0 0.0
  %3018 = vmatpush1.msra.mxu0 0.0
  %3019 = vmatprep.subr.mxu0 0.0
  %3020 = vmatpush1.msra.mxu0 0.0
  %3021 = vmatprep.subr.mxu0 0.0
  %3022 = vmatpush1.msra.mxu0 0.0
  %3023 = vmatprep.subr.mxu0 0.0
  %3024 = vmatpush1.msra.mxu0 0.0
  %3025 = vmatprep.subr.mxu0 0.0
  %3026 = vmatpush1.msra.mxu0 0.0
  %3027 = vmatprep.subr.mxu0 0.0
  %3028 = vmatpush1.msra.mxu0 %v793
  %3029 = vmatprep.subr.mxu0 0.0
  %3030 = vmatpush2.msra.mxu0 0.0
  %3031 = vmatprep.subr.mxu0 0.0
  %3032 = vmatpush2.msra.mxu0 0.0
  %3033 = vmatprep.subr.mxu0 0.0
  %3034 = vmatpush2.msra.mxu0 0.0
  %3035 = vmatprep.subr.mxu0 0.0
  %3036 = vmatpush2.msra.mxu0 0.0
  %3037 = vmatprep.subr.mxu0 0.0
  %3038 = vmatpush2.msra.mxu0 0.0
  %3039 = vmatprep.subr.mxu0 0.0
  %3040 = vmatpush2.msra.mxu0 0.0
  %3041 = vmatprep.subr.mxu0 0.0
  %3042 = vmatpush2.msra.mxu0 0.0
  %3043 = vmatprep.subr.mxu0 0.0
  %3044 = vmatpush2.msra.mxu0 0.0
  %3045 = vmatprep.subr.mxu0 0.0
  %3046 = vmatpush2.msra.mxu0 0.0
  %3047 = vmatprep.subr.mxu0 0.0
  %3048 = vmatpush2.msra.mxu0 0.0
  %3049 = vmatprep.subr.mxu0 0.0
  %3050 = vmatpush2.msra.mxu0 0.0
  %3051 = vmatprep.subr.mxu0 0.0
  %3052 = vmatpush2.msra.mxu0 0.0
  %3053 = vmatprep.subr.mxu0 0.0
  %3054 = vmatpush2.msra.mxu0 0.0
  %3055 = vmatprep.subr.mxu0 0.0
  %3056 = vmatpush2.msra.mxu0 0.0
  %3057 = vmatprep.subr.mxu0 0.0
  %3058 = vmatpush2.msra.mxu0 0.0
  %3059 = vmatprep.subr.mxu0 0.0
  %3060 = vmatpush2.msra.mxu0 0.0
  %3061 = vmatprep.mubr.f32.mxu0 0.0
  %3062 = vmatmul.mubr.f32.gmra.mxu0 %v2995
  %v3063 = vpop.f32.mrf.mxu0
  %v3064 = vadd.f32 0.0, %v3063
  %v3065 = vpop.f32.mrf.mxu0
  %3066 = vdwg.mxu0
  %v3067 = vpack.c.bf16 %v3064, %v3064
  %v3068 = vld [vmem:[%s11] sm:$0xff]
  %v3069 = vld [vmem:[%s11 + $0x8] sm:$0xff]
  %v3070 = vld [vmem:[%s11 + $0x10] sm:$0xff]
  %v3071 = vld [vmem:[%s11 + $0x18] sm:$0xff]
  %v3072 = vld [vmem:[%s11 + $0x20] sm:$0xff]
  %v3073 = vld [vmem:[%s13] sm:$0xf]
  %v3074 = vld [vmem:[%s13 + $0x4] sm:$0xf]
  %v3075 = vld [vmem:[%s13 + $0x8] sm:$0xf]
  %v3076 = vld [vmem:[%s13 + $0xc] sm:$0xf]
  %v3077 = vld [vmem:[%s13 + $0x10] sm:$0xf]
  %v3078 = vld [vmem:[%s13 + $0x14] sm:$0xf]
  %v3079 = vld [vmem:[%s13 + $0x18] sm:$0xf]
  %v3080 = vld [vmem:[%s13 + $0x1c] sm:$0xf]
  %v3089 = vunpack.c.l.b16 %v3073
  %v3090 = vunpack.c.l.b16 %v3074
  %v3091 = vunpack.c.l.b16 %v3075
  %v3092 = vunpack.c.l.b16 %v3076
  %v3093 = vunpack.c.l.b16 %v3077
  %v3094 = vunpack.c.l.b16 %v3078
  %v3095 = vunpack.c.l.b16 %v3079
  %v3096 = vunpack.c.l.b16 %v3080
  %v3097 = vpack.c.b16 %v3090, %v3089
  %v3098 = vpack.c.b16 %v3092, %v3091
  %v3099 = vpack.c.b16 %v3094, %v3093
  %v3100 = vpack.c.b16 %v3096, %v3095
  %v3106 = vsel %vm1059, %v3067, 0
  %3108 = vmatprep.subr.bf16.mxu0 0
  %3109 = vmatpush1.bf16.msra.mxu0 0
  %3110 = vmatprep.subr.bf16.mxu0 0
  %3111 = vmatpush1.bf16.msra.mxu0 0
  %3112 = vmatprep.subr.bf16.mxu0 0
  %3113 = vmatpush1.bf16.msra.mxu0 0
  %3114 = vmatprep.subr.bf16.mxu0 0
  %3115 = vmatpush1.bf16.msra.mxu0 0
  %3116 = vmatprep.subr.bf16.mxu0 0
  %3117 = vmatpush1.bf16.msra.mxu0 %v3100
  %3118 = vmatprep.subr.bf16.mxu0 0
  %3119 = vmatpush1.bf16.msra.mxu0 %v3099
  %3120 = vmatprep.subr.bf16.mxu0 0
  %3121 = vmatpush1.bf16.msra.mxu0 %v3098
  %3122 = vmatprep.subr.bf16.mxu0 0
  %3123 = vmatpush1.bf16.msra.mxu0 %v3097
  %3124 = vmatprep.subr.bf16.mxu0 0
  %3125 = vmatpush2.bf16.msra.mxu0 0
  %3126 = vmatprep.subr.bf16.mxu0 0
  %3127 = vmatpush2.bf16.msra.mxu0 0
  %3128 = vmatprep.subr.bf16.mxu0 0
  %3129 = vmatpush2.bf16.msra.mxu0 0
  %3130 = vmatprep.subr.bf16.mxu0 0
  %3131 = vmatpush2.bf16.msra.mxu0 0
  %3132 = vmatprep.subr.bf16.mxu0 0
  %3133 = vmatpush2.bf16.msra.mxu0 0
  %3134 = vmatprep.subr.bf16.mxu0 0
  %3135 = vmatpush2.bf16.msra.mxu0 0
  %3136 = vmatprep.subr.bf16.mxu0 0
  %3137 = vmatpush2.bf16.msra.mxu0 0
  %3138 = vmatprep.subr.bf16.mxu0 0
  %3139 = vmatpush2.bf16.msra.mxu0 0
  %3140 = vmatprep.mubr.bf16.mxu0 0
  %3141 = vmatmul.mubr.bf16.gmra.mxu0 %v3106
  %v3142 = vpop.f32.mrf.mxu0
  %v3143 = vadd.f32 0.0, %v3142
  %v3144 = vpop.f32.mrf.mxu0
  %v3145 = vpop.f32.mrf.mxu0
  %v3146 = vpop.f32.mrf.mxu0
  %3147 = vdwg.mxu0
  %v3148 = vpack.c.bf16 %v3069, %v3068
  %v3149 = vpack.c.bf16 %v3071, %v3070
  %v3150 = vpack.c.bf16 %v3072, %v3072
  %v3151 = vld [vmem:[%s12] sm:$0xf]
  %v3152 = vld [vmem:[%s12 + $0x4] sm:$0xf]
  %v3153 = vld [vmem:[%s12 + $0x8] sm:$0xf]
  %v3154 = vld [vmem:[%s12 + $0xc] sm:$0xf]
  %v3155 = vld [vmem:[%s12 + $0x10] sm:$0xf]
  %v3156 = vld [vmem:[%s12 + $0x14] sm:$0xf]
  %v3157 = vld [vmem:[%s12 + $0x18] sm:$0xf]
  %v3158 = vld [vmem:[%s12 + $0x1c] sm:$0xf]
  %v3159 = vld [vmem:[%s12 + $0x20] sm:$0xf]
  %v3160 = vld [vmem:[%s12 + $0x24] sm:$0xf]
  %v3161 = vld [vmem:[%s12 + $0x28] sm:$0xf]
  %v3162 = vld [vmem:[%s12 + $0x2c] sm:$0xf]
  %v3163 = vld [vmem:[%s12 + $0x30] sm:$0xf]
  %v3164 = vld [vmem:[%s12 + $0x34] sm:$0xf]
  %v3165 = vld [vmem:[%s12 + $0x38] sm:$0xf]
  %v3166 = vld [vmem:[%s12 + $0x3c] sm:$0xf]
  %v3167 = vlaneseq
  %v3168 = vshrl.u32 %v3167, 7
  %v3169 = vsub.s32 0, %v3168
  %v3170 = vrot.slane %v3143, %v3169
  %v3187 = vunpack.c.l.b16 %v3151
  %v3188 = vunpack.c.l.b16 %v3152
  %v3189 = vunpack.c.l.b16 %v3153
  %v3190 = vunpack.c.l.b16 %v3154
  %v3191 = vunpack.c.l.b16 %v3155
  %v3192 = vunpack.c.l.b16 %v3156
  %v3193 = vunpack.c.l.b16 %v3157
  %v3194 = vunpack.c.l.b16 %v3158
  %v3195 = vunpack.c.l.b16 %v3159
  %v3196 = vunpack.c.l.b16 %v3160
  %v3197 = vunpack.c.l.b16 %v3161
  %v3198 = vunpack.c.l.b16 %v3162
  %v3199 = vunpack.c.l.b16 %v3163
  %v3200 = vunpack.c.l.b16 %v3164
  %v3201 = vunpack.c.l.b16 %v3165
  %v3202 = vunpack.c.l.b16 %v3166
  %v3203 = vpack.c.b16 %v3188, %v3187
  %v3204 = vpack.c.b16 %v3190, %v3189
  %v3205 = vpack.c.b16 %v3192, %v3191
  %v3206 = vpack.c.b16 %v3194, %v3193
  %v3207 = vpack.c.b16 %v3196, %v3195
  %v3208 = vpack.c.b16 %v3198, %v3197
  %v3209 = vpack.c.b16 %v3200, %v3199
  %v3210 = vpack.c.b16 %v3202, %v3201
  %3219 = vmatprep.subr.bf16.mxu0 0
  %3220 = vmatpush1.bf16.msra.mxu0 %v3210
  %3221 = vmatprep.subr.bf16.mxu0 0
  %3222 = vmatpush1.bf16.msra.mxu0 %v3209
  %3223 = vmatprep.subr.bf16.mxu0 0
  %3224 = vmatpush1.bf16.msra.mxu0 %v3208
  %3225 = vmatprep.subr.bf16.mxu0 0
  %3226 = vmatpush1.bf16.msra.mxu0 %v3207
  %3227 = vmatprep.subr.bf16.mxu0 0
  %3228 = vmatpush1.bf16.msra.mxu0 %v3206
  %3229 = vmatprep.subr.bf16.mxu0 0
  %3230 = vmatpush1.bf16.msra.mxu0 %v3205
  %3231 = vmatprep.subr.bf16.mxu0 0
  %3232 = vmatpush1.bf16.msra.mxu0 %v3204
  %3233 = vmatprep.subr.bf16.mxu0 0
  %3234 = vmatpush1.bf16.msra.mxu0 %v3203
  %3235 = vmatprep.subr.bf16.mxu0 0
  %3236 = vmatpush2.bf16.msra.mxu0 0
  %3237 = vmatprep.subr.bf16.mxu0 0
  %3238 = vmatpush2.bf16.msra.mxu0 0
  %3239 = vmatprep.subr.bf16.mxu0 0
  %3240 = vmatpush2.bf16.msra.mxu0 0
  %3241 = vmatprep.subr.bf16.mxu0 0
  %3242 = vmatpush2.bf16.msra.mxu0 0
  %3243 = vmatprep.subr.bf16.mxu0 0
  %3244 = vmatpush2.bf16.msra.mxu0 0
  %3245 = vmatprep.subr.bf16.mxu0 0
  %3246 = vmatpush2.bf16.msra.mxu0 0
  %3247 = vmatprep.subr.bf16.mxu0 0
  %3248 = vmatpush2.bf16.msra.mxu0 0
  %3249 = vmatprep.subr.bf16.mxu0 0
  %3250 = vmatpush2.bf16.msra.mxu0 0
  %3251 = vmatprep.mubr.bf16.mxu0 0
  %3252 = vmatmul.mubr.bf16.gmra.mxu0 %v3148
  %v3253 = vpop.f32.mrf.mxu0
  %v3254 = vadd.f32 %v3170, %v3253
  %v3255 = vpop.f32.mrf.mxu0
  %v3256 = vpop.f32.mrf.mxu0
  %v3257 = vadd.f32 %v3170, %v3256
  %v3258 = vpop.f32.mrf.mxu0
  %3259 = vmatprep.mubr.bf16.mxu0 0
  %3260 = vmatmul.mubr.bf16.gmra.mxu0 %v3149
  %v3261 = vpop.f32.mrf.mxu0
  %v3262 = vadd.f32 %v3170, %v3261
  %v3263 = vpop.f32.mrf.mxu0
  %v3264 = vpop.f32.mrf.mxu0
  %v3265 = vadd.f32 %v3170, %v3264
  %v3266 = vpop.f32.mrf.mxu0
  %3267 = vmatprep.mubr.bf16.mxu0 0
  %3268 = vmatmul.mubr.bf16.gmra.mxu0 %v3150
  %v3269 = vpop.f32.mrf.mxu0
  %v3270 = vadd.f32 %v3170, %v3269
  %v3271 = vpop.f32.mrf.mxu0
  %v3272 = vpop.f32.mrf.mxu0
  %v3273 = vpop.f32.mrf.mxu0
  %3274 = vdwg.mxu0
  %v3275 = vld [vmem:[%s14] sm:$0x1]
  %v3277 = vlaneseq
  %v3278 = vshrl.u32 %v3277, 7
  %v3279 = vsub.s32 0, %v3278
  %v3280 = vrot.slane %v3275, %v3279
  %v3282 = vadd.f32 %v3254, %v3280
  %v3283 = vadd.f32 %v3257, %v3280
  %v3284 = vadd.f32 %v3262, %v3280
  %v3285 = vadd.f32 %v3265, %v3280
  %v3286 = vadd.f32 %v3270, %v3280
  %v3287 = vmax.f32 %v3282, 0.0
  %v3288 = vmax.f32 %v3283, 0.0
  %v3289 = vmax.f32 %v3284, 0.0
  %v3290 = vmax.f32 %v3285, 0.0
  %v3291 = vmax.f32 %v3286, 0.0
  %v3292 = vpack.c.bf16 %v3288, %v3287
  %v3293 = vpack.c.bf16 %v3290, %v3289
  %v3294 = vpack.c.bf16 %v3291, %v3291
  %v3295 = vld [vmem:[%s15] sm:$0xf]
  %v3296 = vld [vmem:[%s15 + $0x4] sm:$0xf]
  %v3297 = vld [vmem:[%s15 + $0x8] sm:$0xf]
  %v3298 = vld [vmem:[%s15 + $0xc] sm:$0xf]
  %v3299 = vld [vmem:[%s15 + $0x10] sm:$0xf]
  %v3300 = vld [vmem:[%s15 + $0x14] sm:$0xf]
  %v3301 = vld [vmem:[%s15 + $0x18] sm:$0xf]
  %v3302 = vld [vmem:[%s15 + $0x1c] sm:$0xf]
  %v3303 = vld [vmem:[%s16] sm:$0x1]
  %v3305 = vlaneseq
  %v3306 = vshrl.u32 %v3305, 7
  %v3307 = vsub.s32 0, %v3306
  %v3308 = vrot.slane %v3303, %v3307
  %v3318 = vunpack.c.l.b16 %v3295
  %v3319 = vunpack.c.l.b16 %v3296
  %v3320 = vunpack.c.l.b16 %v3297
  %v3321 = vunpack.c.l.b16 %v3298
  %v3322 = vunpack.c.l.b16 %v3299
  %v3323 = vunpack.c.l.b16 %v3300
  %v3324 = vunpack.c.l.b16 %v3301
  %v3325 = vunpack.c.l.b16 %v3302
  %v3326 = vpack.c.b16 %v3319, %v3318
  %v3327 = vpack.c.b16 %v3321, %v3320
  %v3328 = vpack.c.b16 %v3323, %v3322
  %v3329 = vpack.c.b16 %v3325, %v3324
  %v3335 = vsel %vm1059, %v3292, 0
  %v3338 = vsel %vm1059, %v3293, 0
  %v3341 = vsel %vm1059, %v3294, 0
  %3343 = vmatprep.subr.bf16.mxu0 0
  %3344 = vmatpush1.bf16.msra.mxu0 0
  %3345 = vmatprep.subr.bf16.mxu0 0
  %3346 = vmatpush1.bf16.msra.mxu0 0
  %3347 = vmatprep.subr.bf16.mxu0 0
  %3348 = vmatpush1.bf16.msra.mxu0 0
  %3349 = vmatprep.subr.bf16.mxu0 0
  %3350 = vmatpush1.bf16.msra.mxu0 0
  %3351 = vmatprep.subr.bf16.mxu0 0
  %3352 = vmatpush1.bf16.msra.mxu0 %v3329
  %3353 = vmatprep.subr.bf16.mxu0 0
  %3354 = vmatpush1.bf16.msra.mxu0 %v3328
  %3355 = vmatprep.subr.bf16.mxu0 0
  %3356 = vmatpush1.bf16.msra.mxu0 %v3327
  %3357 = vmatprep.subr.bf16.mxu0 0
  %3358 = vmatpush1.bf16.msra.mxu0 %v3326
  %3359 = vmatprep.subr.bf16.mxu0 0
  %3360 = vmatpush2.bf16.msra.mxu0 0
  %3361 = vmatprep.subr.bf16.mxu0 0
  %3362 = vmatpush2.bf16.msra.mxu0 0
  %3363 = vmatprep.subr.bf16.mxu0 0
  %3364 = vmatpush2.bf16.msra.mxu0 0
  %3365 = vmatprep.subr.bf16.mxu0 0
  %3366 = vmatpush2.bf16.msra.mxu0 0
  %3367 = vmatprep.subr.bf16.mxu0 0
  %3368 = vmatpush2.bf16.msra.mxu0 0
  %3369 = vmatprep.subr.bf16.mxu0 0
  %3370 = vmatpush2.bf16.msra.mxu0 0
  %3371 = vmatprep.subr.bf16.mxu0 0
  %3372 = vmatpush2.bf16.msra.mxu0 0
  %3373 = vmatprep.subr.bf16.mxu0 0
  %3374 = vmatpush2.bf16.msra.mxu0 0
  %3375 = vmatprep.mubr.bf16.mxu0 0
  %3376 = vmatmul.mubr.bf16.gmra.mxu0 %v3335
  %v3377 = vpop.f32.mrf.mxu0
  %v3378 = vadd.f32 %v3308, %v3377
  %v3379 = vpop.f32.mrf.mxu0
  %v3380 = vpop.f32.mrf.mxu0
  %v3381 = vadd.f32 %v3308, %v3380
  %v3382 = vpop.f32.mrf.mxu0
  %3383 = vmatprep.mubr.bf16.mxu0 0
  %3384 = vmatmul.mubr.bf16.gmra.mxu0 %v3338
  %v3385 = vpop.f32.mrf.mxu0
  %v3386 = vadd.f32 %v3308, %v3385
  %v3387 = vpop.f32.mrf.mxu0
  %v3388 = vpop.f32.mrf.mxu0
  %v3389 = vadd.f32 %v3308, %v3388
  %v3390 = vpop.f32.mrf.mxu0
  %3391 = vmatprep.mubr.bf16.mxu0 0
  %3392 = vmatmul.mubr.bf16.gmra.mxu0 %v3341
  %v3393 = vpop.f32.mrf.mxu0
  %v3394 = vadd.f32 %v3308, %v3393
  %v3395 = vpop.f32.mrf.mxu0
  %v3396 = vpop.f32.mrf.mxu0
  %v3397 = vpop.f32.mrf.mxu0
  %3398 = vdwg.mxu0
  %v3399 = vtanh.pop %v3378
  %v3400 = vtanh.pop %v3381
  %v3401 = vtanh.pop %v3386
  %v3402 = vtanh.pop %v3389
  %v3403 = vtanh.pop %v3394
  %v3404 = vadd.f32 %v3068, %v3399
  %v3405 = vadd.f32 %v3069, %v3400
  %v3406 = vadd.f32 %v3070, %v3401
  %v3407 = vadd.f32 %v3071, %v3402
  %v3408 = vadd.f32 %v3072, %v3403
  %3409 = vst [vmem:[%s18 + $0x28] sm:$0xff] %v3404
  %3410 = vst [vmem:[%s18 + $0x30] sm:$0xff] %v3405
  %3411 = vst [vmem:[%s18 + $0x38] sm:$0xff] %v3406
  %3412 = vst [vmem:[%s18 + $0x40] sm:$0xff] %v3407
  %3413 = vst [vmem:[%s18 + $0x48] sm:$0xff] %v3408
  %v3414 = vld [vmem:[%s2304] sm:$0xf]
  %v3415 = vld [vmem:[%s2304 + $0x4] sm:$0xf]
  %v3416 = vld [vmem:[%s2304 + $0x8] sm:$0xf]
  %v3417 = vld [vmem:[%s2304 + $0xc] sm:$0xf]
  %v3418 = vld [vmem:[%s2304 + $0x10] sm:$0xf]
  %v3419 = vld [vmem:[%s2304 + $0x14] sm:$0xf]
  %v3420 = vld [vmem:[%s2304 + $0x18] sm:$0xf]
  %v3421 = vld [vmem:[%s2304 + $0x1c] sm:$0xf]
  %v3430 = vunpack.c.l.b16 %v3414
  %v3431 = vunpack.c.l.b16 %v3415
  %v3432 = vunpack.c.l.b16 %v3416
  %v3433 = vunpack.c.l.b16 %v3417
  %v3434 = vunpack.c.l.b16 %v3418
  %v3435 = vunpack.c.l.b16 %v3419
  %v3436 = vunpack.c.l.b16 %v3420
  %v3437 = vunpack.c.l.b16 %v3421
  %v3438 = vpack.c.b16 %v3431, %v3430
  %v3439 = vpack.c.b16 %v3433, %v3432
  %v3440 = vpack.c.b16 %v3435, %v3434
  %v3441 = vpack.c.b16 %v3437, %v3436
  %3446 = vmatprep.subr.bf16.mxu0 0
  %3447 = vmatpush1.bf16.msra.mxu0 0
  %3448 = vmatprep.subr.bf16.mxu0 0
  %3449 = vmatpush1.bf16.msra.mxu0 0
  %3450 = vmatprep.subr.bf16.mxu0 0
  %3451 = vmatpush1.bf16.msra.mxu0 0
  %3452 = vmatprep.subr.bf16.mxu0 0
  %3453 = vmatpush1.bf16.msra.mxu0 0
  %3454 = vmatprep.subr.bf16.mxu0 0
  %3455 = vmatpush1.bf16.msra.mxu0 %v3441
  %3456 = vmatprep.subr.bf16.mxu0 0
  %3457 = vmatpush1.bf16.msra.mxu0 %v3440
  %3458 = vmatprep.subr.bf16.mxu0 0
  %3459 = vmatpush1.bf16.msra.mxu0 %v3439
  %3460 = vmatprep.subr.bf16.mxu0 0
  %3461 = vmatpush1.bf16.msra.mxu0 %v3438
  %3462 = vmatprep.subr.bf16.mxu0 0
  %3463 = vmatpush2.bf16.msra.mxu0 0
  %3464 = vmatprep.subr.bf16.mxu0 0
  %3465 = vmatpush2.bf16.msra.mxu0 0
  %3466 = vmatprep.subr.bf16.mxu0 0
  %3467 = vmatpush2.bf16.msra.mxu0 0
  %3468 = vmatprep.subr.bf16.mxu0 0
  %3469 = vmatpush2.bf16.msra.mxu0 0
  %3470 = vmatprep.subr.bf16.mxu0 0
  %3471 = vmatpush2.bf16.msra.mxu0 0
  %3472 = vmatprep.subr.bf16.mxu0 0
  %3473 = vmatpush2.bf16.msra.mxu0 0
  %3474 = vmatprep.subr.bf16.mxu0 0
  %3475 = vmatpush2.bf16.msra.mxu0 0
  %3476 = vmatprep.subr.bf16.mxu0 0
  %3477 = vmatpush2.bf16.msra.mxu0 0
  %3478 = vmatprep.mubr.bf16.mxu0 0
  %3479 = vmatmul.mubr.bf16.gmra.mxu0 %v3106
  %v3480 = vpop.f32.mrf.mxu0
  %v3481 = vadd.f32 0.0, %v3480
  %v3482 = vpop.f32.mrf.mxu0
  %v3483 = vpop.f32.mrf.mxu0
  %v3484 = vpop.f32.mrf.mxu0
  %3485 = vdwg.mxu0
  %v3486 = vpack.c.bf16 %v3405, %v3404
  %v3487 = vpack.c.bf16 %v3407, %v3406
  %v3488 = vpack.c.bf16 %v3408, %v3408
  %v3489 = vld [vmem:[%s2380] sm:$0xf]
  %v3490 = vld [vmem:[%s2380 + $0x4] sm:$0xf]
  %v3491 = vld [vmem:[%s2380 + $0x8] sm:$0xf]
  %v3492 = vld [vmem:[%s2380 + $0xc] sm:$0xf]
  %v3493 = vld [vmem:[%s2380 + $0x10] sm:$0xf]
  %v3494 = vld [vmem:[%s2380 + $0x14] sm:$0xf]
  %v3495 = vld [vmem:[%s2380 + $0x18] sm:$0xf]
  %v3496 = vld [vmem:[%s2380 + $0x1c] sm:$0xf]
  %v3497 = vld [vmem:[%s2380 + $0x20] sm:$0xf]
  %v3498 = vld [vmem:[%s2380 + $0x24] sm:$0xf]
  %v3499 = vld [vmem:[%s2380 + $0x28] sm:$0xf]
  %v3500 = vld [vmem:[%s2380 + $0x2c] sm:$0xf]
  %v3501 = vld [vmem:[%s2380 + $0x30] sm:$0xf]
  %v3502 = vld [vmem:[%s2380 + $0x34] sm:$0xf]
  %v3503 = vld [vmem:[%s2380 + $0x38] sm:$0xf]
  %v3504 = vld [vmem:[%s2380 + $0x3c] sm:$0xf]
  %v3505 = vlaneseq
  %v3506 = vshrl.u32 %v3505, 7
  %v3507 = vsub.s32 0, %v3506
  %v3508 = vrot.slane %v3481, %v3507
  %v3525 = vunpack.c.l.b16 %v3489
  %v3526 = vunpack.c.l.b16 %v3490
  %v3527 = vunpack.c.l.b16 %v3491
  %v3528 = vunpack.c.l.b16 %v3492
  %v3529 = vunpack.c.l.b16 %v3493
  %v3530 = vunpack.c.l.b16 %v3494
  %v3531 = vunpack.c.l.b16 %v3495
  %v3532 = vunpack.c.l.b16 %v3496
  %v3533 = vunpack.c.l.b16 %v3497
  %v3534 = vunpack.c.l.b16 %v3498
  %v3535 = vunpack.c.l.b16 %v3499
  %v3536 = vunpack.c.l.b16 %v3500
  %v3537 = vunpack.c.l.b16 %v3501
  %v3538 = vunpack.c.l.b16 %v3502
  %v3539 = vunpack.c.l.b16 %v3503
  %v3540 = vunpack.c.l.b16 %v3504
  %v3541 = vpack.c.b16 %v3526, %v3525
  %v3542 = vpack.c.b16 %v3528, %v3527
  %v3543 = vpack.c.b16 %v3530, %v3529
  %v3544 = vpack.c.b16 %v3532, %v3531
  %v3545 = vpack.c.b16 %v3534, %v3533
  %v3546 = vpack.c.b16 %v3536, %v3535
  %v3547 = vpack.c.b16 %v3538, %v3537
  %v3548 = vpack.c.b16 %v3540, %v3539
  %3557 = vmatprep.subr.bf16.mxu0 0
  %3558 = vmatpush1.bf16.msra.mxu0 %v3548
  %3559 = vmatprep.subr.bf16.mxu0 0
  %3560 = vmatpush1.bf16.msra.mxu0 %v3547
  %3561 = vmatprep.subr.bf16.mxu0 0
  %3562 = vmatpush1.bf16.msra.mxu0 %v3546
  %3563 = vmatprep.subr.bf16.mxu0 0
  %3564 = vmatpush1.bf16.msra.mxu0 %v3545
  %3565 = vmatprep.subr.bf16.mxu0 0
  %3566 = vmatpush1.bf16.msra.mxu0 %v3544
  %3567 = vmatprep.subr.bf16.mxu0 0
  %3568 = vmatpush1.bf16.msra.mxu0 %v3543
  %3569 = vmatprep.subr.bf16.mxu0 0
  %3570 = vmatpush1.bf16.msra.mxu0 %v3542
  %3571 = vmatprep.subr.bf16.mxu0 0
  %3572 = vmatpush1.bf16.msra.mxu0 %v3541
  %3573 = vmatprep.subr.bf16.mxu0 0
  %3574 = vmatpush2.bf16.msra.mxu0 0
  %3575 = vmatprep.subr.bf16.mxu0 0
  %3576 = vmatpush2.bf16.msra.mxu0 0
  %3577 = vmatprep.subr.bf16.mxu0 0
  %3578 = vmatpush2.bf16.msra.mxu0 0
  %3579 = vmatprep.subr.bf16.mxu0 0
  %3580 = vmatpush2.bf16.msra.mxu0 0
  %3581 = vmatprep.subr.bf16.mxu0 0
  %3582 = vmatpush2.bf16.msra.mxu0 0
  %3583 = vmatprep.subr.bf16.mxu0 0
  %3584 = vmatpush2.bf16.msra.mxu0 0
  %3585 = vmatprep.subr.bf16.mxu0 0
  %3586 = vmatpush2.bf16.msra.mxu0 0
  %3587 = vmatprep.subr.bf16.mxu0 0
  %3588 = vmatpush2.bf16.msra.mxu0 0
  %3589 = vmatprep.mubr.bf16.mxu0 0
  %3590 = vmatmul.mubr.bf16.gmra.mxu0 %v3486
  %v3591 = vpop.f32.mrf.mxu0
  %v3592 = vadd.f32 %v3508, %v3591
  %v3593 = vpop.f32.mrf.mxu0
  %v3594 = vpop.f32.mrf.mxu0
  %v3595 = vadd.f32 %v3508, %v3594
  %v3596 = vpop.f32.mrf.mxu0
  %3597 = vmatprep.mubr.bf16.mxu0 0
  %3598 = vmatmul.mubr.bf16.gmra.mxu0 %v3487
  %v3599 = vpop.f32.mrf.mxu0
  %v3600 = vadd.f32 %v3508, %v3599
  %v3601 = vpop.f32.mrf.mxu0
  %v3602 = vpop.f32.mrf.mxu0
  %v3603 = vadd.f32 %v3508, %v3602
  %v3604 = vpop.f32.mrf.mxu0
  %3605 = vmatprep.mubr.bf16.mxu0 0
  %3606 = vmatmul.mubr.bf16.gmra.mxu0 %v3488
  %v3607 = vpop.f32.mrf.mxu0
  %v3608 = vadd.f32 %v3508, %v3607
  %v3609 = vpop.f32.mrf.mxu0
  %v3610 = vpop.f32.mrf.mxu0
  %v3611 = vpop.f32.mrf.mxu0
  %3612 = vdwg.mxu0
  %v3613 = vld [vmem:[%s2505] sm:$0x1]
  %v3615 = vlaneseq
  %v3616 = vshrl.u32 %v3615, 7
  %v3617 = vsub.s32 0, %v3616
  %v3618 = vrot.slane %v3613, %v3617
  %v3620 = vadd.f32 %v3592, %v3618
  %v3621 = vadd.f32 %v3595, %v3618
  %v3622 = vadd.f32 %v3600, %v3618
  %v3623 = vadd.f32 %v3603, %v3618
  %v3624 = vadd.f32 %v3608, %v3618
  %v3625 = vmax.f32 %v3620, 0.0
  %v3626 = vmax.f32 %v3621, 0.0
  %v3627 = vmax.f32 %v3622, 0.0
  %v3628 = vmax.f32 %v3623, 0.0
  %v3629 = vmax.f32 %v3624, 0.0
  %v3630 = vpack.c.bf16 %v3626, %v3625
  %v3631 = vpack.c.bf16 %v3628, %v3627
  %v3632 = vpack.c.bf16 %v3629, %v3629
  %v3633 = vld [vmem:[%s2526] sm:$0xf]
  %v3634 = vld [vmem:[%s2526 + $0x4] sm:$0xf]
  %v3635 = vld [vmem:[%s2526 + $0x8] sm:$0xf]
  %v3636 = vld [vmem:[%s2526 + $0xc] sm:$0xf]
  %v3637 = vld [vmem:[%s2526 + $0x10] sm:$0xf]
  %v3638 = vld [vmem:[%s2526 + $0x14] sm:$0xf]
  %v3639 = vld [vmem:[%s2526 + $0x18] sm:$0xf]
  %v3640 = vld [vmem:[%s2526 + $0x1c] sm:$0xf]
  %v3641 = vld [vmem:[%s2535] sm:$0x1]
  %v3643 = vlaneseq
  %v3644 = vshrl.u32 %v3643, 7
  %v3645 = vsub.s32 0, %v3644
  %v3646 = vrot.slane %v3641, %v3645
  %v3656 = vunpack.c.l.b16 %v3633
  %v3657 = vunpack.c.l.b16 %v3634
  %v3658 = vunpack.c.l.b16 %v3635
  %v3659 = vunpack.c.l.b16 %v3636
  %v3660 = vunpack.c.l.b16 %v3637
  %v3661 = vunpack.c.l.b16 %v3638
  %v3662 = vunpack.c.l.b16 %v3639
  %v3663 = vunpack.c.l.b16 %v3640
  %v3664 = vpack.c.b16 %v3657, %v3656
  %v3665 = vpack.c.b16 %v3659, %v3658
  %v3666 = vpack.c.b16 %v3661, %v3660
  %v3667 = vpack.c.b16 %v3663, %v3662
  %v3673 = vsel %vm1059, %v3630, 0
  %v3676 = vsel %vm1059, %v3631, 0
  %v3679 = vsel %vm1059, %v3632, 0
  %3681 = vmatprep.subr.bf16.mxu0 0
  %3682 = vmatpush1.bf16.msra.mxu0 0
  %3683 = vmatprep.subr.bf16.mxu0 0
  %3684 = vmatpush1.bf16.msra.mxu0 0
  %3685 = vmatprep.subr.bf16.mxu0 0
  %3686 = vmatpush1.bf16.msra.mxu0 0
  %3687 = vmatprep.subr.bf16.mxu0 0
  %3688 = vmatpush1.bf16.msra.mxu0 0
  %3689 = vmatprep.subr.bf16.mxu0 0
  %3690 = vmatpush1.bf16.msra.mxu0 %v3667
  %3691 = vmatprep.subr.bf16.mxu0 0
  %3692 = vmatpush1.bf16.msra.mxu0 %v3666
  %3693 = vmatprep.subr.bf16.mxu0 0
  %3694 = vmatpush1.bf16.msra.mxu0 %v3665
  %3695 = vmatprep.subr.bf16.mxu0 0
  %3696 = vmatpush1.bf16.msra.mxu0 %v3664
  %3697 = vmatprep.subr.bf16.mxu0 0
  %3698 = vmatpush2.bf16.msra.mxu0 0
  %3699 = vmatprep.subr.bf16.mxu0 0
  %3700 = vmatpush2.bf16.msra.mxu0 0
  %3701 = vmatprep.subr.bf16.mxu0 0
  %3702 = vmatpush2.bf16.msra.mxu0 0
  %3703 = vmatprep.subr.bf16.mxu0 0
  %3704 = vmatpush2.bf16.msra.mxu0 0
  %3705 = vmatprep.subr.bf16.mxu0 0
  %3706 = vmatpush2.bf16.msra.mxu0 0
  %3707 = vmatprep.subr.bf16.mxu0 0
  %3708 = vmatpush2.bf16.msra.mxu0 0
  %3709 = vmatprep.subr.bf16.mxu0 0
  %3710 = vmatpush2.bf16.msra.mxu0 0
  %3711 = vmatprep.subr.bf16.mxu0 0
  %3712 = vmatpush2.bf16.msra.mxu0 0
  %3713 = vmatprep.mubr.bf16.mxu0 0
  %3714 = vmatmul.mubr.bf16.gmra.mxu0 %v3673
  %v3715 = vpop.f32.mrf.mxu0
  %v3716 = vadd.f32 %v3646, %v3715
  %v3717 = vpop.f32.mrf.mxu0
  %v3718 = vpop.f32.mrf.mxu0
  %v3719 = vadd.f32 %v3646, %v3718
  %v3720 = vpop.f32.mrf.mxu0
  %3721 = vmatprep.mubr.bf16.mxu0 0
  %3722 = vmatmul.mubr.bf16.gmra.mxu0 %v3676
  %v3723 = vpop.f32.mrf.mxu0
  %v3724 = vadd.f32 %v3646, %v3723
  %v3725 = vpop.f32.mrf.mxu0
  %v3726 = vpop.f32.mrf.mxu0
  %v3727 = vadd.f32 %v3646, %v3726
  %v3728 = vpop.f32.mrf.mxu0
  %3729 = vmatprep.mubr.bf16.mxu0 0
  %3730 = vmatmul.mubr.bf16.gmra.mxu0 %v3679
  %v3731 = vpop.f32.mrf.mxu0
  %v3732 = vadd.f32 %v3646, %v3731
  %v3733 = vpop.f32.mrf.mxu0
  %v3734 = vpop.f32.mrf.mxu0
  %v3735 = vpop.f32.mrf.mxu0
  %3736 = vdwg.mxu0
  %v3737 = vtanh.pop %v3716
  %v3738 = vtanh.pop %v3719
  %v3739 = vtanh.pop %v3724
  %v3740 = vtanh.pop %v3727
  %v3741 = vtanh.pop %v3732
  %v3742 = vadd.f32 %v3404, %v3737
  %v3743 = vadd.f32 %v3405, %v3738
  %v3744 = vadd.f32 %v3406, %v3739
  %v3745 = vadd.f32 %v3407, %v3740
  %v3746 = vadd.f32 %v3408, %v3741
  %3747 = vst [vmem:[%s2642 + $0x28] sm:$0xff] %v3742
  %3748 = vst [vmem:[%s2642 + $0x30] sm:$0xff] %v3743
  %3749 = vst [vmem:[%s2642 + $0x38] sm:$0xff] %v3744
  %3750 = vst [vmem:[%s2642 + $0x40] sm:$0xff] %v3745
  %3751 = vst [vmem:[%s2642 + $0x48] sm:$0xff] %v3746
  %v3752 = vld [vmem:[%s2648] sm:$0xf]
  %v3753 = vld [vmem:[%s2648 + $0x4] sm:$0xf]
  %v3754 = vld [vmem:[%s2648 + $0x8] sm:$0xf]
  %v3755 = vld [vmem:[%s2648 + $0xc] sm:$0xf]
  %v3756 = vld [vmem:[%s2648 + $0x10] sm:$0xf]
  %v3757 = vld [vmem:[%s2648 + $0x14] sm:$0xf]
  %v3758 = vld [vmem:[%s2648 + $0x18] sm:$0xf]
  %v3759 = vld [vmem:[%s2648 + $0x1c] sm:$0xf]
  %v3768 = vunpack.c.l.b16 %v3752
  %v3769 = vunpack.c.l.b16 %v3753
  %v3770 = vunpack.c.l.b16 %v3754
  %v3771 = vunpack.c.l.b16 %v3755
  %v3772 = vunpack.c.l.b16 %v3756
  %v3773 = vunpack.c.l.b16 %v3757
  %v3774 = vunpack.c.l.b16 %v3758
  %v3775 = vunpack.c.l.b16 %v3759
  %v3776 = vpack.c.b16 %v3769, %v3768
  %v3777 = vpack.c.b16 %v3771, %v3770
  %v3778 = vpack.c.b16 %v3773, %v3772
  %v3779 = vpack.c.b16 %v3775, %v3774
  %3784 = vmatprep.subr.bf16.mxu0 0
  %3785 = vmatpush1.bf16.msra.mxu0 0
  %3786 = vmatprep.subr.bf16.mxu0 0
  %3787 = vmatpush1.bf16.msra.mxu0 0
  %3788 = vmatprep.subr.bf16.mxu0 0
  %3789 = vmatpush1.bf16.msra.mxu0 0
  %3790 = vmatprep.subr.bf16.mxu0 0
  %3791 = vmatpush1.bf16.msra.mxu0 0
  %3792 = vmatprep.subr.bf16.mxu0 0
  %3793 = vmatpush1.bf16.msra.mxu0 %v3779
  %3794 = vmatprep.subr.bf16.mxu0 0
  %3795 = vmatpush1.bf16.msra.mxu0 %v3778
  %3796 = vmatprep.subr.bf16.mxu0 0
  %3797 = vmatpush1.bf16.msra.mxu0 %v3777
  %3798 = vmatprep.subr.bf16.mxu0 0
  %3799 = vmatpush1.bf16.msra.mxu0 %v3776
  %3800 = vmatprep.subr.bf16.mxu0 0
  %3801 = vmatpush2.bf16.msra.mxu0 0
  %3802 = vmatprep.subr.bf16.mxu0 0
  %3803 = vmatpush2.bf16.msra.mxu0 0
  %3804 = vmatprep.subr.bf16.mxu0 0
  %3805 = vmatpush2.bf16.msra.mxu0 0
  %3806 = vmatprep.subr.bf16.mxu0 0
  %3807 = vmatpush2.bf16.msra.mxu0 0
  %3808 = vmatprep.subr.bf16.mxu0 0
  %3809 = vmatpush2.bf16.msra.mxu0 0
  %3810 = vmatprep.subr.bf16.mxu0 0
  %3811 = vmatpush2.bf16.msra.mxu0 0
  %3812 = vmatprep.subr.bf16.mxu0 0
  %3813 = vmatpush2.bf16.msra.mxu0 0
  %3814 = vmatprep.subr.bf16.mxu0 0
  %3815 = vmatpush2.bf16.msra.mxu0 0
  %3816 = vmatprep.mubr.bf16.mxu0 0
  %3817 = vmatmul.mubr.bf16.gmra.mxu0 %v3106
  %v3818 = vpop.f32.mrf.mxu0
  %v3819 = vadd.f32 0.0, %v3818
  %v3820 = vpop.f32.mrf.mxu0
  %v3821 = vpop.f32.mrf.mxu0
  %v3822 = vpop.f32.mrf.mxu0
  %3823 = vdwg.mxu0
  %v3824 = vpack.c.bf16 %v3743, %v3742
  %v3825 = vpack.c.bf16 %v3745, %v3744
  %v3826 = vpack.c.bf16 %v3746, %v3746
  %v3827 = vld [vmem:[%s2724] sm:$0xf]
  %v3828 = vld [vmem:[%s2724 + $0x4] sm:$0xf]
  %v3829 = vld [vmem:[%s2724 + $0x8] sm:$0xf]
  %v3830 = vld [vmem:[%s2724 + $0xc] sm:$0xf]
  %v3831 = vld [vmem:[%s2724 + $0x10] sm:$0xf]
  %v3832 = vld [vmem:[%s2724 + $0x14] sm:$0xf]
  %v3833 = vld [vmem:[%s2724 + $0x18] sm:$0xf]
  %v3834 = vld [vmem:[%s2724 + $0x1c] sm:$0xf]
  %v3835 = vld [vmem:[%s2724 + $0x20] sm:$0xf]
  %v3836 = vld [vmem:[%s2724 + $0x24] sm:$0xf]
  %v3837 = vld [vmem:[%s2724 + $0x28] sm:$0xf]
  %v3838 = vld [vmem:[%s2724 + $0x2c] sm:$0xf]
  %v3839 = vld [vmem:[%s2724 + $0x30] sm:$0xf]
  %v3840 = vld [vmem:[%s2724 + $0x34] sm:$0xf]
  %v3841 = vld [vmem:[%s2724 + $0x38] sm:$0xf]
  %v3842 = vld [vmem:[%s2724 + $0x3c] sm:$0xf]
  %v3843 = vlaneseq
  %v3844 = vshrl.u32 %v3843, 7
  %v3845 = vsub.s32 0, %v3844
  %v3846 = vrot.slane %v3819, %v3845
  %v3863 = vunpack.c.l.b16 %v3827
  %v3864 = vunpack.c.l.b16 %v3828
  %v3865 = vunpack.c.l.b16 %v3829
  %v3866 = vunpack.c.l.b16 %v3830
  %v3867 = vunpack.c.l.b16 %v3831
  %v3868 = vunpack.c.l.b16 %v3832
  %v3869 = vunpack.c.l.b16 %v3833
  %v3870 = vunpack.c.l.b16 %v3834
  %v3871 = vunpack.c.l.b16 %v3835
  %v3872 = vunpack.c.l.b16 %v3836
  %v3873 = vunpack.c.l.b16 %v3837
  %v3874 = vunpack.c.l.b16 %v3838
  %v3875 = vunpack.c.l.b16 %v3839
  %v3876 = vunpack.c.l.b16 %v3840
  %v3877 = vunpack.c.l.b16 %v3841
  %v3878 = vunpack.c.l.b16 %v3842
  %v3879 = vpack.c.b16 %v3864, %v3863
  %v3880 = vpack.c.b16 %v3866, %v3865
  %v3881 = vpack.c.b16 %v3868, %v3867
  %v3882 = vpack.c.b16 %v3870, %v3869
  %v3883 = vpack.c.b16 %v3872, %v3871
  %v3884 = vpack.c.b16 %v3874, %v3873
  %v3885 = vpack.c.b16 %v3876, %v3875
  %v3886 = vpack.c.b16 %v3878, %v3877
  %3895 = vmatprep.subr.bf16.mxu0 0
  %3896 = vmatpush1.bf16.msra.mxu0 %v3886
  %3897 = vmatprep.subr.bf16.mxu0 0
  %3898 = vmatpush1.bf16.msra.mxu0 %v3885
  %3899 = vmatprep.subr.bf16.mxu0 0
  %3900 = vmatpush1.bf16.msra.mxu0 %v3884
  %3901 = vmatprep.subr.bf16.mxu0 0
  %3902 = vmatpush1.bf16.msra.mxu0 %v3883
  %3903 = vmatprep.subr.bf16.mxu0 0
  %3904 = vmatpush1.bf16.msra.mxu0 %v3882
  %3905 = vmatprep.subr.bf16.mxu0 0
  %3906 = vmatpush1.bf16.msra.mxu0 %v3881
  %3907 = vmatprep.subr.bf16.mxu0 0
  %3908 = vmatpush1.bf16.msra.mxu0 %v3880
  %3909 = vmatprep.subr.bf16.mxu0 0
  %3910 = vmatpush1.bf16.msra.mxu0 %v3879
  %3911 = vmatprep.subr.bf16.mxu0 0
  %3912 = vmatpush2.bf16.msra.mxu0 0
  %3913 = vmatprep.subr.bf16.mxu0 0
  %3914 = vmatpush2.bf16.msra.mxu0 0
  %3915 = vmatprep.subr.bf16.mxu0 0
  %3916 = vmatpush2.bf16.msra.mxu0 0
  %3917 = vmatprep.subr.bf16.mxu0 0
  %3918 = vmatpush2.bf16.msra.mxu0 0
  %3919 = vmatprep.subr.bf16.mxu0 0
  %3920 = vmatpush2.bf16.msra.mxu0 0
  %3921 = vmatprep.subr.bf16.mxu0 0
  %3922 = vmatpush2.bf16.msra.mxu0 0
  %3923 = vmatprep.subr.bf16.mxu0 0
  %3924 = vmatpush2.bf16.msra.mxu0 0
  %3925 = vmatprep.subr.bf16.mxu0 0
  %3926 = vmatpush2.bf16.msra.mxu0 0
  %3927 = vmatprep.mubr.bf16.mxu0 0
  %3928 = vmatmul.mubr.bf16.gmra.mxu0 %v3824
  %v3929 = vpop.f32.mrf.mxu0
  %v3930 = vadd.f32 %v3846, %v3929
  %v3931 = vpop.f32.mrf.mxu0
  %v3932 = vpop.f32.mrf.mxu0
  %v3933 = vadd.f32 %v3846, %v3932
  %v3934 = vpop.f32.mrf.mxu0
  %3935 = vmatprep.mubr.bf16.mxu0 0
  %3936 = vmatmul.mubr.bf16.gmra.mxu0 %v3825
  %v3937 = vpop.f32.mrf.mxu0
  %v3938 = vadd.f32 %v3846, %v3937
  %v3939 = vpop.f32.mrf.mxu0
  %v3940 = vpop.f32.mrf.mxu0
  %v3941 = vadd.f32 %v3846, %v3940
  %v3942 = vpop.f32.mrf.mxu0
  %3943 = vmatprep.mubr.bf16.mxu0 0
  %3944 = vmatmul.mubr.bf16.gmra.mxu0 %v3826
  %v3945 = vpop.f32.mrf.mxu0
  %v3946 = vadd.f32 %v3846, %v3945
  %v3947 = vpop.f32.mrf.mxu0
  %v3948 = vpop.f32.mrf.mxu0
  %v3949 = vpop.f32.mrf.mxu0
  %3950 = vdwg.mxu0
  %v3951 = vld [vmem:[%s2849] sm:$0x1]
  %v3953 = vlaneseq
  %v3954 = vshrl.u32 %v3953, 7
  %v3955 = vsub.s32 0, %v3954
  %v3956 = vrot.slane %v3951, %v3955
  %v3958 = vadd.f32 %v3930, %v3956
  %v3959 = vadd.f32 %v3933, %v3956
  %v3960 = vadd.f32 %v3938, %v3956
  %v3961 = vadd.f32 %v3941, %v3956
  %v3962 = vadd.f32 %v3946, %v3956
  %v3963 = vmax.f32 %v3958, 0.0
  %v3964 = vmax.f32 %v3959, 0.0
  %v3965 = vmax.f32 %v3960, 0.0
  %v3966 = vmax.f32 %v3961, 0.0
  %v3967 = vmax.f32 %v3962, 0.0
  %v3968 = vpack.c.bf16 %v3964, %v3963
  %v3969 = vpack.c.bf16 %v3966, %v3965
  %v3970 = vpack.c.bf16 %v3967, %v3967
  %v3971 = vld [vmem:[%s2870] sm:$0xf]
  %v3972 = vld [vmem:[%s2870 + $0x4] sm:$0xf]
  %v3973 = vld [vmem:[%s2870 + $0x8] sm:$0xf]
  %v3974 = vld [vmem:[%s2870 + $0xc] sm:$0xf]
  %v3975 = vld [vmem:[%s2870 + $0x10] sm:$0xf]
  %v3976 = vld [vmem:[%s2870 + $0x14] sm:$0xf]
  %v3977 = vld [vmem:[%s2870 + $0x18] sm:$0xf]
  %v3978 = vld [vmem:[%s2870 + $0x1c] sm:$0xf]
  %v3979 = vld [vmem:[%s2879] sm:$0x1]
  %v3981 = vlaneseq
  %v3982 = vshrl.u32 %v3981, 7
  %v3983 = vsub.s32 0, %v3982
  %v3984 = vrot.slane %v3979, %v3983
  %v3994 = vunpack.c.l.b16 %v3971
  %v3995 = vunpack.c.l.b16 %v3972
  %v3996 = vunpack.c.l.b16 %v3973
  %v3997 = vunpack.c.l.b16 %v3974
  %v3998 = vunpack.c.l.b16 %v3975
  %v3999 = vunpack.c.l.b16 %v3976
  %v4000 = vunpack.c.l.b16 %v3977
  %v4001 = vunpack.c.l.b16 %v3978
  %v4002 = vpack.c.b16 %v3995, %v3994
  %v4003 = vpack.c.b16 %v3997, %v3996
  %v4004 = vpack.c.b16 %v3999, %v3998
  %v4005 = vpack.c.b16 %v4001, %v4000
  %v4011 = vsel %vm1059, %v3968, 0
  %v4014 = vsel %vm1059, %v3969, 0
  %v4017 = vsel %vm1059, %v3970, 0
  %4019 = vmatprep.subr.bf16.mxu0 0
  %4020 = vmatpush1.bf16.msra.mxu0 0
  %4021 = vmatprep.subr.bf16.mxu0 0
  %4022 = vmatpush1.bf16.msra.mxu0 0
  %4023 = vmatprep.subr.bf16.mxu0 0
  %4024 = vmatpush1.bf16.msra.mxu0 0
  %4025 = vmatprep.subr.bf16.mxu0 0
  %4026 = vmatpush1.bf16.msra.mxu0 0
  %4027 = vmatprep.subr.bf16.mxu0 0
  %4028 = vmatpush1.bf16.msra.mxu0 %v4005
  %4029 = vmatprep.subr.bf16.mxu0 0
  %4030 = vmatpush1.bf16.msra.mxu0 %v4004
  %4031 = vmatprep.subr.bf16.mxu0 0
  %4032 = vmatpush1.bf16.msra.mxu0 %v4003
  %4033 = vmatprep.subr.bf16.mxu0 0
  %4034 = vmatpush1.bf16.msra.mxu0 %v4002
  %4035 = vmatprep.subr.bf16.mxu0 0
  %4036 = vmatpush2.bf16.msra.mxu0 0
  %4037 = vmatprep.subr.bf16.mxu0 0
  %4038 = vmatpush2.bf16.msra.mxu0 0
  %4039 = vmatprep.subr.bf16.mxu0 0
  %4040 = vmatpush2.bf16.msra.mxu0 0
  %4041 = vmatprep.subr.bf16.mxu0 0
  %4042 = vmatpush2.bf16.msra.mxu0 0
  %4043 = vmatprep.subr.bf16.mxu0 0
  %4044 = vmatpush2.bf16.msra.mxu0 0
  %4045 = vmatprep.subr.bf16.mxu0 0
  %4046 = vmatpush2.bf16.msra.mxu0 0
  %4047 = vmatprep.subr.bf16.mxu0 0
  %4048 = vmatpush2.bf16.msra.mxu0 0
  %4049 = vmatprep.subr.bf16.mxu0 0
  %4050 = vmatpush2.bf16.msra.mxu0 0
  %4051 = vmatprep.mubr.bf16.mxu0 0
  %4052 = vmatmul.mubr.bf16.gmra.mxu0 %v4011
  %v4053 = vpop.f32.mrf.mxu0
  %v4054 = vadd.f32 %v3984, %v4053
  %v4055 = vpop.f32.mrf.mxu0
  %v4056 = vpop.f32.mrf.mxu0
  %v4057 = vadd.f32 %v3984, %v4056
  %v4058 = vpop.f32.mrf.mxu0
  %4059 = vmatprep.mubr.bf16.mxu0 0
  %4060 = vmatmul.mubr.bf16.gmra.mxu0 %v4014
  %v4061 = vpop.f32.mrf.mxu0
  %v4062 = vadd.f32 %v3984, %v4061
  %v4063 = vpop.f32.mrf.mxu0
  %v4064 = vpop.f32.mrf.mxu0
  %v4065 = vadd.f32 %v3984, %v4064
  %v4066 = vpop.f32.mrf.mxu0
  %4067 = vmatprep.mubr.bf16.mxu0 0
  %4068 = vmatmul.mubr.bf16.gmra.mxu0 %v4017
  %v4069 = vpop.f32.mrf.mxu0
  %v4070 = vadd.f32 %v3984, %v4069
  %v4071 = vpop.f32.mrf.mxu0
  %v4072 = vpop.f32.mrf.mxu0
  %v4073 = vpop.f32.mrf.mxu0
  %4074 = vdwg.mxu0
  %v4075 = vtanh.pop %v4054
  %v4076 = vtanh.pop %v4057
  %v4077 = vtanh.pop %v4062
  %v4078 = vtanh.pop %v4065
  %v4079 = vtanh.pop %v4070
  %v4080 = vadd.f32 %v3742, %v4075
  %v4081 = vadd.f32 %v3743, %v4076
  %v4082 = vadd.f32 %v3744, %v4077
  %v4083 = vadd.f32 %v3745, %v4078
  %v4084 = vadd.f32 %v3746, %v4079
  %4085 = vst [vmem:[%s2986 + $0x28] sm:$0xff] %v4080
  %4086 = vst [vmem:[%s2986 + $0x30] sm:$0xff] %v4081
  %4087 = vst [vmem:[%s2986 + $0x38] sm:$0xff] %v4082
  %4088 = vst [vmem:[%s2986 + $0x40] sm:$0xff] %v4083
  %4089 = vst [vmem:[%s2986 + $0x48] sm:$0xff] %v4084
  // Predicated region
  $region70: #{mesh_rcnn_forward.1} parent=0 // pred_check
    _
  $region71: #{mesh_rcnn_forward.1} parent=0 // pred_check_branch
    %4091 = sbr.rel (0) target = $region73
  $region72: #{mesh_rcnn_forward.1} parent=0 // pred_region
    _
  $region73: #{mesh_rcnn_forward.1} parent=0 // pred_fallthru
    _
  // Predicated region
  $region74: #{mesh_rcnn_forward.1} parent=0 // pred_check
    _
  $region75: #{mesh_rcnn_forward.1} parent=0 // pred_check_branch
    %4093 = sbr.rel (0) target = $region77
  $region76: #{mesh_rcnn_forward.1} parent=0 // pred_region
    _
  $region77: #{mesh_rcnn_forward.1} parent=0 // pred_fallthru
    _
  // Predicated region
  $region78: #{mesh_rcnn_forward.1} parent=0 // pred_check
    _
  $region79: #{mesh_rcnn_forward.1} parent=0 // pred_check_branch
    %4095 = sbr.rel (0) target = $region81
  $region80: #{mesh_rcnn_forward.1} parent=0 // pred_region
    _
  $region81: #{mesh_rcnn_forward.1} parent=0 // pred_fallthru
    _
  // Predicated region
  $region82: #{mesh_rcnn_forward.1} parent=0 // pred_check
    _
  $region83: #{mesh_rcnn_forward.1} parent=0 // pred_check_branch
    %4097 = sbr.rel (0) target = $region85
  $region84: #{mesh_rcnn_forward.1} parent=0 // pred_region
    _
  $region85: #{mesh_rcnn_forward.1} parent=0 // pred_fallthru
    _

</llo_original>
